<compile_context>
chip_gen: v7x
topology: tpu7x:2x2x1
jax: 0.10.0
libtpu: 0.0.40
codegen_flags: <defaults>
</compile_context>

<pallas_src>
import functools
import math

import jax
import jax.numpy as jnp
from jax.experimental import pallas as pl
from jax.experimental.pallas import tpu as pltpu


# ---------------------------------------------------------------------------
# In-kernel helpers
# ---------------------------------------------------------------------------
def _fill_padded(pad_ref, x_hwc, pad):
    """Write x into the interior of a padded VMEM scratch; zero only the halo."""
    Hp, Wp, C = pad_ref.shape
    H, W = Hp - 2 * pad, Wp - 2 * pad
    if pad > 0:
        zrow = jnp.zeros((pad, Wp, C), pad_ref.dtype)
        pad_ref[0:pad, :, :] = zrow
        pad_ref[Hp - pad:Hp, :, :] = zrow
        zcol = jnp.zeros((H, pad, C), pad_ref.dtype)
        pad_ref[pad:pad + H, 0:pad, :] = zcol
        pad_ref[pad:pad + H, Wp - pad:Wp, :] = zcol
    pad_ref[pad:pad + H, pad:pad + W, :] = x_hwc


def _conv_taps(pad_ref, w_ref, *, K, pad_max, H, W):
    """Per-tap MXU accumulation of a KxK 'same' conv.

    pad_ref: (H+2*pad_max, W+2*pad_max, Cin) bf16 padded input scratch.
    w_ref:   (K*K, Cin, Cout) bf16.
    Returns (H*W, Cout) f32.
    """
    off = pad_max - (K - 1) // 2
    cin = pad_ref.shape[-1]
    cout = w_ref.shape[-1]
    acc = jnp.zeros((H * W, cout), jnp.float32)
    for dy in range(K):
        for dx in range(K):
            win = pad_ref[off + dy:off + dy + H, off + dx:off + dx + W, :]
            acc = acc + jnp.dot(win.reshape(H * W, cin), w_ref[dy * K + dx],
                                preferred_element_type=jnp.float32)
    return acc


def _epilogue(acc, b_ref, g_ref, t_ref, use_in, use_relu, eps):
    """InstanceNorm(affine) [or bias] + ReLU on an (H*W, C) f32 activation."""
    if use_in:
        # Conv bias is exactly cancelled by the mean subtraction -> skip it.
        n = acc.shape[0]
        mean = jnp.sum(acc, axis=0, keepdims=True) * (1.0 / n)
        d = acc - mean
        var = jnp.sum(d * d, axis=0, keepdims=True) * (1.0 / n)   # centered
        acc = d * jax.lax.rsqrt(var + eps)
        acc = acc * g_ref[...] + t_ref[...]
    else:
        acc = acc + b_ref[...]
    if use_relu:
        acc = jnp.maximum(acc, 0.0)
    return acc


# ---------------------------------------------------------------------------
# Kernels (one sample per grid step)
# ---------------------------------------------------------------------------
def _stage_a_kernel(*refs, H, W, use_in, use_relu, eps):
    """Non-first-layer stage A: four 1x1 convs over the same input.

    inputs : x(1,H,W,Cin), w1..w4, b1..b4, g1..g4, beta1..beta4
    outputs: y1(1,HW,Cout) f32, h2,h3,h4 (1,HW,inner) bf16
    """
    x_ref = refs[0]
    w_refs, b_refs = refs[1:5], refs[5:9]
    g_refs, t_refs = refs[9:13], refs[13:17]
    o_refs = refs[17:21]
    cin = x_ref.shape[-1]
    x = x_ref[0].astype(jnp.bfloat16).reshape(H * W, cin)
    for w_ref, b_ref, g_ref, t_ref, o_ref in zip(w_refs, b_refs, g_refs,
                                                 t_refs, o_refs):
        acc = jnp.dot(x, w_ref[...], preferred_element_type=jnp.float32)
        acc = _epilogue(acc, b_ref, g_ref, t_ref, use_in, use_relu, eps)
        o_ref[0] = acc.astype(o_ref.dtype)


def _stage_b_kernel(*refs, H, W, use_in, use_relu, eps):
    """Non-first-layer stage B: per-branch 3x3 / 5x5 / 7x7 convs.

    inputs : h2,h3,h4 (1,H,W,inner) bf16, w2,w3,w4 (K*K,inner,Cout),
             b2..b4, g2..g4, beta2..beta4
    outputs: y2,y3,y4 (1,HW,Cout) f32
    scratch: padded input per branch
    """
    h_refs, w_refs = refs[0:3], refs[3:6]
    b_refs, g_refs, t_refs = refs[6:9], refs[9:12], refs[12:15]
    y_refs, pad_refs = refs[15:18], refs[18:21]
    for K, h_ref, w_ref, b_ref, g_ref, t_ref, y_ref, pad_ref in zip(
            (3, 5, 7), h_refs, w_refs, b_refs, g_refs, t_refs, y_refs, pad_refs):
        pad = (K - 1) // 2
        _fill_padded(pad_ref, h_ref[0], pad)
        acc = _conv_taps(pad_ref, w_ref, K=K, pad_max=pad, H=H, W=W)
        acc = _epilogue(acc, b_ref, g_ref, t_ref, use_in, use_relu, eps)
        y_ref[0] = acc.astype(y_ref.dtype)


def _first_layer_kernel(*refs, H, W, use_in, use_relu, eps):
    """First layer: 1x1 / 3x3 / 5x5 / 7x7 convs over the same input.

    inputs : x(1,H,W,Cin), w1(Cin,Cout), w3,w5,w7 (K*K,Cin,Cout),
             b1..b4, g1..g4, beta1..beta4
    outputs: y1..y4 (1,HW,Cout) f32
    scratch: one shared padded input (pad=3)
    """
    x_ref = refs[0]
    w_refs, b_refs = refs[1:5], refs[5:9]
    g_refs, t_refs = refs[9:13], refs[13:17]
    y_refs = refs[17:21]
    xpad_ref = refs[21]
    pad_max = 3
    cin = x_ref.shape[-1]
    x = x_ref[0].astype(jnp.bfloat16)                     # (H, W, Cin)
    _fill_padded(xpad_ref, x, pad_max)

    # Branch 1: plain 1x1 matmul on the unpadded input (no wasted MXU taps).
    acc = jnp.dot(x.reshape(H * W, cin), w_refs[0][...],
                  preferred_element_type=jnp.float32)
    acc = _epilogue(acc, b_refs[0], g_refs[0], t_refs[0], use_in, use_relu, eps)
    y_refs[0][0] = acc.astype(y_refs[0].dtype)

    for K, w_ref, b_ref, g_ref, t_ref, y_ref in zip(
            (3, 5, 7), w_refs[1:], b_refs[1:], g_refs[1:], t_refs[1:], y_refs[1:]):
        acc = _conv_taps(xpad_ref, w_ref, K=K, pad_max=pad_max, H=H, W=W)
        acc = _epilogue(acc, b_ref, g_ref, t_ref, use_in, use_relu, eps)
        y_ref[0] = acc.astype(y_ref.dtype)


# ---------------------------------------------------------------------------
# pallas_call wrappers
# ---------------------------------------------------------------------------
def _batch_spec(shape):
    nd = len(shape)

    def imap(n):
        return (n,) + (0,) * (nd - 1)

    return pl.BlockSpec(shape, imap)


def _bcast_spec(shape):
    nd = len(shape)

    def imap(n):
        return (0,) * nd

    return pl.BlockSpec(shape, imap)


def _block_bytes(shape, dtype):
    return math.prod(shape) * jnp.dtype(dtype).itemsize


def _compiler_params(block_list, scratch_bytes=0):
    total = scratch_bytes + sum(_block_bytes(s, d) for s, d in block_list)
    # 2x double-buffering + 2x headroom for in-kernel temporaries, clamped so
    # it fits every generation (v7x: 64 MiB physical VMEM).
    limit = int(min(max(4 * total, 16 * 1024 * 1024), 60 * 1024 * 1024))
    return pltpu.CompilerParams(dimension_semantics=("parallel",),
                                vmem_limit_bytes=limit)


def _stage_a_call(x, p, *, use_in, use_relu=True, eps=1e-5):
    N, H, W, cin = x.shape
    cout, inner = p["cout"], p["inner"]
    kernel = functools.partial(_stage_a_kernel, H=H, W=W, use_in=use_in,
                               use_relu=use_relu, eps=eps)
    small = p["ws"] + p["bs"] + p["gs"] + p["ts"]
    in_arrays = [x] + small
    in_specs = [_batch_spec((1, H, W, cin))] + [_bcast_spec(a.shape) for a in small]
    out_shape = (jax.ShapeDtypeStruct((N, H * W, cout), jnp.float32),) + tuple(
        jax.ShapeDtypeStruct((N, H * W, inner), jnp.bfloat16) for _ in range(3))
    out_specs = (_batch_spec((1, H * W, cout)),) + tuple(
        _batch_spec((1, H * W, inner)) for _ in range(3))
    cp = _compiler_params(
        [((1, H, W, cin), x.dtype), ((1, H * W, cout), jnp.float32)]
        + [((1, H * W, inner), jnp.bfloat16)] * 3
        + [(a.shape, a.dtype) for a in small])
    grid_spec = pltpu.PrefetchScalarGridSpec(
        num_scalar_prefetch=0, grid=(N,), in_specs=in_specs, out_specs=out_specs)
    return pl.pallas_call(kernel, out_shape=out_shape, grid_spec=grid_spec,
                          compiler_params=cp)(*in_arrays)


def _stage_b_call(h2, h3, h4, p, *, use_in, use_relu=True, eps=1e-5):
    N, H, W, inner = h2.shape
    cout = p["cout"]
    kernel = functools.partial(_stage_b_kernel, H=H, W=W, use_in=use_in,
                               use_relu=use_relu, eps=eps)
    small = p["ws"] + p["bs"] + p["gs"] + p["ts"]
    in_arrays = [h2, h3, h4] + small
    in_specs = [_batch_spec((1, H, W, inner)) for _ in range(3)] + \
               [_bcast_spec(a.shape) for a in small]
    out_shape = tuple(jax.ShapeDtypeStruct((N, H * W, cout), jnp.float32)
                      for _ in range(3))
    out_specs = tuple(_batch_spec((1, H * W, cout)) for _ in range(3))
    scratch = [pltpu.VMEM((H + 2 * pd, W + 2 * pd, inner), jnp.bfloat16)
               for pd in (1, 2, 3)]
    scratch_bytes = sum((H + 2 * pd) * (W + 2 * pd) * inner * 2 for pd in (1, 2, 3))
    cp = _compiler_params(
        [((1, H, W, inner), jnp.bfloat16)] * 3
        + [((1, H * W, cout), jnp.float32)] * 3
        + [(a.shape, a.dtype) for a in small],
        scratch_bytes=scratch_bytes)
    grid_spec = pltpu.PrefetchScalarGridSpec(
        num_scalar_prefetch=0, grid=(N,), in_specs=in_specs,
        out_specs=out_specs, scratch_shapes=scratch)
    return pl.pallas_call(kernel, out_shape=out_shape, grid_spec=grid_spec,
                          compiler_params=cp)(*in_arrays)


def _first_layer_call(x, p, *, use_in, use_relu=True, eps=1e-5):
    N, H, W, cin = x.shape
    cout = p["cout"]
    kernel = functools.partial(_first_layer_kernel, H=H, W=W, use_in=use_in,
                               use_relu=use_relu, eps=eps)
    small = p["ws"] + p["bs"] + p["gs"] + p["ts"]
    in_arrays = [x] + small
    in_specs = [_batch_spec((1, H, W, cin))] + [_bcast_spec(a.shape) for a in small]
    out_shape = tuple(jax.ShapeDtypeStruct((N, H * W, cout), jnp.float32)
                      for _ in range(4))
    out_specs = tuple(_batch_spec((1, H * W, cout)) for _ in range(4))
    scratch = [pltpu.VMEM((H + 6, W + 6, cin), jnp.bfloat16)]
    scratch_bytes = (H + 6) * (W + 6) * cin * 2
    cp = _compiler_params(
        [((1, H, W, cin), x.dtype)]
        + [((1, H * W, cout), jnp.float32)] * 4
        + [(a.shape, a.dtype) for a in small],
        scratch_bytes=scratch_bytes)
    grid_spec = pltpu.PrefetchScalarGridSpec(
        num_scalar_prefetch=0, grid=(N,), in_specs=in_specs,
        out_specs=out_specs, scratch_shapes=scratch)
    return pl.pallas_call(kernel, out_shape=out_shape, grid_spec=grid_spec,
                          compiler_params=cp)(*in_arrays)


# ---------------------------------------------------------------------------
# Parameters
# ---------------------------------------------------------------------------
def _init_conv_params(key, K, cin, cout):
    kw, kb = jax.random.split(key)
    w = 0.1 * jax.random.normal(kw, (K, K, cin, cout), jnp.float32)   # HWIO
    b = 0.1 * jax.random.normal(kb, (cout,), jnp.float32)
    gamma = jnp.ones((cout,), jnp.float32)     # InstanceNorm2d(affine=True) init
    beta = jnp.zeros((cout,), jnp.float32)
    return dict(w=w, b=b, gamma=gamma, beta=beta, K=K)


def _pack_w(w):
    K = w.shape[0]
    if K == 1:
        return w.reshape(w.shape[2], w.shape[3]).astype(jnp.bfloat16)
    return w.reshape(K * K, w.shape[2], w.shape[3]).astype(jnp.bfloat16)


def _row(v):
    return v.reshape(1, -1)


def _pack_stage(layers, cout, inner=None):
    return dict(ws=[_pack_w(l["w"]) for l in layers],
                bs=[_row(l["b"]) for l in layers],
                gs=[_row(l["gamma"]) for l in layers],
                ts=[_row(l["beta"]) for l in layers],
                cout=cout, inner=inner)


def init_conv_block_params(key, in_channels, out_channels,
                           instance_norm=True, isFirstLayer=False):
    keys = jax.random.split(key, 7)
    if isFirstLayer:
        b1 = [_init_conv_params(keys[0], 1, in_channels, out_channels)]
        b2 = [_init_conv_params(keys[1], 3, in_channels, out_channels)]
        b3 = [_init_conv_params(keys[2], 5, in_channels, out_channels)]
        b4 = [_init_conv_params(keys[3], 7, in_channels, out_channels)]
        branches = [b1, b2, b3, b4]
        stage = _pack_stage([b1[0], b2[0], b3[0], b4[0]], out_channels)
        return dict(instance_norm=instance_norm, isFirstLayer=True,
                    branches=branches, stage=stage)
    inner = out_channels // 2
    b1 = [_init_conv_params(keys[0], 1, in_channels, out_channels)]
    b2 = [_init_conv_params(keys[1], 1, in_channels, inner),
          _init_conv_params(keys[2], 3, inner, out_channels)]
    b3 = [_init_conv_params(keys[3], 1, in_channels, inner),
          _init_conv_params(keys[4], 5, inner, out_channels)]
    b4 = [_init_conv_params(keys[5], 1, in_channels, inner),
          _init_conv_params(keys[6], 7, inner, out_channels)]
    branches = [b1, b2, b3, b4]
    stage_a = _pack_stage([b1[0], b2[0], b3[0], b4[0]], out_channels, inner)
    stage_b = _pack_stage([b2[1], b3[1], b4[1]], out_channels, inner)
    return dict(instance_norm=instance_norm, isFirstLayer=False,
                branches=branches, stage_a=stage_a, stage_b=stage_b)


# ---------------------------------------------------------------------------
# Forward pass (NCHW in / NCHW out, like the PyTorch module)
# ---------------------------------------------------------------------------
def conv_block_forward(params, x_nchw):
    use_in = params["instance_norm"]
    x = jnp.transpose(x_nchw, (0, 2, 3, 1)).astype(jnp.float32)   # boundary only
    N, H, W, _ = x.shape
    if params["isFirstLayer"]:
        ys = _first_layer_call(x, params["stage"], use_in=use_in)
    else:
        pa, pb = params["stage_a"], params["stage_b"]
        y1, h2, h3, h4 = _stage_a_call(x, pa, use_in=use_in)
        inner = pa["inner"]
        h2 = h2.reshape(N, H, W, inner)     # contiguous (free) reshapes
        h3 = h3.reshape(N, H, W, inner)
        h4 = h4.reshape(N, H, W, inner)
        y2, y3, y4 = _stage_b_call(h2, h3, h4, pb, use_in=use_in)
        ys = (y1, y2, y3, y4)
    # Channel concat fuses with the NHWC->NCHW boundary transpose in XLA.
    out = jnp.concatenate([y.reshape(N, H, W, -1) for y in ys], axis=-1)
    return jnp.transpose(out, (0, 3, 1, 2))


# ---------------------------------------------------------------------------
# Pure-JAX reference (per-branch, unfused) for correctness checking
# ---------------------------------------------------------------------------
def _ref_conv(x, w, b, gamma, beta, K, use_in, use_relu, eps=1e-5):
    pad = (K - 1) // 2
    out = jax.lax.conv_general_dilated(
        x.astype(jnp.bfloat16), w.astype(jnp.bfloat16),
        window_strides=(1, 1), padding=[(pad, pad), (pad, pad)],
        dimension_numbers=("NHWC", "HWIO", "NHWC"),
        preferred_element_type=jnp.float32)
    if use_in:
        mean = jnp.mean(out, axis=(1, 2), keepdims=True)
        var = jnp.var(out, axis=(1, 2), keepdims=True)
        out = (out - mean) * jax.lax.rsqrt(var + eps)
        out = out * gamma + beta
    else:
        out = out + b
    if use_relu:
        out = jnp.maximum(out, 0.0)
    return out


def conv_block_reference(params, x_nchw):
    use_in = params["instance_norm"]
    x = jnp.transpose(x_nchw, (0, 2, 3, 1)).astype(jnp.float32)
    outs = []
    for layers in params["branches"]:
        h = x
        for l in layers:
            h = _ref_conv(h, l["w"], l["b"], l["gamma"], l["beta"],
                          l["K"], use_in, True)
        outs.append(h)
    out = jnp.concatenate(outs, axis=-1)
    return jnp.transpose(out, (0, 3, 1, 2))


if __name__ == "__main__":
    key = jax.random.PRNGKey(0)
    kx, kp1, kp2 = jax.random.split(key, 3)

    N, Cin, H, W = 2, 4, 16, 16
    Cout = 8

    x = jax.random.normal(kx, (N, Cin, H, W), jnp.float32)   # NCHW (PyTorch)

    # Non-first layer: stage A (four 1x1 convs) + stage B (3/5/7 convs).
    params = init_conv_block_params(kp1, Cin, Cout,
                                    instance_norm=True, isFirstLayer=False)
    y = jax.block_until_ready(conv_block_forward(params, x))
    y_ref = conv_block_reference(params, x)
    assert y.shape == (N, 4 * Cout, H, W), y.shape
    assert bool(jnp.all(jnp.isfinite(y)))
    err = float(jnp.max(jnp.abs(y - y_ref)))
    assert err < 5e-2, f"non-first-layer mismatch, max err {err}"

    # First layer: single stage with 1/3/5/7 branches over the same input.
    params_f = init_conv_block_params(kp2, Cin, Cout,
                                      instance_norm=True, isFirstLayer=True)
    yf = jax.block_until_ready(conv_block_forward(params_f, x))
    yf_ref = conv_block_reference(params_f, x)
    assert yf.shape == (N, 4 * Cout, H, W), yf.shape
    assert bool(jnp.all(jnp.isfinite(yf)))
    errf = float(jnp.max(jnp.abs(yf - yf_ref)))
    assert errf < 5e-2, f"first-layer mismatch, max err {errf}"

    print("KERNEL_OK")
</pallas_src>

<mosaic_0001>
module attributes {stable_mosaic.version = 11 : i64} {
  func.func @_stage_a_kernel(%arg0: i32, %arg1: memref<1x16x16x4xf32, #tpu.memory_space<vmem>>, %arg2: memref<4x8xbf16, #tpu.memory_space<vmem>>, %arg3: memref<4x4xbf16, #tpu.memory_space<vmem>>, %arg4: memref<4x4xbf16, #tpu.memory_space<vmem>>, %arg5: memref<4x4xbf16, #tpu.memory_space<vmem>>, %arg6: memref<1x8xf32, #tpu.memory_space<vmem>>, %arg7: memref<1x4xf32, #tpu.memory_space<vmem>>, %arg8: memref<1x4xf32, #tpu.memory_space<vmem>>, %arg9: memref<1x4xf32, #tpu.memory_space<vmem>>, %arg10: memref<1x8xf32, #tpu.memory_space<vmem>>, %arg11: memref<1x4xf32, #tpu.memory_space<vmem>>, %arg12: memref<1x4xf32, #tpu.memory_space<vmem>>, %arg13: memref<1x4xf32, #tpu.memory_space<vmem>>, %arg14: memref<1x8xf32, #tpu.memory_space<vmem>>, %arg15: memref<1x4xf32, #tpu.memory_space<vmem>>, %arg16: memref<1x4xf32, #tpu.memory_space<vmem>>, %arg17: memref<1x4xf32, #tpu.memory_space<vmem>>, %arg18: memref<1x256x8xf32, #tpu.memory_space<vmem>>, %arg19: memref<1x256x4xbf16, #tpu.memory_space<vmem>>, %arg20: memref<1x256x4xbf16, #tpu.memory_space<vmem>>, %arg21: memref<1x256x4xbf16, #tpu.memory_space<vmem>>) attributes {dimension_semantics = [#tpu.dimension_semantics<parallel>], iteration_bounds = array<i64: 2>, scalar_prefetch = 0 : i64, scratch_operands = 0 : i64, tpu.core_type = #tpu.core_type<tc>, window_params = [{transform_indices = @transform_0, window_bounds = array<i64: 1, 16, 16, 4>}, {pipeline_mode = #tpu.pipeline_mode<synchronous>, transform_indices = @transform_1, window_bounds = array<i64: 4, 8>}, {pipeline_mode = #tpu.pipeline_mode<synchronous>, transform_indices = @transform_2, window_bounds = array<i64: 4, 4>}, {pipeline_mode = #tpu.pipeline_mode<synchronous>, transform_indices = @transform_3, window_bounds = array<i64: 4, 4>}, {pipeline_mode = #tpu.pipeline_mode<synchronous>, transform_indices = @transform_4, window_bounds = array<i64: 4, 4>}, {pipeline_mode = #tpu.pipeline_mode<synchronous>, transform_indices = @transform_5, window_bounds = array<i64: 1, 8>}, {pipeline_mode = #tpu.pipeline_mode<synchronous>, transform_indices = @transform_6, window_bounds = array<i64: 1, 4>}, {pipeline_mode = #tpu.pipeline_mode<synchronous>, transform_indices = @transform_7, window_bounds = array<i64: 1, 4>}, {pipeline_mode = #tpu.pipeline_mode<synchronous>, transform_indices = @transform_8, window_bounds = array<i64: 1, 4>}, {pipeline_mode = #tpu.pipeline_mode<synchronous>, transform_indices = @transform_9, window_bounds = array<i64: 1, 8>}, {pipeline_mode = #tpu.pipeline_mode<synchronous>, transform_indices = @transform_10, window_bounds = array<i64: 1, 4>}, {pipeline_mode = #tpu.pipeline_mode<synchronous>, transform_indices = @transform_11, window_bounds = array<i64: 1, 4>}, {pipeline_mode = #tpu.pipeline_mode<synchronous>, transform_indices = @transform_12, window_bounds = array<i64: 1, 4>}, {pipeline_mode = #tpu.pipeline_mode<synchronous>, transform_indices = @transform_13, window_bounds = array<i64: 1, 8>}, {pipeline_mode = #tpu.pipeline_mode<synchronous>, transform_indices = @transform_14, window_bounds = array<i64: 1, 4>}, {pipeline_mode = #tpu.pipeline_mode<synchronous>, transform_indices = @transform_15, window_bounds = array<i64: 1, 4>}, {pipeline_mode = #tpu.pipeline_mode<synchronous>, transform_indices = @transform_16, window_bounds = array<i64: 1, 4>}, {transform_indices = @transform_17, window_bounds = array<i64: 1, 256, 8>}, {transform_indices = @transform_18, window_bounds = array<i64: 1, 256, 4>}, {transform_indices = @transform_19, window_bounds = array<i64: 1, 256, 4>}, {transform_indices = @transform_20, window_bounds = array<i64: 1, 256, 4>}]} {
    %c0 = arith.constant 0 : index
    %c0_0 = arith.constant 0 : index
    %c0_1 = arith.constant 0 : index
    %c0_2 = arith.constant 0 : index
    %0 = vector.load %arg1[%c0, %c0_0, %c0_1, %c0_2] : memref<1x16x16x4xf32, #tpu.memory_space<vmem>>, vector<1x16x16x4xf32>
    %1 = vector.shape_cast %0 : vector<1x16x16x4xf32> to vector<16x16x4xf32>
    %2 = arith.truncf %1 : vector<16x16x4xf32> to vector<16x16x4xbf16>
    %3 = vector.shape_cast %2 : vector<16x16x4xbf16> to vector<256x4xbf16>
    %c0_3 = arith.constant 0 : index
    %c0_4 = arith.constant 0 : index
    %4 = vector.load %arg2[%c0_3, %c0_4] : memref<4x8xbf16, #tpu.memory_space<vmem>>, vector<4x8xbf16>
    %cst = arith.constant dense<0.000000e+00> : vector<256x8xf32>
    %5 = tpu.matmul %3, %4, %cst {dimension_numbers = #tpu.dot_dimension_numbers<[1], [0], [0], [1], [0, 0, 1, 1], [], []>} : vector<256x4xbf16>, vector<4x8xbf16>, vector<256x8xf32> -> vector<256x8xf32>
    %cst_5 = arith.constant dense<0.000000e+00> : vector<8xf32>
    %6 = vector.multi_reduction <add>, %5, %cst_5 [0] : vector<256x8xf32> to vector<8xf32>
    %7 = vector.shape_cast %6 : vector<8xf32> to vector<1x8xf32>
    %cst_6 = arith.constant 3.906250e-03 : f32
    %8 = vector.broadcast %cst_6 : f32 to vector<1x8xf32>
    %9 = arith.mulf %7, %8 : vector<1x8xf32>
    %10 = vector.broadcast %9 : vector<1x8xf32> to vector<256x8xf32>
    %11 = arith.subf %5, %10 : vector<256x8xf32>
    %12 = arith.mulf %11, %11 : vector<256x8xf32>
    %cst_7 = arith.constant dense<0.000000e+00> : vector<8xf32>
    %13 = vector.multi_reduction <add>, %12, %cst_7 [0] : vector<256x8xf32> to vector<8xf32>
    %14 = vector.shape_cast %13 : vector<8xf32> to vector<1x8xf32>
    %cst_8 = arith.constant 3.906250e-03 : f32
    %15 = vector.broadcast %cst_8 : f32 to vector<1x8xf32>
    %16 = arith.mulf %14, %15 : vector<1x8xf32>
    %cst_9 = arith.constant 9.99999974E-6 : f32
    %17 = vector.broadcast %cst_9 : f32 to vector<1x8xf32>
    %18 = arith.addf %16, %17 : vector<1x8xf32>
    %19 = math.rsqrt %18 : vector<1x8xf32>
    %20 = vector.broadcast %19 : vector<1x8xf32> to vector<256x8xf32>
    %21 = arith.mulf %11, %20 : vector<256x8xf32>
    %c0_10 = arith.constant 0 : index
    %c0_11 = arith.constant 0 : index
    %22 = vector.load %arg10[%c0_10, %c0_11] : memref<1x8xf32, #tpu.memory_space<vmem>>, vector<1x8xf32>
    %23 = vector.broadcast %22 : vector<1x8xf32> to vector<256x8xf32>
    %24 = arith.mulf %21, %23 : vector<256x8xf32>
    %c0_12 = arith.constant 0 : index
    %c0_13 = arith.constant 0 : index
    %25 = vector.load %arg14[%c0_12, %c0_13] : memref<1x8xf32, #tpu.memory_space<vmem>>, vector<1x8xf32>
    %26 = vector.broadcast %25 : vector<1x8xf32> to vector<256x8xf32>
    %27 = arith.addf %24, %26 : vector<256x8xf32>
    %cst_14 = arith.constant 0.000000e+00 : f32
    %28 = vector.broadcast %cst_14 : f32 to vector<256x8xf32>
    %29 = arith.maximumf %27, %28 : vector<256x8xf32>
    %c0_15 = arith.constant 0 : index
    %c0_16 = arith.constant 0 : index
    %c0_17 = arith.constant 0 : index
    %30 = vector.load %arg18[%c0_15, %c0_16, %c0_17] : memref<1x256x8xf32, #tpu.memory_space<vmem>>, vector<1x256x8xf32>
    %31 = vector.shape_cast %30 : vector<1x256x8xf32> to vector<256x8xf32>
    %32 = vector.shape_cast %29 : vector<256x8xf32> to vector<1x256x8xf32>
    tpu.vector_store %arg18[%c0_15, %c0_16, %c0_17], %32 {strides = array<i32>} : memref<1x256x8xf32, #tpu.memory_space<vmem>>, vector<1x256x8xf32>,
    %c0_18 = arith.constant 0 : index
    %c0_19 = arith.constant 0 : index
    %33 = vector.load %arg3[%c0_18, %c0_19] : memref<4x4xbf16, #tpu.memory_space<vmem>>, vector<4x4xbf16>
    %cst_20 = arith.constant dense<0.000000e+00> : vector<256x4xf32>
    %34 = tpu.matmul %3, %33, %cst_20 {dimension_numbers = #tpu.dot_dimension_numbers<[1], [0], [0], [1], [0, 0, 1, 1], [], []>} : vector<256x4xbf16>, vector<4x4xbf16>, vector<256x4xf32> -> vector<256x4xf32>
    %cst_21 = arith.constant dense<0.000000e+00> : vector<4xf32>
    %35 = vector.multi_reduction <add>, %34, %cst_21 [0] : vector<256x4xf32> to vector<4xf32>
    %36 = vector.shape_cast %35 : vector<4xf32> to vector<1x4xf32>
    %cst_22 = arith.constant 3.906250e-03 : f32
    %37 = vector.broadcast %cst_22 : f32 to vector<1x4xf32>
    %38 = arith.mulf %36, %37 : vector<1x4xf32>
    %39 = vector.broadcast %38 : vector<1x4xf32> to vector<256x4xf32>
    %40 = arith.subf %34, %39 : vector<256x4xf32>
    %41 = arith.mulf %40, %40 : vector<256x4xf32>
    %cst_23 = arith.constant dense<0.000000e+00> : vector<4xf32>
    %42 = vector.multi_reduction <add>, %41, %cst_23 [0] : vector<256x4xf32> to vector<4xf32>
    %43 = vector.shape_cast %42 : vector<4xf32> to vector<1x4xf32>
    %cst_24 = arith.constant 3.906250e-03 : f32
    %44 = vector.broadcast %cst_24 : f32 to vector<1x4xf32>
    %45 = arith.mulf %43, %44 : vector<1x4xf32>
    %cst_25 = arith.constant 9.99999974E-6 : f32
    %46 = vector.broadcast %cst_25 : f32 to vector<1x4xf32>
    %47 = arith.addf %45, %46 : vector<1x4xf32>
    %48 = math.rsqrt %47 : vector<1x4xf32>
    %49 = vector.broadcast %48 : vector<1x4xf32> to vector<256x4xf32>
    %50 = arith.mulf %40, %49 : vector<256x4xf32>
    %c0_26 = arith.constant 0 : index
    %c0_27 = arith.constant 0 : index
    %51 = vector.load %arg11[%c0_26, %c0_27] : memref<1x4xf32, #tpu.memory_space<vmem>>, vector<1x4xf32>
    %52 = vector.broadcast %51 : vector<1x4xf32> to vector<256x4xf32>
    %53 = arith.mulf %50, %52 : vector<256x4xf32>
    %c0_28 = arith.constant 0 : index
    %c0_29 = arith.constant 0 : index
    %54 = vector.load %arg15[%c0_28, %c0_29] : memref<1x4xf32, #tpu.memory_space<vmem>>, vector<1x4xf32>
    %55 = vector.broadcast %54 : vector<1x4xf32> to vector<256x4xf32>
    %56 = arith.addf %53, %55 : vector<256x4xf32>
    %cst_30 = arith.constant 0.000000e+00 : f32
    %57 = vector.broadcast %cst_30 : f32 to vector<256x4xf32>
    %58 = arith.maximumf %56, %57 : vector<256x4xf32>
    %59 = arith.truncf %58 : vector<256x4xf32> to vector<256x4xbf16>
    %c0_31 = arith.constant 0 : index
    %c0_32 = arith.constant 0 : index
    %c0_33 = arith.constant 0 : index
    %60 = vector.load %arg19[%c0_31, %c0_32, %c0_33] : memref<1x256x4xbf16, #tpu.memory_space<vmem>>, vector<1x256x4xbf16>
    %61 = vector.shape_cast %60 : vector<1x256x4xbf16> to vector<256x4xbf16>
    %62 = vector.shape_cast %59 : vector<256x4xbf16> to vector<1x256x4xbf16>
    tpu.vector_store %arg19[%c0_31, %c0_32, %c0_33], %62 {strides = array<i32>} : memref<1x256x4xbf16, #tpu.memory_space<vmem>>, vector<1x256x4xbf16>,
    %c0_34 = arith.constant 0 : index
    %c0_35 = arith.constant 0 : index
    %63 = vector.load %arg4[%c0_34, %c0_35] : memref<4x4xbf16, #tpu.memory_space<vmem>>, vector<4x4xbf16>
    %cst_36 = arith.constant dense<0.000000e+00> : vector<256x4xf32>
    %64 = tpu.matmul %3, %63, %cst_36 {dimension_numbers = #tpu.dot_dimension_numbers<[1], [0], [0], [1], [0, 0, 1, 1], [], []>} : vector<256x4xbf16>, vector<4x4xbf16>, vector<256x4xf32> -> vector<256x4xf32>
    %cst_37 = arith.constant dense<0.000000e+00> : vector<4xf32>
    %65 = vector.multi_reduction <add>, %64, %cst_37 [0] : vector<256x4xf32> to vector<4xf32>
    %66 = vector.shape_cast %65 : vector<4xf32> to vector<1x4xf32>
    %cst_38 = arith.constant 3.906250e-03 : f32
    %67 = vector.broadcast %cst_38 : f32 to vector<1x4xf32>
    %68 = arith.mulf %66, %67 : vector<1x4xf32>
    %69 = vector.broadcast %68 : vector<1x4xf32> to vector<256x4xf32>
    %70 = arith.subf %64, %69 : vector<256x4xf32>
    %71 = arith.mulf %70, %70 : vector<256x4xf32>
    %cst_39 = arith.constant dense<0.000000e+00> : vector<4xf32>
    %72 = vector.multi_reduction <add>, %71, %cst_39 [0] : vector<256x4xf32> to vector<4xf32>
    %73 = vector.shape_cast %72 : vector<4xf32> to vector<1x4xf32>
    %cst_40 = arith.constant 3.906250e-03 : f32
    %74 = vector.broadcast %cst_40 : f32 to vector<1x4xf32>
    %75 = arith.mulf %73, %74 : vector<1x4xf32>
    %cst_41 = arith.constant 9.99999974E-6 : f32
    %76 = vector.broadcast %cst_41 : f32 to vector<1x4xf32>
    %77 = arith.addf %75, %76 : vector<1x4xf32>
    %78 = math.rsqrt %77 : vector<1x4xf32>
    %79 = vector.broadcast %78 : vector<1x4xf32> to vector<256x4xf32>
    %80 = arith.mulf %70, %79 : vector<256x4xf32>
    %c0_42 = arith.constant 0 : index
    %c0_43 = arith.constant 0 : index
    %81 = vector.load %arg12[%c0_42, %c0_43] : memref<1x4xf32, #tpu.memory_space<vmem>>, vector<1x4xf32>
    %82 = vector.broadcast %81 : vector<1x4xf32> to vector<256x4xf32>
    %83 = arith.mulf %80, %82 : vector<256x4xf32>
    %c0_44 = arith.constant 0 : index
    %c0_45 = arith.constant 0 : index
    %84 = vector.load %arg16[%c0_44, %c0_45] : memref<1x4xf32, #tpu.memory_space<vmem>>, vector<1x4xf32>
    %85 = vector.broadcast %84 : vector<1x4xf32> to vector<256x4xf32>
    %86 = arith.addf %83, %85 : vector<256x4xf32>
    %cst_46 = arith.constant 0.000000e+00 : f32
    %87 = vector.broadcast %cst_46 : f32 to vector<256x4xf32>
    %88 = arith.maximumf %86, %87 : vector<256x4xf32>
    %89 = arith.truncf %88 : vector<256x4xf32> to vector<256x4xbf16>
    %c0_47 = arith.constant 0 : index
    %c0_48 = arith.constant 0 : index
    %c0_49 = arith.constant 0 : index
    %90 = vector.load %arg20[%c0_47, %c0_48, %c0_49] : memref<1x256x4xbf16, #tpu.memory_space<vmem>>, vector<1x256x4xbf16>
    %91 = vector.shape_cast %90 : vector<1x256x4xbf16> to vector<256x4xbf16>
    %92 = vector.shape_cast %89 : vector<256x4xbf16> to vector<1x256x4xbf16>
    tpu.vector_store %arg20[%c0_47, %c0_48, %c0_49], %92 {strides = array<i32>} : memref<1x256x4xbf16, #tpu.memory_space<vmem>>, vector<1x256x4xbf16>,
    %c0_50 = arith.constant 0 : index
    %c0_51 = arith.constant 0 : index
    %93 = vector.load %arg5[%c0_50, %c0_51] : memref<4x4xbf16, #tpu.memory_space<vmem>>, vector<4x4xbf16>
    %cst_52 = arith.constant dense<0.000000e+00> : vector<256x4xf32>
    %94 = tpu.matmul %3, %93, %cst_52 {dimension_numbers = #tpu.dot_dimension_numbers<[1], [0], [0], [1], [0, 0, 1, 1], [], []>} : vector<256x4xbf16>, vector<4x4xbf16>, vector<256x4xf32> -> vector<256x4xf32>
    %cst_53 = arith.constant dense<0.000000e+00> : vector<4xf32>
    %95 = vector.multi_reduction <add>, %94, %cst_53 [0] : vector<256x4xf32> to vector<4xf32>
    %96 = vector.shape_cast %95 : vector<4xf32> to vector<1x4xf32>
    %cst_54 = arith.constant 3.906250e-03 : f32
    %97 = vector.broadcast %cst_54 : f32 to vector<1x4xf32>
    %98 = arith.mulf %96, %97 : vector<1x4xf32>
    %99 = vector.broadcast %98 : vector<1x4xf32> to vector<256x4xf32>
    %100 = arith.subf %94, %99 : vector<256x4xf32>
    %101 = arith.mulf %100, %100 : vector<256x4xf32>
    %cst_55 = arith.constant dense<0.000000e+00> : vector<4xf32>
    %102 = vector.multi_reduction <add>, %101, %cst_55 [0] : vector<256x4xf32> to vector<4xf32>
    %103 = vector.shape_cast %102 : vector<4xf32> to vector<1x4xf32>
    %cst_56 = arith.constant 3.906250e-03 : f32
    %104 = vector.broadcast %cst_56 : f32 to vector<1x4xf32>
    %105 = arith.mulf %103, %104 : vector<1x4xf32>
    %cst_57 = arith.constant 9.99999974E-6 : f32
    %106 = vector.broadcast %cst_57 : f32 to vector<1x4xf32>
    %107 = arith.addf %105, %106 : vector<1x4xf32>
    %108 = math.rsqrt %107 : vector<1x4xf32>
    %109 = vector.broadcast %108 : vector<1x4xf32> to vector<256x4xf32>
    %110 = arith.mulf %100, %109 : vector<256x4xf32>
    %c0_58 = arith.constant 0 : index
    %c0_59 = arith.constant 0 : index
    %111 = vector.load %arg13[%c0_58, %c0_59] : memref<1x4xf32, #tpu.memory_space<vmem>>, vector<1x4xf32>
    %112 = vector.broadcast %111 : vector<1x4xf32> to vector<256x4xf32>
    %113 = arith.mulf %110, %112 : vector<256x4xf32>
    %c0_60 = arith.constant 0 : index
    %c0_61 = arith.constant 0 : index
    %114 = vector.load %arg17[%c0_60, %c0_61] : memref<1x4xf32, #tpu.memory_space<vmem>>, vector<1x4xf32>
    %115 = vector.broadcast %114 : vector<1x4xf32> to vector<256x4xf32>
    %116 = arith.addf %113, %115 : vector<256x4xf32>
    %cst_62 = arith.constant 0.000000e+00 : f32
    %117 = vector.broadcast %cst_62 : f32 to vector<256x4xf32>
    %118 = arith.maximumf %116, %117 : vector<256x4xf32>
    %119 = arith.truncf %118 : vector<256x4xf32> to vector<256x4xbf16>
    %c0_63 = arith.constant 0 : index
    %c0_64 = arith.constant 0 : index
    %c0_65 = arith.constant 0 : index
    %120 = vector.load %arg21[%c0_63, %c0_64, %c0_65] : memref<1x256x4xbf16, #tpu.memory_space<vmem>>, vector<1x256x4xbf16>
    %121 = vector.shape_cast %120 : vector<1x256x4xbf16> to vector<256x4xbf16>
    %122 = vector.shape_cast %119 : vector<256x4xbf16> to vector<1x256x4xbf16>
    tpu.vector_store %arg21[%c0_63, %c0_64, %c0_65], %122 {strides = array<i32>} : memref<1x256x4xbf16, #tpu.memory_space<vmem>>, vector<1x256x4xbf16>,
    return
  }
  func.func @transform_0(%arg0: i32) -> (i32, i32, i32, i32) {
    %c0_i32 = arith.constant 0 : i32
    %c0_i32_0 = arith.constant 0 : i32
    %c0_i32_1 = arith.constant 0 : i32
    %c0_i32_2 = arith.constant 0 : i32
    return %arg0, %c0_i32, %c0_i32_0, %c0_i32_1 : i32, i32, i32, i32
  }
  func.func @transform_1(%arg0: i32) -> (i32, i32) {
    %c0_i32 = arith.constant 0 : i32
    %c0_i32_0 = arith.constant 0 : i32
    %c0_i32_1 = arith.constant 0 : i32
    return %c0_i32, %c0_i32_0 : i32, i32
  }
  func.func @transform_2(%arg0: i32) -> (i32, i32) {
    %c0_i32 = arith.constant 0 : i32
    %c0_i32_0 = arith.constant 0 : i32
    %c0_i32_1 = arith.constant 0 : i32
    return %c0_i32, %c0_i32_0 : i32, i32
  }
  func.func @transform_3(%arg0: i32) -> (i32, i32) {
    %c0_i32 = arith.constant 0 : i32
    %c0_i32_0 = arith.constant 0 : i32
    %c0_i32_1 = arith.constant 0 : i32
    return %c0_i32, %c0_i32_0 : i32, i32
  }
  func.func @transform_4(%arg0: i32) -> (i32, i32) {
    %c0_i32 = arith.constant 0 : i32
    %c0_i32_0 = arith.constant 0 : i32
    %c0_i32_1 = arith.constant 0 : i32
    return %c0_i32, %c0_i32_0 : i32, i32
  }
  func.func @transform_5(%arg0: i32) -> (i32, i32) {
    %c0_i32 = arith.constant 0 : i32
    %c0_i32_0 = arith.constant 0 : i32
    %c0_i32_1 = arith.constant 0 : i32
    return %c0_i32, %c0_i32_0 : i32, i32
  }
  func.func @transform_6(%arg0: i32) -> (i32, i32) {
    %c0_i32 = arith.constant 0 : i32
    %c0_i32_0 = arith.constant 0 : i32
    %c0_i32_1 = arith.constant 0 : i32
    return %c0_i32, %c0_i32_0 : i32, i32
  }
  func.func @transform_7(%arg0: i32) -> (i32, i32) {
    %c0_i32 = arith.constant 0 : i32
    %c0_i32_0 = arith.constant 0 : i32
    %c0_i32_1 = arith.constant 0 : i32
    return %c0_i32, %c0_i32_0 : i32, i32
  }
  func.func @transform_8(%arg0: i32) -> (i32, i32) {
    %c0_i32 = arith.constant 0 : i32
    %c0_i32_0 = arith.constant 0 : i32
    %c0_i32_1 = arith.constant 0 : i32
    return %c0_i32, %c0_i32_0 : i32, i32
  }
  func.func @transform_9(%arg0: i32) -> (i32, i32) {
    %c0_i32 = arith.constant 0 : i32
    %c0_i32_0 = arith.constant 0 : i32
    %c0_i32_1 = arith.constant 0 : i32
    return %c0_i32, %c0_i32_0 : i32, i32
  }
  func.func @transform_10(%arg0: i32) -> (i32, i32) {
    %c0_i32 = arith.constant 0 : i32
    %c0_i32_0 = arith.constant 0 : i32
    %c0_i32_1 = arith.constant 0 : i32
    return %c0_i32, %c0_i32_0 : i32, i32
  }
  func.func @transform_11(%arg0: i32) -> (i32, i32) {
    %c0_i32 = arith.constant 0 : i32
    %c0_i32_0 = arith.constant 0 : i32
    %c0_i32_1 = arith.constant 0 : i32
    return %c0_i32, %c0_i32_0 : i32, i32
  }
  func.func @transform_12(%arg0: i32) -> (i32, i32) {
    %c0_i32 = arith.constant 0 : i32
    %c0_i32_0 = arith.constant 0 : i32
    %c0_i32_1 = arith.constant 0 : i32
    return %c0_i32, %c0_i32_0 : i32, i32
  }
  func.func @transform_13(%arg0: i32) -> (i32, i32) {
    %c0_i32 = arith.constant 0 : i32
    %c0_i32_0 = arith.constant 0 : i32
    %c0_i32_1 = arith.constant 0 : i32
    return %c0_i32, %c0_i32_0 : i32, i32
  }
  func.func @transform_14(%arg0: i32) -> (i32, i32) {
    %c0_i32 = arith.constant 0 : i32
    %c0_i32_0 = arith.constant 0 : i32
    %c0_i32_1 = arith.constant 0 : i32
    return %c0_i32, %c0_i32_0 : i32, i32
  }
  func.func @transform_15(%arg0: i32) -> (i32, i32) {
    %c0_i32 = arith.constant 0 : i32
    %c0_i32_0 = arith.constant 0 : i32
    %c0_i32_1 = arith.constant 0 : i32
    return %c0_i32, %c0_i32_0 : i32, i32
  }
  func.func @transform_16(%arg0: i32) -> (i32, i32) {
    %c0_i32 = arith.constant 0 : i32
    %c0_i32_0 = arith.constant 0 : i32
    %c0_i32_1 = arith.constant 0 : i32
    return %c0_i32, %c0_i32_0 : i32, i32
  }
  func.func @transform_17(%arg0: i32) -> (i32, i32, i32) {
    %c0_i32 = arith.constant 0 : i32
    %c0_i32_0 = arith.constant 0 : i32
    %c0_i32_1 = arith.constant 0 : i32
    return %arg0, %c0_i32, %c0_i32_0 : i32, i32, i32
  }
  func.func @transform_18(%arg0: i32) -> (i32, i32, i32) {
    %c0_i32 = arith.constant 0 : i32
    %c0_i32_0 = arith.constant 0 : i32
    %c0_i32_1 = arith.constant 0 : i32
    return %arg0, %c0_i32, %c0_i32_0 : i32, i32, i32
  }
  func.func @transform_19(%arg0: i32) -> (i32, i32, i32) {
    %c0_i32 = arith.constant 0 : i32
    %c0_i32_0 = arith.constant 0 : i32
    %c0_i32_1 = arith.constant 0 : i32
    return %arg0, %c0_i32, %c0_i32_0 : i32, i32, i32
  }
  func.func @transform_20(%arg0: i32) -> (i32, i32, i32) {
    %c0_i32 = arith.constant 0 : i32
    %c0_i32_0 = arith.constant 0 : i32
    %c0_i32_1 = arith.constant 0 : i32
    return %arg0, %c0_i32, %c0_i32_0 : i32, i32, i32
  }
}

</mosaic_0001>

<llo_original>
// kernel: tpu_custom_call.1
$region0: #{tpu_custom_call.1}
  #allocation0 [shape = 'u32[]', space=smem, size = 0x4, offset = 0x4, fixed_abs, tag = 'smem constant byte address 0x4 - core index']
  #allocation1 [shape = 'u32[144,128]{1,0:T(1,128)}', space=vmem, size = 0x12000, scoped, tag = 'internal scratch']
  %s0 = inlined_call_operand.vmem [shape: f32[2,16,16,4], index: 0, kind: input, shape index: {}]
  %s1 = inlined_call_operand.vmem [shape: bf16[4,8], index: 1, kind: input, shape index: {}]
  %s2 = inlined_call_operand.vmem [shape: bf16[4,4], index: 2, kind: input, shape index: {}]
  %s3 = inlined_call_operand.vmem [shape: bf16[4,4], index: 3, kind: input, shape index: {}]
  %s4 = inlined_call_operand.vmem [shape: bf16[4,4], index: 4, kind: input, shape index: {}]
  %s5 = inlined_call_operand.vmem [shape: f32[1,8], index: 5, kind: input, shape index: {}]
  %s6 = inlined_call_operand.vmem [shape: f32[1,4], index: 6, kind: input, shape index: {}]
  %s7 = inlined_call_operand.vmem [shape: f32[1,4], index: 7, kind: input, shape index: {}]
  %s8 = inlined_call_operand.vmem [shape: f32[1,4], index: 8, kind: input, shape index: {}]
  %s9 = inlined_call_operand.vmem [shape: f32[1,8], index: 9, kind: input, shape index: {}]
  %s10 = inlined_call_operand.vmem [shape: f32[1,4], index: 10, kind: input, shape index: {}]
  %s11 = inlined_call_operand.vmem [shape: f32[1,4], index: 11, kind: input, shape index: {}]
  %s12 = inlined_call_operand.vmem [shape: f32[1,4], index: 12, kind: input, shape index: {}]
  %s13 = inlined_call_operand.vmem [shape: f32[1,8], index: 13, kind: input, shape index: {}]
  %s14 = inlined_call_operand.vmem [shape: f32[1,4], index: 14, kind: input, shape index: {}]
  %s15 = inlined_call_operand.vmem [shape: f32[1,4], index: 15, kind: input, shape index: {}]
  %s16 = inlined_call_operand.vmem [shape: f32[1,4], index: 16, kind: input, shape index: {}]
  %s17 = inlined_call_operand.vmem [shape: f32[2,256,8], index: 17, kind: output, shape index: {0}]
  %s18 = inlined_call_operand.vmem [shape: bf16[2,256,4], index: 18, kind: output, shape index: {1}]
  %s19 = inlined_call_operand.vmem [shape: bf16[2,256,4], index: 19, kind: output, shape index: {2}]
  %s20 = inlined_call_operand.vmem [shape: bf16[2,256,4], index: 20, kind: output, shape index: {3}]
  %21 = xla_tuple %s17, %s18, %s19, %s20
  %s22 = sld [smem:[#allocation0]]
  $region125: #{tpu_custom_call.1} parent=0
    _
  %s24 = ssub.s32 1, %s22
  %s25 = scalar_select 0, %s24, %s22
  loop: start=0, step=1, limit=4
  $region2: #{tpu_custom_call.1} parent=0 // loop_pre_header
    _
  $region3: #{tpu_custom_call.1} parent=0 // loop_header
    %s27 = sphi 0, %s31
    %p28 = scmp.ge.s32.totalorder %s27, 4
    %s37 = sphi 0, %s39
    %s40 = sphi 0, %s37
    %s41 = sphi 0, %s40
    %s57 = sphi 0, %s41
    %s61 = sphi 0, %s61
    %s63 = sphi 0, %s61
    %s64 = sphi 0, %s63
    %s78 = sphi 0, %s64
    %s82 = sphi 0, %s82
    %s84 = sphi 0, %s82
    %s85 = sphi 0, %s84
    %s99 = sphi 0, %s85
    %s103 = sphi 0, %s103
    %s105 = sphi 0, %s103
    %s106 = sphi 0, %s105
    %s120 = sphi 0, %s106
    %s124 = sphi 0, %s124
    %s126 = sphi 0, %s124
    %s127 = sphi 0, %s126
    %s141 = sphi 0, %s127
    %s145 = sphi 0, %s145
    %s147 = sphi 0, %s145
    %s148 = sphi 0, %s147
    %s162 = sphi 0, %s148
    %s166 = sphi 0, %s166
    %s168 = sphi 0, %s166
    %s169 = sphi 0, %s168
    %s183 = sphi 0, %s169
    %s187 = sphi 0, %s187
    %s189 = sphi 0, %s187
    %s190 = sphi 0, %s189
    %s204 = sphi 0, %s190
    %s208 = sphi 0, %s208
    %s210 = sphi 0, %s208
    %s211 = sphi 0, %s210
    %s225 = sphi 0, %s211
    %s229 = sphi 0, %s229
    %s231 = sphi 0, %s229
    %s232 = sphi 0, %s231
    %s246 = sphi 0, %s232
    %s250 = sphi 0, %s250
    %s252 = sphi 0, %s250
    %s253 = sphi 0, %s252
    %s267 = sphi 0, %s253
    %s271 = sphi 0, %s271
    %s273 = sphi 0, %s271
    %s274 = sphi 0, %s273
    %s288 = sphi 0, %s274
    %s292 = sphi 0, %s292
    %s294 = sphi 0, %s292
    %s295 = sphi 0, %s294
    %s309 = sphi 0, %s295
    %s313 = sphi 0, %s313
    %s315 = sphi 0, %s313
    %s316 = sphi 0, %s315
    %s330 = sphi 0, %s316
    %s334 = sphi 0, %s334
    %s336 = sphi 0, %s334
    %s337 = sphi 0, %s336
    %s351 = sphi 0, %s337
    %s355 = sphi 0, %s355
    %s357 = sphi 0, %s355
    %s358 = sphi 0, %s357
    %s372 = sphi 0, %s358
    %s376 = sphi 0, %s376
    %s378 = sphi 0, %s376
    %s379 = sphi 0, %s378
    %s393 = sphi 0, %s379
    %s399 = sphi 0, %s401
    %s402 = sphi 0, %s399
    %s403 = sphi 0, %s402
    %s419 = sphi 0, %s403
    %s425 = sphi 0, %s427
    %s428 = sphi 0, %s425
    %s429 = sphi 0, %s428
    %s445 = sphi 0, %s429
    %s451 = sphi 0, %s453
    %s454 = sphi 0, %s451
    %s455 = sphi 0, %s454
    %s471 = sphi 0, %s455
    %s477 = sphi 0, %s479
    %s480 = sphi 0, %s477
    %s481 = sphi 0, %s480
    %s497 = sphi 0, %s481
  $region4: #{tpu_custom_call.1} parent=0 // loop_header_branch
    %30 = sbr.rel (%p28) target = $region8
  $region5: #{tpu_custom_call.1} parent=0 // loop_body
    %s32 = ssub.s32 %s27, 1
    %s33 = ssub.s32 %s27, 2
    %s34 = sadd.s32 %s27, 1
    %s35 = ssub.s32 %s27, %s34
    %p36 = scmp.eq.s32.totalorder %s35, 0
    %s38 = sadd.s32 %s37, 1
    %s39 = scalar_select %p36, %s37, %s38
    %p42 = pneg %p36
    %p43 = scmp.eq.s32.totalorder %s27, 1
    %p44 = por %p42, %p43
    %p45 = scmp.ne.s32.totalorder %s37, %s40
    %p46 = scmp.eq.s32.totalorder %s27, 0
    %p47 = por %p45, %p46
    %p48 = scmp.ne.s32.totalorder %s37, %s40
    %p49 = scmp.eq.s32.totalorder %s32, 1
    %p50 = por %p48, %p49
    %p51 = scmp.ne.s32.totalorder %s40, %s41
    %p52 = scmp.eq.s32.totalorder %s32, 0
    %p53 = por %p51, %p52
    %p54 = scmp.ne.s32.totalorder %s40, %s41
    %p55 = scmp.eq.s32.totalorder %s33, 1
    %p56 = por %p54, %p55
    %p58 = scmp.ne.s32.totalorder %s41, %s57
    %p59 = scmp.eq.s32.totalorder %s33, 0
    %p60 = por %p58, %p59
    %s62 = sadd.s32 %s61, 1
    %p65 = scmp.eq.s32.totalorder %s27, 1
    %p66 = scmp.ne.s32.totalorder %s61, %s63
    %p67 = scmp.eq.s32.totalorder %s27, 0
    %p68 = por %p66, %p67
    %p69 = scmp.ne.s32.totalorder %s61, %s63
    %p70 = scmp.eq.s32.totalorder %s32, 1
    %p71 = por %p69, %p70
    %p72 = scmp.ne.s32.totalorder %s63, %s64
    %p73 = scmp.eq.s32.totalorder %s32, 0
    %p74 = por %p72, %p73
    %p75 = scmp.ne.s32.totalorder %s63, %s64
    %p76 = scmp.eq.s32.totalorder %s33, 1
    %p77 = por %p75, %p76
    %p79 = scmp.ne.s32.totalorder %s64, %s78
    %p80 = scmp.eq.s32.totalorder %s33, 0
    %p81 = por %p79, %p80
    %s83 = sadd.s32 %s82, 1
    %p86 = scmp.eq.s32.totalorder %s27, 1
    %p87 = scmp.ne.s32.totalorder %s82, %s84
    %p88 = scmp.eq.s32.totalorder %s27, 0
    %p89 = por %p87, %p88
    %p90 = scmp.ne.s32.totalorder %s82, %s84
    %p91 = scmp.eq.s32.totalorder %s32, 1
    %p92 = por %p90, %p91
    %p93 = scmp.ne.s32.totalorder %s84, %s85
    %p94 = scmp.eq.s32.totalorder %s32, 0
    %p95 = por %p93, %p94
    %p96 = scmp.ne.s32.totalorder %s84, %s85
    %p97 = scmp.eq.s32.totalorder %s33, 1
    %p98 = por %p96, %p97
    %p100 = scmp.ne.s32.totalorder %s85, %s99
    %p101 = scmp.eq.s32.totalorder %s33, 0
    %p102 = por %p100, %p101
    %s104 = sadd.s32 %s103, 1
    %p107 = scmp.eq.s32.totalorder %s27, 1
    %p108 = scmp.ne.s32.totalorder %s103, %s105
    %p109 = scmp.eq.s32.totalorder %s27, 0
    %p110 = por %p108, %p109
    %p111 = scmp.ne.s32.totalorder %s103, %s105
    %p112 = scmp.eq.s32.totalorder %s32, 1
    %p113 = por %p111, %p112
    %p114 = scmp.ne.s32.totalorder %s105, %s106
    %p115 = scmp.eq.s32.totalorder %s32, 0
    %p116 = por %p114, %p115
    %p117 = scmp.ne.s32.totalorder %s105, %s106
    %p118 = scmp.eq.s32.totalorder %s33, 1
    %p119 = por %p117, %p118
    %p121 = scmp.ne.s32.totalorder %s106, %s120
    %p122 = scmp.eq.s32.totalorder %s33, 0
    %p123 = por %p121, %p122
    %s125 = sadd.s32 %s124, 1
    %p128 = scmp.eq.s32.totalorder %s27, 1
    %p129 = scmp.ne.s32.totalorder %s124, %s126
    %p130 = scmp.eq.s32.totalorder %s27, 0
    %p131 = por %p129, %p130
    %p132 = scmp.ne.s32.totalorder %s124, %s126
    %p133 = scmp.eq.s32.totalorder %s32, 1
    %p134 = por %p132, %p133
    %p135 = scmp.ne.s32.totalorder %s126, %s127
    %p136 = scmp.eq.s32.totalorder %s32, 0
    %p137 = por %p135, %p136
    %p138 = scmp.ne.s32.totalorder %s126, %s127
    %p139 = scmp.eq.s32.totalorder %s33, 1
    %p140 = por %p138, %p139
    %p142 = scmp.ne.s32.totalorder %s127, %s141
    %p143 = scmp.eq.s32.totalorder %s33, 0
    %p144 = por %p142, %p143
    %s146 = sadd.s32 %s145, 1
    %p149 = scmp.eq.s32.totalorder %s27, 1
    %p150 = scmp.ne.s32.totalorder %s145, %s147
    %p151 = scmp.eq.s32.totalorder %s27, 0
    %p152 = por %p150, %p151
    %p153 = scmp.ne.s32.totalorder %s145, %s147
    %p154 = scmp.eq.s32.totalorder %s32, 1
    %p155 = por %p153, %p154
    %p156 = scmp.ne.s32.totalorder %s147, %s148
    %p157 = scmp.eq.s32.totalorder %s32, 0
    %p158 = por %p156, %p157
    %p159 = scmp.ne.s32.totalorder %s147, %s148
    %p160 = scmp.eq.s32.totalorder %s33, 1
    %p161 = por %p159, %p160
    %p163 = scmp.ne.s32.totalorder %s148, %s162
    %p164 = scmp.eq.s32.totalorder %s33, 0
    %p165 = por %p163, %p164
    %s167 = sadd.s32 %s166, 1
    %p170 = scmp.eq.s32.totalorder %s27, 1
    %p171 = scmp.ne.s32.totalorder %s166, %s168
    %p172 = scmp.eq.s32.totalorder %s27, 0
    %p173 = por %p171, %p172
    %p174 = scmp.ne.s32.totalorder %s166, %s168
    %p175 = scmp.eq.s32.totalorder %s32, 1
    %p176 = por %p174, %p175
    %p177 = scmp.ne.s32.totalorder %s168, %s169
    %p178 = scmp.eq.s32.totalorder %s32, 0
    %p179 = por %p177, %p178
    %p180 = scmp.ne.s32.totalorder %s168, %s169
    %p181 = scmp.eq.s32.totalorder %s33, 1
    %p182 = por %p180, %p181
    %p184 = scmp.ne.s32.totalorder %s169, %s183
    %p185 = scmp.eq.s32.totalorder %s33, 0
    %p186 = por %p184, %p185
    %s188 = sadd.s32 %s187, 1
    %p191 = scmp.eq.s32.totalorder %s27, 1
    %p192 = scmp.ne.s32.totalorder %s187, %s189
    %p193 = scmp.eq.s32.totalorder %s27, 0
    %p194 = por %p192, %p193
    %p195 = scmp.ne.s32.totalorder %s187, %s189
    %p196 = scmp.eq.s32.totalorder %s32, 1
    %p197 = por %p195, %p196
    %p198 = scmp.ne.s32.totalorder %s189, %s190
    %p199 = scmp.eq.s32.totalorder %s32, 0
    %p200 = por %p198, %p199
    %p201 = scmp.ne.s32.totalorder %s189, %s190
    %p202 = scmp.eq.s32.totalorder %s33, 1
    %p203 = por %p201, %p202
    %p205 = scmp.ne.s32.totalorder %s190, %s204
    %p206 = scmp.eq.s32.totalorder %s33, 0
    %p207 = por %p205, %p206
    %s209 = sadd.s32 %s208, 1
    %p212 = scmp.eq.s32.totalorder %s27, 1
    %p213 = scmp.ne.s32.totalorder %s208, %s210
    %p214 = scmp.eq.s32.totalorder %s27, 0
    %p215 = por %p213, %p214
    %p216 = scmp.ne.s32.totalorder %s208, %s210
    %p217 = scmp.eq.s32.totalorder %s32, 1
    %p218 = por %p216, %p217
    %p219 = scmp.ne.s32.totalorder %s210, %s211
    %p220 = scmp.eq.s32.totalorder %s32, 0
    %p221 = por %p219, %p220
    %p222 = scmp.ne.s32.totalorder %s210, %s211
    %p223 = scmp.eq.s32.totalorder %s33, 1
    %p224 = por %p222, %p223
    %p226 = scmp.ne.s32.totalorder %s211, %s225
    %p227 = scmp.eq.s32.totalorder %s33, 0
    %p228 = por %p226, %p227
    %s230 = sadd.s32 %s229, 1
    %p233 = scmp.eq.s32.totalorder %s27, 1
    %p234 = scmp.ne.s32.totalorder %s229, %s231
    %p235 = scmp.eq.s32.totalorder %s27, 0
    %p236 = por %p234, %p235
    %p237 = scmp.ne.s32.totalorder %s229, %s231
    %p238 = scmp.eq.s32.totalorder %s32, 1
    %p239 = por %p237, %p238
    %p240 = scmp.ne.s32.totalorder %s231, %s232
    %p241 = scmp.eq.s32.totalorder %s32, 0
    %p242 = por %p240, %p241
    %p243 = scmp.ne.s32.totalorder %s231, %s232
    %p244 = scmp.eq.s32.totalorder %s33, 1
    %p245 = por %p243, %p244
    %p247 = scmp.ne.s32.totalorder %s232, %s246
    %p248 = scmp.eq.s32.totalorder %s33, 0
    %p249 = por %p247, %p248
    %s251 = sadd.s32 %s250, 1
    %p254 = scmp.eq.s32.totalorder %s27, 1
    %p255 = scmp.ne.s32.totalorder %s250, %s252
    %p256 = scmp.eq.s32.totalorder %s27, 0
    %p257 = por %p255, %p256
    %p258 = scmp.ne.s32.totalorder %s250, %s252
    %p259 = scmp.eq.s32.totalorder %s32, 1
    %p260 = por %p258, %p259
    %p261 = scmp.ne.s32.totalorder %s252, %s253
    %p262 = scmp.eq.s32.totalorder %s32, 0
    %p263 = por %p261, %p262
    %p264 = scmp.ne.s32.totalorder %s252, %s253
    %p265 = scmp.eq.s32.totalorder %s33, 1
    %p266 = por %p264, %p265
    %p268 = scmp.ne.s32.totalorder %s253, %s267
    %p269 = scmp.eq.s32.totalorder %s33, 0
    %p270 = por %p268, %p269
    %s272 = sadd.s32 %s271, 1
    %p275 = scmp.eq.s32.totalorder %s27, 1
    %p276 = scmp.ne.s32.totalorder %s271, %s273
    %p277 = scmp.eq.s32.totalorder %s27, 0
    %p278 = por %p276, %p277
    %p279 = scmp.ne.s32.totalorder %s271, %s273
    %p280 = scmp.eq.s32.totalorder %s32, 1
    %p281 = por %p279, %p280
    %p282 = scmp.ne.s32.totalorder %s273, %s274
    %p283 = scmp.eq.s32.totalorder %s32, 0
    %p284 = por %p282, %p283
    %p285 = scmp.ne.s32.totalorder %s273, %s274
    %p286 = scmp.eq.s32.totalorder %s33, 1
    %p287 = por %p285, %p286
    %p289 = scmp.ne.s32.totalorder %s274, %s288
    %p290 = scmp.eq.s32.totalorder %s33, 0
    %p291 = por %p289, %p290
    %s293 = sadd.s32 %s292, 1
    %p296 = scmp.eq.s32.totalorder %s27, 1
    %p297 = scmp.ne.s32.totalorder %s292, %s294
    %p298 = scmp.eq.s32.totalorder %s27, 0
    %p299 = por %p297, %p298
    %p300 = scmp.ne.s32.totalorder %s292, %s294
    %p301 = scmp.eq.s32.totalorder %s32, 1
    %p302 = por %p300, %p301
    %p303 = scmp.ne.s32.totalorder %s294, %s295
    %p304 = scmp.eq.s32.totalorder %s32, 0
    %p305 = por %p303, %p304
    %p306 = scmp.ne.s32.totalorder %s294, %s295
    %p307 = scmp.eq.s32.totalorder %s33, 1
    %p308 = por %p306, %p307
    %p310 = scmp.ne.s32.totalorder %s295, %s309
    %p311 = scmp.eq.s32.totalorder %s33, 0
    %p312 = por %p310, %p311
    %s314 = sadd.s32 %s313, 1
    %p317 = scmp.eq.s32.totalorder %s27, 1
    %p318 = scmp.ne.s32.totalorder %s313, %s315
    %p319 = scmp.eq.s32.totalorder %s27, 0
    %p320 = por %p318, %p319
    %p321 = scmp.ne.s32.totalorder %s313, %s315
    %p322 = scmp.eq.s32.totalorder %s32, 1
    %p323 = por %p321, %p322
    %p324 = scmp.ne.s32.totalorder %s315, %s316
    %p325 = scmp.eq.s32.totalorder %s32, 0
    %p326 = por %p324, %p325
    %p327 = scmp.ne.s32.totalorder %s315, %s316
    %p328 = scmp.eq.s32.totalorder %s33, 1
    %p329 = por %p327, %p328
    %p331 = scmp.ne.s32.totalorder %s316, %s330
    %p332 = scmp.eq.s32.totalorder %s33, 0
    %p333 = por %p331, %p332
    %s335 = sadd.s32 %s334, 1
    %p338 = scmp.eq.s32.totalorder %s27, 1
    %p339 = scmp.ne.s32.totalorder %s334, %s336
    %p340 = scmp.eq.s32.totalorder %s27, 0
    %p341 = por %p339, %p340
    %p342 = scmp.ne.s32.totalorder %s334, %s336
    %p343 = scmp.eq.s32.totalorder %s32, 1
    %p344 = por %p342, %p343
    %p345 = scmp.ne.s32.totalorder %s336, %s337
    %p346 = scmp.eq.s32.totalorder %s32, 0
    %p347 = por %p345, %p346
    %p348 = scmp.ne.s32.totalorder %s336, %s337
    %p349 = scmp.eq.s32.totalorder %s33, 1
    %p350 = por %p348, %p349
    %p352 = scmp.ne.s32.totalorder %s337, %s351
    %p353 = scmp.eq.s32.totalorder %s33, 0
    %p354 = por %p352, %p353
    %s356 = sadd.s32 %s355, 1
    %p359 = scmp.eq.s32.totalorder %s27, 1
    %p360 = scmp.ne.s32.totalorder %s355, %s357
    %p361 = scmp.eq.s32.totalorder %s27, 0
    %p362 = por %p360, %p361
    %p363 = scmp.ne.s32.totalorder %s355, %s357
    %p364 = scmp.eq.s32.totalorder %s32, 1
    %p365 = por %p363, %p364
    %p366 = scmp.ne.s32.totalorder %s357, %s358
    %p367 = scmp.eq.s32.totalorder %s32, 0
    %p368 = por %p366, %p367
    %p369 = scmp.ne.s32.totalorder %s357, %s358
    %p370 = scmp.eq.s32.totalorder %s33, 1
    %p371 = por %p369, %p370
    %p373 = scmp.ne.s32.totalorder %s358, %s372
    %p374 = scmp.eq.s32.totalorder %s33, 0
    %p375 = por %p373, %p374
    %s377 = sadd.s32 %s376, 1
    %p380 = scmp.eq.s32.totalorder %s27, 1
    %p381 = scmp.ne.s32.totalorder %s376, %s378
    %p382 = scmp.eq.s32.totalorder %s27, 0
    %p383 = por %p381, %p382
    %p384 = scmp.ne.s32.totalorder %s376, %s378
    %p385 = scmp.eq.s32.totalorder %s32, 1
    %p386 = por %p384, %p385
    %p387 = scmp.ne.s32.totalorder %s378, %s379
    %p388 = scmp.eq.s32.totalorder %s32, 0
    %p389 = por %p387, %p388
    %p390 = scmp.ne.s32.totalorder %s378, %s379
    %p391 = scmp.eq.s32.totalorder %s33, 1
    %p392 = por %p390, %p391
    %p394 = scmp.ne.s32.totalorder %s379, %s393
    %p395 = scmp.eq.s32.totalorder %s33, 0
    %p396 = por %p394, %p395
    %s397 = ssub.s32 %s27, %s34
    %p398 = scmp.eq.s32.totalorder %s397, 0
    %s400 = sadd.s32 %s399, 1
    %s401 = scalar_select %p398, %s399, %s400
    %p404 = pneg %p398
    %p405 = scmp.eq.s32.totalorder %s27, 1
    %p406 = por %p404, %p405
    %p407 = scmp.ne.s32.totalorder %s399, %s402
    %p408 = scmp.eq.s32.totalorder %s27, 0
    %p409 = por %p407, %p408
    %p410 = scmp.ne.s32.totalorder %s399, %s402
    %p411 = scmp.eq.s32.totalorder %s32, 1
    %p412 = por %p410, %p411
    %p413 = scmp.ne.s32.totalorder %s402, %s403
    %p414 = scmp.eq.s32.totalorder %s32, 0
    %p415 = por %p413, %p414
    %p416 = scmp.ne.s32.totalorder %s402, %s403
    %p417 = scmp.eq.s32.totalorder %s33, 1
    %p418 = por %p416, %p417
    %p420 = scmp.ne.s32.totalorder %s403, %s419
    %p421 = scmp.eq.s32.totalorder %s33, 0
    %p422 = por %p420, %p421
    %s423 = ssub.s32 %s27, %s34
    %p424 = scmp.eq.s32.totalorder %s423, 0
    %s426 = sadd.s32 %s425, 1
    %s427 = scalar_select %p424, %s425, %s426
    %p430 = pneg %p424
    %p431 = scmp.eq.s32.totalorder %s27, 1
    %p432 = por %p430, %p431
    %p433 = scmp.ne.s32.totalorder %s425, %s428
    %p434 = scmp.eq.s32.totalorder %s27, 0
    %p435 = por %p433, %p434
    %p436 = scmp.ne.s32.totalorder %s425, %s428
    %p437 = scmp.eq.s32.totalorder %s32, 1
    %p438 = por %p436, %p437
    %p439 = scmp.ne.s32.totalorder %s428, %s429
    %p440 = scmp.eq.s32.totalorder %s32, 0
    %p441 = por %p439, %p440
    %p442 = scmp.ne.s32.totalorder %s428, %s429
    %p443 = scmp.eq.s32.totalorder %s33, 1
    %p444 = por %p442, %p443
    %p446 = scmp.ne.s32.totalorder %s429, %s445
    %p447 = scmp.eq.s32.totalorder %s33, 0
    %p448 = por %p446, %p447
    %s449 = ssub.s32 %s27, %s34
    %p450 = scmp.eq.s32.totalorder %s449, 0
    %s452 = sadd.s32 %s451, 1
    %s453 = scalar_select %p450, %s451, %s452
    %p456 = pneg %p450
    %p457 = scmp.eq.s32.totalorder %s27, 1
    %p458 = por %p456, %p457
    %p459 = scmp.ne.s32.totalorder %s451, %s454
    %p460 = scmp.eq.s32.totalorder %s27, 0
    %p461 = por %p459, %p460
    %p462 = scmp.ne.s32.totalorder %s451, %s454
    %p463 = scmp.eq.s32.totalorder %s32, 1
    %p464 = por %p462, %p463
    %p465 = scmp.ne.s32.totalorder %s454, %s455
    %p466 = scmp.eq.s32.totalorder %s32, 0
    %p467 = por %p465, %p466
    %p468 = scmp.ne.s32.totalorder %s454, %s455
    %p469 = scmp.eq.s32.totalorder %s33, 1
    %p470 = por %p468, %p469
    %p472 = scmp.ne.s32.totalorder %s455, %s471
    %p473 = scmp.eq.s32.totalorder %s33, 0
    %p474 = por %p472, %p473
    %s475 = ssub.s32 %s27, %s34
    %p476 = scmp.eq.s32.totalorder %s475, 0
    %s478 = sadd.s32 %s477, 1
    %s479 = scalar_select %p476, %s477, %s478
    %p482 = pneg %p476
    %p483 = scmp.eq.s32.totalorder %s27, 1
    %p484 = por %p482, %p483
    %p485 = scmp.ne.s32.totalorder %s477, %s480
    %p486 = scmp.eq.s32.totalorder %s27, 0
    %p487 = por %p485, %p486
    %p488 = scmp.ne.s32.totalorder %s477, %s480
    %p489 = scmp.eq.s32.totalorder %s32, 1
    %p490 = por %p488, %p489
    %p491 = scmp.ne.s32.totalorder %s480, %s481
    %p492 = scmp.eq.s32.totalorder %s32, 0
    %p493 = por %p491, %p492
    %p494 = scmp.ne.s32.totalorder %s480, %s481
    %p495 = scmp.eq.s32.totalorder %s33, 1
    %p496 = por %p494, %p495
    %p498 = scmp.ne.s32.totalorder %s481, %s497
    %p499 = scmp.eq.s32.totalorder %s33, 0
    %p500 = por %p498, %p499
    %p501 = scmp.le.s32.totalorder 1, %s27
    %p502 = scmp.lt.s32.totalorder %s27, 3
    %p503 = pnand %p501, %p502
    %p504 = pneg %p503
    // Predicated region
    $region9: #{tpu_custom_call.1} parent=5 // pred_check
      _
    $region10: #{tpu_custom_call.1} parent=5 // pred_check_branch
      %506 = sbr.rel (%p503) target = $region12
    $region11: #{tpu_custom_call.1} parent=5 // pred_region
      %s507 = ssub.s32 %s27, 1
      // Predicated region
      $region13: #{tpu_custom_call.1} parent=11 // pred_check
        %p508 = pneg %p74
      $region14: #{tpu_custom_call.1} parent=11 // pred_check_branch
        %510 = sbr.rel (%p508) target = $region16
      $region15: #{tpu_custom_call.1} parent=11 // pred_region
        _
      $region16: #{tpu_custom_call.1} parent=11 // pred_fallthru
        _
      // Predicated region
      $region17: #{tpu_custom_call.1} parent=11 // pred_check
        %p511 = pneg %p95
      $region18: #{tpu_custom_call.1} parent=11 // pred_check_branch
        %513 = sbr.rel (%p511) target = $region20
      $region19: #{tpu_custom_call.1} parent=11 // pred_region
        _
      $region20: #{tpu_custom_call.1} parent=11 // pred_fallthru
        _
      // Predicated region
      $region21: #{tpu_custom_call.1} parent=11 // pred_check
        %p514 = pneg %p116
      $region22: #{tpu_custom_call.1} parent=11 // pred_check_branch
        %516 = sbr.rel (%p514) target = $region24
      $region23: #{tpu_custom_call.1} parent=11 // pred_region
        _
      $region24: #{tpu_custom_call.1} parent=11 // pred_fallthru
        _
      // Predicated region
      $region25: #{tpu_custom_call.1} parent=11 // pred_check
        %p517 = pneg %p137
      $region26: #{tpu_custom_call.1} parent=11 // pred_check_branch
        %519 = sbr.rel (%p517) target = $region28
      $region27: #{tpu_custom_call.1} parent=11 // pred_region
        _
      $region28: #{tpu_custom_call.1} parent=11 // pred_fallthru
        _
      // Predicated region
      $region29: #{tpu_custom_call.1} parent=11 // pred_check
        %p520 = pneg %p158
      $region30: #{tpu_custom_call.1} parent=11 // pred_check_branch
        %522 = sbr.rel (%p520) target = $region32
      $region31: #{tpu_custom_call.1} parent=11 // pred_region
        _
      $region32: #{tpu_custom_call.1} parent=11 // pred_fallthru
        _
      // Predicated region
      $region33: #{tpu_custom_call.1} parent=11 // pred_check
        %p523 = pneg %p179
      $region34: #{tpu_custom_call.1} parent=11 // pred_check_branch
        %525 = sbr.rel (%p523) target = $region36
      $region35: #{tpu_custom_call.1} parent=11 // pred_region
        _
      $region36: #{tpu_custom_call.1} parent=11 // pred_fallthru
        _
      // Predicated region
      $region37: #{tpu_custom_call.1} parent=11 // pred_check
        %p526 = pneg %p200
      $region38: #{tpu_custom_call.1} parent=11 // pred_check_branch
        %528 = sbr.rel (%p526) target = $region40
      $region39: #{tpu_custom_call.1} parent=11 // pred_region
        _
      $region40: #{tpu_custom_call.1} parent=11 // pred_fallthru
        _
      // Predicated region
      $region41: #{tpu_custom_call.1} parent=11 // pred_check
        %p529 = pneg %p221
      $region42: #{tpu_custom_call.1} parent=11 // pred_check_branch
        %531 = sbr.rel (%p529) target = $region44
      $region43: #{tpu_custom_call.1} parent=11 // pred_region
        _
      $region44: #{tpu_custom_call.1} parent=11 // pred_fallthru
        _
      // Predicated region
      $region45: #{tpu_custom_call.1} parent=11 // pred_check
        %p532 = pneg %p242
      $region46: #{tpu_custom_call.1} parent=11 // pred_check_branch
        %534 = sbr.rel (%p532) target = $region48
      $region47: #{tpu_custom_call.1} parent=11 // pred_region
        _
      $region48: #{tpu_custom_call.1} parent=11 // pred_fallthru
        _
      // Predicated region
      $region49: #{tpu_custom_call.1} parent=11 // pred_check
        %p535 = pneg %p263
      $region50: #{tpu_custom_call.1} parent=11 // pred_check_branch
        %537 = sbr.rel (%p535) target = $region52
      $region51: #{tpu_custom_call.1} parent=11 // pred_region
        _
      $region52: #{tpu_custom_call.1} parent=11 // pred_fallthru
        _
      // Predicated region
      $region53: #{tpu_custom_call.1} parent=11 // pred_check
        %p538 = pneg %p284
      $region54: #{tpu_custom_call.1} parent=11 // pred_check_branch
        %540 = sbr.rel (%p538) target = $region56
      $region55: #{tpu_custom_call.1} parent=11 // pred_region
        _
      $region56: #{tpu_custom_call.1} parent=11 // pred_fallthru
        _
      // Predicated region
      $region57: #{tpu_custom_call.1} parent=11 // pred_check
        %p541 = pneg %p305
      $region58: #{tpu_custom_call.1} parent=11 // pred_check_branch
        %543 = sbr.rel (%p541) target = $region60
      $region59: #{tpu_custom_call.1} parent=11 // pred_region
        _
      $region60: #{tpu_custom_call.1} parent=11 // pred_fallthru
        _
      // Predicated region
      $region61: #{tpu_custom_call.1} parent=11 // pred_check
        %p544 = pneg %p326
      $region62: #{tpu_custom_call.1} parent=11 // pred_check_branch
        %546 = sbr.rel (%p544) target = $region64
      $region63: #{tpu_custom_call.1} parent=11 // pred_region
        _
      $region64: #{tpu_custom_call.1} parent=11 // pred_fallthru
        _
      // Predicated region
      $region65: #{tpu_custom_call.1} parent=11 // pred_check
        %p547 = pneg %p347
      $region66: #{tpu_custom_call.1} parent=11 // pred_check_branch
        %549 = sbr.rel (%p547) target = $region68
      $region67: #{tpu_custom_call.1} parent=11 // pred_region
        _
      $region68: #{tpu_custom_call.1} parent=11 // pred_fallthru
        _
      // Predicated region
      $region69: #{tpu_custom_call.1} parent=11 // pred_check
        %p550 = pneg %p368
      $region70: #{tpu_custom_call.1} parent=11 // pred_check_branch
        %552 = sbr.rel (%p550) target = $region72
      $region71: #{tpu_custom_call.1} parent=11 // pred_region
        _
      $region72: #{tpu_custom_call.1} parent=11 // pred_fallthru
        _
      // Predicated region
      $region73: #{tpu_custom_call.1} parent=11 // pred_check
        %p553 = pneg %p389
      $region74: #{tpu_custom_call.1} parent=11 // pred_check_branch
        %555 = sbr.rel (%p553) target = $region76
      $region75: #{tpu_custom_call.1} parent=11 // pred_region
        _
      $region76: #{tpu_custom_call.1} parent=11 // pred_fallthru
        _
    $region12: #{tpu_custom_call.1} parent=5 // pred_fallthru
      _
    %p556 = scmp.lt.s32.totalorder %s27, 2
    // Predicated region
    $region77: #{tpu_custom_call.1} parent=5 // pred_check
      %p557 = pneg %p556
    $region78: #{tpu_custom_call.1} parent=5 // pred_check_branch
      %559 = sbr.rel (%p557) target = $region80
    $region79: #{tpu_custom_call.1} parent=5 // pred_region
      // Predicated region
      $region81: #{tpu_custom_call.1} parent=79 // pred_check
        %p560 = pneg %p47
      $region82: #{tpu_custom_call.1} parent=79 // pred_check_branch
        %562 = sbr.rel (%p560) target = $region84
      $region83: #{tpu_custom_call.1} parent=79 // pred_region
        %p563 = scmp.lt.s32.totalorder %s27, 1
        %s564 = scalar_select %p563, %s27, 1
        %s565 = smul.addr %s564, 32
        %s566 = smul.addr %s565, 8
        %s567 = scalar_lea.vmem %s0, %s566
      $region84: #{tpu_custom_call.1} parent=79 // pred_fallthru
        _
    $region80: #{tpu_custom_call.1} parent=5 // pred_fallthru
      _
    %p568 = scmp.le.s32.totalorder 1, %s27
    %p569 = scmp.lt.s32.totalorder %s27, 3
    %p570 = pnand %p568, %p569
    %p571 = pneg %p570
    // Predicated region
    $region85: #{tpu_custom_call.1} parent=5 // pred_check
      _
    $region86: #{tpu_custom_call.1} parent=5 // pred_check_branch
      %573 = sbr.rel (%p570) target = $region88
    $region87: #{tpu_custom_call.1} parent=5 // pred_region
      %s574 = ssub.s32 %s27, 1
      %p575 = scmp.lt.s32.totalorder %s32, 1
      %s576 = scalar_select %p575, %s32, 1
      %s577 = smul.addr %s576, 32
      %s578 = smul.addr %s577, 8
      %s579 = scalar_lea.vmem %s0, %s578
      %p580 = pneg %p53
      %p581 = pneg %p50
      %p582 = pneg %p74
      %p583 = pneg %p71
      %p584 = pneg %p95
      %p585 = pneg %p92
      %p586 = pneg %p116
      %p587 = pneg %p113
      %p588 = pneg %p137
      %p589 = pneg %p134
      %p590 = pneg %p158
      %p591 = pneg %p155
      %p592 = pneg %p179
      %p593 = pneg %p176
      %p594 = pneg %p200
      %p595 = pneg %p197
      %p596 = pneg %p221
      %p597 = pneg %p218
      %p598 = pneg %p242
      %p599 = pneg %p239
      %p600 = pneg %p263
      %p601 = pneg %p260
      %p602 = pneg %p284
      %p603 = pneg %p281
      %p604 = pneg %p305
      %p605 = pneg %p302
      %p606 = pneg %p326
      %p607 = pneg %p323
      %p608 = pneg %p347
      %p609 = pneg %p344
      %p610 = pneg %p368
      %p611 = pneg %p365
      %p612 = pneg %p389
      %p613 = pneg %p386
      %p614 = pneg %p415
      %p615 = pneg %p412
      %p616 = scmp.lt.s32.totalorder %s32, 1
      %s617 = scalar_select %p616, %s32, 1
      %s618 = smul.addr %s617, 32
      %s619 = smul.addr %s618, 8
      %s620 = scalar_lea.vmem %s17, %s619
      %p621 = pneg %p441
      %p622 = pneg %p438
      %p623 = scmp.lt.s32.totalorder %s32, 1
      %s624 = scalar_select %p623, %s32, 1
      %s625 = smul.addr %s624, 32
      %s626 = smul.addr %s625, 4
      %s627 = scalar_lea.vmem %s18, %s626
      %p628 = pneg %p467
      %p629 = pneg %p464
      %p630 = scmp.lt.s32.totalorder %s32, 1
      %s631 = scalar_select %p630, %s32, 1
      %s632 = smul.addr %s631, 32
      %s633 = smul.addr %s632, 4
      %s634 = scalar_lea.vmem %s19, %s633
      %p635 = pneg %p493
      %p636 = pneg %p490
      %p637 = scmp.lt.s32.totalorder %s32, 1
      %s638 = scalar_select %p637, %s32, 1
      %s639 = smul.addr %s638, 32
      %s640 = smul.addr %s639, 4
      %s641 = scalar_lea.vmem %s20, %s640
      %p642 = scmp.lt.s32.totalorder %s32, 1
      %s643 = scalar_select %p642, %s32, 1
      %s644 = smul.addr %s643, 32
      %s645 = smul.addr %s644, 8
      %s646 = scalar_lea.vmem %s0, %s645
      %p647 = scmp.lt.s32.totalorder %s32, 1
      %s648 = scalar_select %p647, %s32, 1
      %s649 = smul.addr %s648, 32
      %s650 = smul.addr %s649, 8
      %s651 = scalar_lea.vmem %s17, %s650
      %p652 = scmp.lt.s32.totalorder %s32, 1
      %s653 = scalar_select %p652, %s32, 1
      %s654 = smul.addr %s653, 32
      %s655 = smul.addr %s654, 4
      %s656 = scalar_lea.vmem %s18, %s655
      %p657 = scmp.lt.s32.totalorder %s32, 1
      %s658 = scalar_select %p657, %s32, 1
      %s659 = smul.addr %s658, 32
      %s660 = smul.addr %s659, 4
      %s661 = scalar_lea.vmem %s19, %s660
      %p662 = scmp.lt.s32.totalorder %s32, 1
      %s663 = scalar_select %p662, %s32, 1
      %s664 = smul.addr %s663, 32
      %s665 = smul.addr %s664, 4
      %s666 = scalar_lea.vmem %s20, %s665
      %v668 = vld [vmem:[%s646] sm:$0xff]
      %v669 = vld [vmem:[%s646 + $0x8] sm:$0xff]
      %v670 = vld [vmem:[%s646 + $0x10] sm:$0xff]
      %v671 = vld [vmem:[%s646 + $0x18] sm:$0xff]
      %v672 = vld [vmem:[%s646 + $0x20] sm:$0xff]
      %v673 = vld [vmem:[%s646 + $0x28] sm:$0xff]
      %v674 = vld [vmem:[%s646 + $0x30] sm:$0xff]
      %v675 = vld [vmem:[%s646 + $0x38] sm:$0xff]
      %v676 = vld [vmem:[%s646 + $0x40] sm:$0xff]
      %v677 = vld [vmem:[%s646 + $0x48] sm:$0xff]
      %v678 = vld [vmem:[%s646 + $0x50] sm:$0xff]
      %v679 = vld [vmem:[%s646 + $0x58] sm:$0xff]
      %v680 = vld [vmem:[%s646 + $0x60] sm:$0xff]
      %v681 = vld [vmem:[%s646 + $0x68] sm:$0xff]
      %v682 = vld [vmem:[%s646 + $0x70] sm:$0xff]
      %v683 = vld [vmem:[%s646 + $0x78] sm:$0xff]
      %v684 = vld [vmem:[%s646 + $0x80] sm:$0xff]
      %v685 = vld [vmem:[%s646 + $0x88] sm:$0xff]
      %v686 = vld [vmem:[%s646 + $0x90] sm:$0xff]
      %v687 = vld [vmem:[%s646 + $0x98] sm:$0xff]
      %v688 = vld [vmem:[%s646 + $0xa0] sm:$0xff]
      %v689 = vld [vmem:[%s646 + $0xa8] sm:$0xff]
      %v690 = vld [vmem:[%s646 + $0xb0] sm:$0xff]
      %v691 = vld [vmem:[%s646 + $0xb8] sm:$0xff]
      %v692 = vld [vmem:[%s646 + $0xc0] sm:$0xff]
      %v693 = vld [vmem:[%s646 + $0xc8] sm:$0xff]
      %v694 = vld [vmem:[%s646 + $0xd0] sm:$0xff]
      %v695 = vld [vmem:[%s646 + $0xd8] sm:$0xff]
      %v696 = vld [vmem:[%s646 + $0xe0] sm:$0xff]
      %v697 = vld [vmem:[%s646 + $0xe8] sm:$0xff]
      %v698 = vld [vmem:[%s646 + $0xf0] sm:$0xff]
      %v699 = vld [vmem:[%s646 + $0xf8] sm:$0xff]
      %v700 = vpack.c.bf16 %v669, %v668
      %v701 = vpack.c.bf16 %v671, %v670
      %v702 = vpack.c.bf16 %v673, %v672
      %v703 = vpack.c.bf16 %v675, %v674
      %v704 = vpack.c.bf16 %v677, %v676
      %v705 = vpack.c.bf16 %v679, %v678
      %v706 = vpack.c.bf16 %v681, %v680
      %v707 = vpack.c.bf16 %v683, %v682
      %v708 = vpack.c.bf16 %v685, %v684
      %v709 = vpack.c.bf16 %v687, %v686
      %v710 = vpack.c.bf16 %v689, %v688
      %v711 = vpack.c.bf16 %v691, %v690
      %v712 = vpack.c.bf16 %v693, %v692
      %v713 = vpack.c.bf16 %v695, %v694
      %v714 = vpack.c.bf16 %v697, %v696
      %v715 = vpack.c.bf16 %v699, %v698
      %v716 = vld [vmem:[%s1] sm:$0x3]
      %vm717 = vcmask 31744
      %v719 = vsel %vm717, %v700, 0
      %v722 = vsel %vm717, %v701, 0
      %v725 = vsel %vm717, %v702, 0
      %v728 = vsel %vm717, %v703, 0
      %v731 = vsel %vm717, %v704, 0
      %v734 = vsel %vm717, %v705, 0
      %v737 = vsel %vm717, %v706, 0
      %v740 = vsel %vm717, %v707, 0
      %v743 = vsel %vm717, %v708, 0
      %v746 = vsel %vm717, %v709, 0
      %v749 = vsel %vm717, %v710, 0
      %v752 = vsel %vm717, %v711, 0
      %v755 = vsel %vm717, %v712, 0
      %v758 = vsel %vm717, %v713, 0
      %v761 = vsel %vm717, %v714, 0
      %v764 = vsel %vm717, %v715, 0
      %vm766 = vcmask 1041408
      %v768 = vsel %vm766, %v716, 0
      %770 = vmatprep.subr.bf16.mxu0 0
      %771 = vmatpush1.bf16.msra.mxu0 %v768
      %772 = vmatprep.subr.bf16.mxu0 0
      %773 = vmatpush1.bf16.msra.mxu0 0
      %774 = vmatprep.subr.bf16.mxu0 0
      %775 = vmatpush1.bf16.msra.mxu0 0
      %776 = vmatprep.subr.bf16.mxu0 0
      %777 = vmatpush1.bf16.msra.mxu0 0
      %778 = vmatprep.subr.bf16.mxu0 0
      %779 = vmatpush1.bf16.msra.mxu0 0
      %780 = vmatprep.subr.bf16.mxu0 0
      %781 = vmatpush1.bf16.msra.mxu0 0
      %782 = vmatprep.subr.bf16.mxu0 0
      %783 = vmatpush1.bf16.msra.mxu0 0
      %784 = vmatprep.subr.bf16.mxu0 0
      %785 = vmatpush1.bf16.msra.mxu0 0
      %786 = vmatprep.subr.bf16.mxu0 0
      %787 = vmatpush1.bf16.msra.mxu0 0
      %788 = vmatprep.subr.bf16.mxu0 0
      %789 = vmatpush1.bf16.msra.mxu0 0
      %790 = vmatprep.subr.bf16.mxu0 0
      %791 = vmatpush1.bf16.msra.mxu0 0
      %792 = vmatprep.subr.bf16.mxu0 0
      %793 = vmatpush1.bf16.msra.mxu0 0
      %794 = vmatprep.subr.bf16.mxu0 0
      %795 = vmatpush1.bf16.msra.mxu0 0
      %796 = vmatprep.subr.bf16.mxu0 0
      %797 = vmatpush1.bf16.msra.mxu0 0
      %798 = vmatprep.subr.bf16.mxu0 0
      %799 = vmatpush1.bf16.msra.mxu0 0
      %800 = vmatprep.subr.bf16.mxu0 0
      %801 = vmatpush1.bf16.msra.mxu0 0
      %802 = vmatprep.mubr.bf16.mxu0 0
      %803 = vmatmul.mubr.bf16.gmra.mrb[0].mxu0 %v719
      %v804 = vpop.f32.mrb[0].mxu0
      %v805 = vadd.f32 0.0, %v804
      %v806 = vpop.f32.mrb[0].mxu0
      %v807 = vpop.f32.mrb[0].mxu0
      %v808 = vadd.f32 0.0, %v807
      %v809 = vpop.f32.mrb[0].mxu0
      %810 = vmatprep.mubr.bf16.mxu0 0
      %811 = vmatmul.mubr.bf16.gmra.mrb[0].mxu0 %v722
      %v812 = vpop.f32.mrb[0].mxu0
      %v813 = vadd.f32 0.0, %v812
      %v814 = vpop.f32.mrb[0].mxu0
      %v815 = vpop.f32.mrb[0].mxu0
      %v816 = vadd.f32 0.0, %v815
      %v817 = vpop.f32.mrb[0].mxu0
      %818 = vmatprep.mubr.bf16.mxu0 0
      %819 = vmatmul.mubr.bf16.gmra.mrb[0].mxu0 %v725
      %v820 = vpop.f32.mrb[0].mxu0
      %v821 = vadd.f32 0.0, %v820
      %v822 = vpop.f32.mrb[0].mxu0
      %v823 = vpop.f32.mrb[0].mxu0
      %v824 = vadd.f32 0.0, %v823
      %v825 = vpop.f32.mrb[0].mxu0
      %826 = vmatprep.mubr.bf16.mxu0 0
      %827 = vmatmul.mubr.bf16.gmra.mrb[0].mxu0 %v728
      %v828 = vpop.f32.mrb[0].mxu0
      %v829 = vadd.f32 0.0, %v828
      %v830 = vpop.f32.mrb[0].mxu0
      %v831 = vpop.f32.mrb[0].mxu0
      %v832 = vadd.f32 0.0, %v831
      %v833 = vpop.f32.mrb[0].mxu0
      %834 = vmatprep.mubr.bf16.mxu0 0
      %835 = vmatmul.mubr.bf16.gmra.mrb[0].mxu0 %v731
      %v836 = vpop.f32.mrb[0].mxu0
      %v837 = vadd.f32 0.0, %v836
      %v838 = vpop.f32.mrb[0].mxu0
      %v839 = vpop.f32.mrb[0].mxu0
      %v840 = vadd.f32 0.0, %v839
      %v841 = vpop.f32.mrb[0].mxu0
      %842 = vmatprep.mubr.bf16.mxu0 0
      %843 = vmatmul.mubr.bf16.gmra.mrb[0].mxu0 %v734
      %v844 = vpop.f32.mrb[0].mxu0
      %v845 = vadd.f32 0.0, %v844
      %v846 = vpop.f32.mrb[0].mxu0
      %v847 = vpop.f32.mrb[0].mxu0
      %v848 = vadd.f32 0.0, %v847
      %v849 = vpop.f32.mrb[0].mxu0
      %850 = vmatprep.mubr.bf16.mxu0 0
      %851 = vmatmul.mubr.bf16.gmra.mrb[0].mxu0 %v737
      %v852 = vpop.f32.mrb[0].mxu0
      %v853 = vadd.f32 0.0, %v852
      %v854 = vpop.f32.mrb[0].mxu0
      %v855 = vpop.f32.mrb[0].mxu0
      %v856 = vadd.f32 0.0, %v855
      %v857 = vpop.f32.mrb[0].mxu0
      %858 = vmatprep.mubr.bf16.mxu0 0
      %859 = vmatmul.mubr.bf16.gmra.mrb[0].mxu0 %v740
      %v860 = vpop.f32.mrb[0].mxu0
      %v861 = vadd.f32 0.0, %v860
      %v862 = vpop.f32.mrb[0].mxu0
      %v863 = vpop.f32.mrb[0].mxu0
      %v864 = vadd.f32 0.0, %v863
      %v865 = vpop.f32.mrb[0].mxu0
      %866 = vmatprep.mubr.bf16.mxu0 0
      %867 = vmatmul.mubr.bf16.gmra.mrb[0].mxu0 %v743
      %v868 = vpop.f32.mrb[0].mxu0
      %v869 = vadd.f32 0.0, %v868
      %v870 = vpop.f32.mrb[0].mxu0
      %v871 = vpop.f32.mrb[0].mxu0
      %v872 = vadd.f32 0.0, %v871
      %v873 = vpop.f32.mrb[0].mxu0
      %874 = vmatprep.mubr.bf16.mxu0 0
      %875 = vmatmul.mubr.bf16.gmra.mrb[0].mxu0 %v746
      %v876 = vpop.f32.mrb[0].mxu0
      %v877 = vadd.f32 0.0, %v876
      %v878 = vpop.f32.mrb[0].mxu0
      %v879 = vpop.f32.mrb[0].mxu0
      %v880 = vadd.f32 0.0, %v879
      %v881 = vpop.f32.mrb[0].mxu0
      %882 = vmatprep.mubr.bf16.mxu0 0
      %883 = vmatmul.mubr.bf16.gmra.mrb[0].mxu0 %v749
      %v884 = vpop.f32.mrb[0].mxu0
      %v885 = vadd.f32 0.0, %v884
      %v886 = vpop.f32.mrb[0].mxu0
      %v887 = vpop.f32.mrb[0].mxu0
      %v888 = vadd.f32 0.0, %v887
      %v889 = vpop.f32.mrb[0].mxu0
      %890 = vmatprep.mubr.bf16.mxu0 0
      %891 = vmatmul.mubr.bf16.gmra.mrb[0].mxu0 %v752
      %v892 = vpop.f32.mrb[0].mxu0
      %v893 = vadd.f32 0.0, %v892
      %v894 = vpop.f32.mrb[0].mxu0
      %v895 = vpop.f32.mrb[0].mxu0
      %v896 = vadd.f32 0.0, %v895
      %v897 = vpop.f32.mrb[0].mxu0
      %898 = vmatprep.mubr.bf16.mxu0 0
      %899 = vmatmul.mubr.bf16.gmra.mrb[0].mxu0 %v755
      %v900 = vpop.f32.mrb[0].mxu0
      %v901 = vadd.f32 0.0, %v900
      %v902 = vpop.f32.mrb[0].mxu0
      %v903 = vpop.f32.mrb[0].mxu0
      %v904 = vadd.f32 0.0, %v903
      %v905 = vpop.f32.mrb[0].mxu0
      %906 = vmatprep.mubr.bf16.mxu0 0
      %907 = vmatmul.mubr.bf16.gmra.mrb[0].mxu0 %v758
      %v908 = vpop.f32.mrb[0].mxu0
      %v909 = vadd.f32 0.0, %v908
      %v910 = vpop.f32.mrb[0].mxu0
      %v911 = vpop.f32.mrb[0].mxu0
      %v912 = vadd.f32 0.0, %v911
      %v913 = vpop.f32.mrb[0].mxu0
      %914 = vmatprep.mubr.bf16.mxu0 0
      %915 = vmatmul.mubr.bf16.gmra.mrb[0].mxu0 %v761
      %v916 = vpop.f32.mrb[0].mxu0
      %v917 = vadd.f32 0.0, %v916
      %v918 = vpop.f32.mrb[0].mxu0
      %v919 = vpop.f32.mrb[0].mxu0
      %v920 = vadd.f32 0.0, %v919
      %v921 = vpop.f32.mrb[0].mxu0
      %922 = vmatprep.mubr.bf16.mxu0 0
      %923 = vmatmul.mubr.bf16.gmra.mrb[0].mxu0 %v764
      %v924 = vpop.f32.mrb[0].mxu0
      %v925 = vadd.f32 0.0, %v924
      %v926 = vpop.f32.mrb[0].mxu0
      %v927 = vpop.f32.mrb[0].mxu0
      %v928 = vadd.f32 0.0, %v927
      %v929 = vpop.f32.mrb[0].mxu0
      %930 = vdwg.mxu0
      %vm931 = vcmask 64512
      %v932 = vsel %vm931, %v805, 0.0
      %v933 = vsel %vm931, %v808, 0.0
      %v934 = vadd.f32 %v932, %v933
      %v935 = vsel %vm931, %v813, 0.0
      %v936 = vadd.f32 %v934, %v935
      %v937 = vsel %vm931, %v816, 0.0
      %v938 = vadd.f32 %v936, %v937
      %v939 = vsel %vm931, %v821, 0.0
      %v940 = vadd.f32 %v938, %v939
      %v941 = vsel %vm931, %v824, 0.0
      %v942 = vadd.f32 %v940, %v941
      %v943 = vsel %vm931, %v829, 0.0
      %v944 = vadd.f32 %v942, %v943
      %v945 = vsel %vm931, %v832, 0.0
      %v946 = vadd.f32 %v944, %v945
      %v947 = vsel %vm931, %v837, 0.0
      %v948 = vadd.f32 %v946, %v947
      %v949 = vsel %vm931, %v840, 0.0
      %v950 = vadd.f32 %v948, %v949
      %v951 = vsel %vm931, %v845, 0.0
      %v952 = vadd.f32 %v950, %v951
      %v953 = vsel %vm931, %v848, 0.0
      %v954 = vadd.f32 %v952, %v953
      %v955 = vsel %vm931, %v853, 0.0
      %v956 = vadd.f32 %v954, %v955
      %v957 = vsel %vm931, %v856, 0.0
      %v958 = vadd.f32 %v956, %v957
      %v959 = vsel %vm931, %v861, 0.0
      %v960 = vadd.f32 %v958, %v959
      %v961 = vsel %vm931, %v864, 0.0
      %v962 = vadd.f32 %v960, %v961
      %v963 = vsel %vm931, %v869, 0.0
      %v964 = vadd.f32 %v962, %v963
      %v965 = vsel %vm931, %v872, 0.0
      %v966 = vadd.f32 %v964, %v965
      %v967 = vsel %vm931, %v877, 0.0
      %v968 = vadd.f32 %v966, %v967
      %v969 = vsel %vm931, %v880, 0.0
      %v970 = vadd.f32 %v968, %v969
      %v971 = vsel %vm931, %v885, 0.0
      %v972 = vadd.f32 %v970, %v971
      %v973 = vsel %vm931, %v888, 0.0
      %v974 = vadd.f32 %v972, %v973
      %v975 = vsel %vm931, %v893, 0.0
      %v976 = vadd.f32 %v974, %v975
      %v977 = vsel %vm931, %v896, 0.0
      %v978 = vadd.f32 %v976, %v977
      %v979 = vsel %vm931, %v901, 0.0
      %v980 = vadd.f32 %v978, %v979
      %v981 = vsel %vm931, %v904, 0.0
      %v982 = vadd.f32 %v980, %v981
      %v983 = vsel %vm931, %v909, 0.0
      %v984 = vadd.f32 %v982, %v983
      %v985 = vsel %vm931, %v912, 0.0
      %v986 = vadd.f32 %v984, %v985
      %v987 = vsel %vm931, %v917, 0.0
      %v988 = vadd.f32 %v986, %v987
      %v989 = vsel %vm931, %v920, 0.0
      %v990 = vadd.f32 %v988, %v989
      %v991 = vsel %vm931, %v925, 0.0
      %v992 = vadd.f32 %v990, %v991
      %v993 = vsel %vm931, %v928, 0.0
      %v994 = vadd.f32 %v992, %v993
      %v995 = vrot.slane %v994, 4
      %v996 = vadd.f32 %v994, %v995
      %v997 = vrot.slane %v996, 2
      %v998 = vadd.f32 %v996, %v997
      %v999 = vrot.slane %v998, 1
      %v1000 = vadd.f32 %v998, %v999
      %v1001 = vmul.f32 %v1000, 0.00390625
      %v1002 = vsub.f32 %v805, %v1001
      %v1003 = vsub.f32 %v808, %v1001
      %v1004 = vsub.f32 %v813, %v1001
      %v1005 = vsub.f32 %v816, %v1001
      %v1006 = vsub.f32 %v821, %v1001
      %v1007 = vsub.f32 %v824, %v1001
      %v1008 = vsub.f32 %v829, %v1001
      %v1009 = vsub.f32 %v832, %v1001
      %v1010 = vsub.f32 %v837, %v1001
      %v1011 = vsub.f32 %v840, %v1001
      %v1012 = vsub.f32 %v845, %v1001
      %v1013 = vsub.f32 %v848, %v1001
      %v1014 = vsub.f32 %v853, %v1001
      %v1015 = vsub.f32 %v856, %v1001
      %v1016 = vsub.f32 %v861, %v1001
      %v1017 = vsub.f32 %v864, %v1001
      %v1018 = vsub.f32 %v869, %v1001
      %v1019 = vsub.f32 %v872, %v1001
      %v1020 = vsub.f32 %v877, %v1001
      %v1021 = vsub.f32 %v880, %v1001
      %v1022 = vsub.f32 %v885, %v1001
      %v1023 = vsub.f32 %v888, %v1001
      %v1024 = vsub.f32 %v893, %v1001
      %v1025 = vsub.f32 %v896, %v1001
      %v1026 = vsub.f32 %v901, %v1001
      %v1027 = vsub.f32 %v904, %v1001
      %v1028 = vsub.f32 %v909, %v1001
      %v1029 = vsub.f32 %v912, %v1001
      %v1030 = vsub.f32 %v917, %v1001
      %v1031 = vsub.f32 %v920, %v1001
      %v1032 = vsub.f32 %v925, %v1001
      %v1033 = vsub.f32 %v928, %v1001
      %v1034 = vmul.f32 %v1002, %v1002
      %v1035 = vmul.f32 %v1003, %v1003
      %v1036 = vmul.f32 %v1004, %v1004
      %v1037 = vmul.f32 %v1005, %v1005
      %v1038 = vmul.f32 %v1006, %v1006
      %v1039 = vmul.f32 %v1007, %v1007
      %v1040 = vmul.f32 %v1008, %v1008
      %v1041 = vmul.f32 %v1009, %v1009
      %v1042 = vmul.f32 %v1010, %v1010
      %v1043 = vmul.f32 %v1011, %v1011
      %v1044 = vmul.f32 %v1012, %v1012
      %v1045 = vmul.f32 %v1013, %v1013
      %v1046 = vmul.f32 %v1014, %v1014
      %v1047 = vmul.f32 %v1015, %v1015
      %v1048 = vmul.f32 %v1016, %v1016
      %v1049 = vmul.f32 %v1017, %v1017
      %v1050 = vmul.f32 %v1018, %v1018
      %v1051 = vmul.f32 %v1019, %v1019
      %v1052 = vmul.f32 %v1020, %v1020
      %v1053 = vmul.f32 %v1021, %v1021
      %v1054 = vmul.f32 %v1022, %v1022
      %v1055 = vmul.f32 %v1023, %v1023
      %v1056 = vmul.f32 %v1024, %v1024
      %v1057 = vmul.f32 %v1025, %v1025
      %v1058 = vmul.f32 %v1026, %v1026
      %v1059 = vmul.f32 %v1027, %v1027
      %v1060 = vmul.f32 %v1028, %v1028
      %v1061 = vmul.f32 %v1029, %v1029
      %v1062 = vmul.f32 %v1030, %v1030
      %v1063 = vmul.f32 %v1031, %v1031
      %v1064 = vmul.f32 %v1032, %v1032
      %v1065 = vmul.f32 %v1033, %v1033
      %v1066 = vsel %vm931, %v1034, 0.0
      %v1067 = vsel %vm931, %v1035, 0.0
      %v1068 = vadd.f32 %v1066, %v1067
      %v1069 = vsel %vm931, %v1036, 0.0
      %v1070 = vadd.f32 %v1068, %v1069
      %v1071 = vsel %vm931, %v1037, 0.0
      %v1072 = vadd.f32 %v1070, %v1071
      %v1073 = vsel %vm931, %v1038, 0.0
      %v1074 = vadd.f32 %v1072, %v1073
      %v1075 = vsel %vm931, %v1039, 0.0
      %v1076 = vadd.f32 %v1074, %v1075
      %v1077 = vsel %vm931, %v1040, 0.0
      %v1078 = vadd.f32 %v1076, %v1077
      %v1079 = vsel %vm931, %v1041, 0.0
      %v1080 = vadd.f32 %v1078, %v1079
      %v1081 = vsel %vm931, %v1042, 0.0
      %v1082 = vadd.f32 %v1080, %v1081
      %v1083 = vsel %vm931, %v1043, 0.0
      %v1084 = vadd.f32 %v1082, %v1083
      %v1085 = vsel %vm931, %v1044, 0.0
      %v1086 = vadd.f32 %v1084, %v1085
      %v1087 = vsel %vm931, %v1045, 0.0
      %v1088 = vadd.f32 %v1086, %v1087
      %v1089 = vsel %vm931, %v1046, 0.0
      %v1090 = vadd.f32 %v1088, %v1089
      %v1091 = vsel %vm931, %v1047, 0.0
      %v1092 = vadd.f32 %v1090, %v1091
      %v1093 = vsel %vm931, %v1048, 0.0
      %v1094 = vadd.f32 %v1092, %v1093
      %v1095 = vsel %vm931, %v1049, 0.0
      %v1096 = vadd.f32 %v1094, %v1095
      %v1097 = vsel %vm931, %v1050, 0.0
      %v1098 = vadd.f32 %v1096, %v1097
      %v1099 = vsel %vm931, %v1051, 0.0
      %v1100 = vadd.f32 %v1098, %v1099
      %v1101 = vsel %vm931, %v1052, 0.0
      %v1102 = vadd.f32 %v1100, %v1101
      %v1103 = vsel %vm931, %v1053, 0.0
      %v1104 = vadd.f32 %v1102, %v1103
      %v1105 = vsel %vm931, %v1054, 0.0
      %v1106 = vadd.f32 %v1104, %v1105
      %v1107 = vsel %vm931, %v1055, 0.0
      %v1108 = vadd.f32 %v1106, %v1107
      %v1109 = vsel %vm931, %v1056, 0.0
      %v1110 = vadd.f32 %v1108, %v1109
      %v1111 = vsel %vm931, %v1057, 0.0
      %v1112 = vadd.f32 %v1110, %v1111
      %v1113 = vsel %vm931, %v1058, 0.0
      %v1114 = vadd.f32 %v1112, %v1113
      %v1115 = vsel %vm931, %v1059, 0.0
      %v1116 = vadd.f32 %v1114, %v1115
      %v1117 = vsel %vm931, %v1060, 0.0
      %v1118 = vadd.f32 %v1116, %v1117
      %v1119 = vsel %vm931, %v1061, 0.0
      %v1120 = vadd.f32 %v1118, %v1119
      %v1121 = vsel %vm931, %v1062, 0.0
      %v1122 = vadd.f32 %v1120, %v1121
      %v1123 = vsel %vm931, %v1063, 0.0
      %v1124 = vadd.f32 %v1122, %v1123
      %v1125 = vsel %vm931, %v1064, 0.0
      %v1126 = vadd.f32 %v1124, %v1125
      %v1127 = vsel %vm931, %v1065, 0.0
      %v1128 = vadd.f32 %v1126, %v1127
      %v1129 = vrot.slane %v1128, 4
      %v1130 = vadd.f32 %v1128, %v1129
      %v1131 = vrot.slane %v1130, 2
      %v1132 = vadd.f32 %v1130, %v1131
      %v1133 = vrot.slane %v1132, 1
      %v1134 = vadd.f32 %v1132, %v1133
      %v1135 = vmul.f32 %v1134, 0.00390625
      %v1136 = vadd.f32 %v1135, 1e-05
      %v1137 = vrsqrt.pop %v1136
      %v1138 = vmul.f32 %v1002, %v1137
      %v1139 = vmul.f32 %v1003, %v1137
      %v1140 = vmul.f32 %v1004, %v1137
      %v1141 = vmul.f32 %v1005, %v1137
      %v1142 = vmul.f32 %v1006, %v1137
      %v1143 = vmul.f32 %v1007, %v1137
      %v1144 = vmul.f32 %v1008, %v1137
      %v1145 = vmul.f32 %v1009, %v1137
      %v1146 = vmul.f32 %v1010, %v1137
      %v1147 = vmul.f32 %v1011, %v1137
      %v1148 = vmul.f32 %v1012, %v1137
      %v1149 = vmul.f32 %v1013, %v1137
      %v1150 = vmul.f32 %v1014, %v1137
      %v1151 = vmul.f32 %v1015, %v1137
      %v1152 = vmul.f32 %v1016, %v1137
      %v1153 = vmul.f32 %v1017, %v1137
      %v1154 = vmul.f32 %v1018, %v1137
      %v1155 = vmul.f32 %v1019, %v1137
      %v1156 = vmul.f32 %v1020, %v1137
      %v1157 = vmul.f32 %v1021, %v1137
      %v1158 = vmul.f32 %v1022, %v1137
      %v1159 = vmul.f32 %v1023, %v1137
      %v1160 = vmul.f32 %v1024, %v1137
      %v1161 = vmul.f32 %v1025, %v1137
      %v1162 = vmul.f32 %v1026, %v1137
      %v1163 = vmul.f32 %v1027, %v1137
      %v1164 = vmul.f32 %v1028, %v1137
      %v1165 = vmul.f32 %v1029, %v1137
      %v1166 = vmul.f32 %v1030, %v1137
      %v1167 = vmul.f32 %v1031, %v1137
      %v1168 = vmul.f32 %v1032, %v1137
      %v1169 = vmul.f32 %v1033, %v1137
      %v1170 = vld [vmem:[%s9] sm:$0x1]
      %v1172 = vlaneseq
      %v1173 = vshrl.u32 %v1172, 7
      %v1174 = vsub.s32 0, %v1173
      %v1175 = vrot.slane %v1170, %v1174
      %v1177 = vmul.f32 %v1138, %v1175
      %v1178 = vmul.f32 %v1139, %v1175
      %v1179 = vmul.f32 %v1140, %v1175
      %v1180 = vmul.f32 %v1141, %v1175
      %v1181 = vmul.f32 %v1142, %v1175
      %v1182 = vmul.f32 %v1143, %v1175
      %v1183 = vmul.f32 %v1144, %v1175
      %v1184 = vmul.f32 %v1145, %v1175
      %v1185 = vmul.f32 %v1146, %v1175
      %v1186 = vmul.f32 %v1147, %v1175
      %v1187 = vmul.f32 %v1148, %v1175
      %v1188 = vmul.f32 %v1149, %v1175
      %v1189 = vmul.f32 %v1150, %v1175
      %v1190 = vmul.f32 %v1151, %v1175
      %v1191 = vmul.f32 %v1152, %v1175
      %v1192 = vmul.f32 %v1153, %v1175
      %v1193 = vmul.f32 %v1154, %v1175
      %v1194 = vmul.f32 %v1155, %v1175
      %v1195 = vmul.f32 %v1156, %v1175
      %v1196 = vmul.f32 %v1157, %v1175
      %v1197 = vmul.f32 %v1158, %v1175
      %v1198 = vmul.f32 %v1159, %v1175
      %v1199 = vmul.f32 %v1160, %v1175
      %v1200 = vmul.f32 %v1161, %v1175
      %v1201 = vmul.f32 %v1162, %v1175
      %v1202 = vmul.f32 %v1163, %v1175
      %v1203 = vmul.f32 %v1164, %v1175
      %v1204 = vmul.f32 %v1165, %v1175
      %v1205 = vmul.f32 %v1166, %v1175
      %v1206 = vmul.f32 %v1167, %v1175
      %v1207 = vmul.f32 %v1168, %v1175
      %v1208 = vmul.f32 %v1169, %v1175
      %v1209 = vld [vmem:[%s13] sm:$0x1]
      %v1211 = vlaneseq
      %v1212 = vshrl.u32 %v1211, 7
      %v1213 = vsub.s32 0, %v1212
      %v1214 = vrot.slane %v1209, %v1213
      %v1216 = vadd.f32 %v1177, %v1214
      %v1217 = vadd.f32 %v1178, %v1214
      %v1218 = vadd.f32 %v1179, %v1214
      %v1219 = vadd.f32 %v1180, %v1214
      %v1220 = vadd.f32 %v1181, %v1214
      %v1221 = vadd.f32 %v1182, %v1214
      %v1222 = vadd.f32 %v1183, %v1214
      %v1223 = vadd.f32 %v1184, %v1214
      %v1224 = vadd.f32 %v1185, %v1214
      %v1225 = vadd.f32 %v1186, %v1214
      %v1226 = vadd.f32 %v1187, %v1214
      %v1227 = vadd.f32 %v1188, %v1214
      %v1228 = vadd.f32 %v1189, %v1214
      %v1229 = vadd.f32 %v1190, %v1214
      %v1230 = vadd.f32 %v1191, %v1214
      %v1231 = vadd.f32 %v1192, %v1214
      %v1232 = vadd.f32 %v1193, %v1214
      %v1233 = vadd.f32 %v1194, %v1214
      %v1234 = vadd.f32 %v1195, %v1214
      %v1235 = vadd.f32 %v1196, %v1214
      %v1236 = vadd.f32 %v1197, %v1214
      %v1237 = vadd.f32 %v1198, %v1214
      %v1238 = vadd.f32 %v1199, %v1214
      %v1239 = vadd.f32 %v1200, %v1214
      %v1240 = vadd.f32 %v1201, %v1214
      %v1241 = vadd.f32 %v1202, %v1214
      %v1242 = vadd.f32 %v1203, %v1214
      %v1243 = vadd.f32 %v1204, %v1214
      %v1244 = vadd.f32 %v1205, %v1214
      %v1245 = vadd.f32 %v1206, %v1214
      %v1246 = vadd.f32 %v1207, %v1214
      %v1247 = vadd.f32 %v1208, %v1214
      %v1248 = vmax.f32 %v1216, 0.0
      %v1249 = vmax.f32 %v1217, 0.0
      %v1250 = vmax.f32 %v1218, 0.0
      %v1251 = vmax.f32 %v1219, 0.0
      %v1252 = vmax.f32 %v1220, 0.0
      %v1253 = vmax.f32 %v1221, 0.0
      %v1254 = vmax.f32 %v1222, 0.0
      %v1255 = vmax.f32 %v1223, 0.0
      %v1256 = vmax.f32 %v1224, 0.0
      %v1257 = vmax.f32 %v1225, 0.0
      %v1258 = vmax.f32 %v1226, 0.0
      %v1259 = vmax.f32 %v1227, 0.0
      %v1260 = vmax.f32 %v1228, 0.0
      %v1261 = vmax.f32 %v1229, 0.0
      %v1262 = vmax.f32 %v1230, 0.0
      %v1263 = vmax.f32 %v1231, 0.0
      %v1264 = vmax.f32 %v1232, 0.0
      %v1265 = vmax.f32 %v1233, 0.0
      %v1266 = vmax.f32 %v1234, 0.0
      %v1267 = vmax.f32 %v1235, 0.0
      %v1268 = vmax.f32 %v1236, 0.0
      %v1269 = vmax.f32 %v1237, 0.0
      %v1270 = vmax.f32 %v1238, 0.0
      %v1271 = vmax.f32 %v1239, 0.0
      %v1272 = vmax.f32 %v1240, 0.0
      %v1273 = vmax.f32 %v1241, 0.0
      %v1274 = vmax.f32 %v1242, 0.0
      %v1275 = vmax.f32 %v1243, 0.0
      %v1276 = vmax.f32 %v1244, 0.0
      %v1277 = vmax.f32 %v1245, 0.0
      %v1278 = vmax.f32 %v1246, 0.0
      %v1279 = vmax.f32 %v1247, 0.0
      %1280 = vst.msk [vmem:[%s651] sm:$0xff] %vm931, %v1248
      %1281 = vst.msk [vmem:[%s651 + $0x8] sm:$0xff] %vm931, %v1249
      %1282 = vst.msk [vmem:[%s651 + $0x10] sm:$0xff] %vm931, %v1250
      %1283 = vst.msk [vmem:[%s651 + $0x18] sm:$0xff] %vm931, %v1251
      %1284 = vst.msk [vmem:[%s651 + $0x20] sm:$0xff] %vm931, %v1252
      %1285 = vst.msk [vmem:[%s651 + $0x28] sm:$0xff] %vm931, %v1253
      %1286 = vst.msk [vmem:[%s651 + $0x30] sm:$0xff] %vm931, %v1254
      %1287 = vst.msk [vmem:[%s651 + $0x38] sm:$0xff] %vm931, %v1255
      %1288 = vst.msk [vmem:[%s651 + $0x40] sm:$0xff] %vm931, %v1256
      %1289 = vst.msk [vmem:[%s651 + $0x48] sm:$0xff] %vm931, %v1257
      %1290 = vst.msk [vmem:[%s651 + $0x50] sm:$0xff] %vm931, %v1258
      %1291 = vst.msk [vmem:[%s651 + $0x58] sm:$0xff] %vm931, %v1259
      %1292 = vst.msk [vmem:[%s651 + $0x60] sm:$0xff] %vm931, %v1260
      %1293 = vst.msk [vmem:[%s651 + $0x68] sm:$0xff] %vm931, %v1261
      %1294 = vst.msk [vmem:[%s651 + $0x70] sm:$0xff] %vm931, %v1262
      %1295 = vst.msk [vmem:[%s651 + $0x78] sm:$0xff] %vm931, %v1263
      %1296 = vst.msk [vmem:[%s651 + $0x80] sm:$0xff] %vm931, %v1264
      %1297 = vst.msk [vmem:[%s651 + $0x88] sm:$0xff] %vm931, %v1265
      %1298 = vst.msk [vmem:[%s651 + $0x90] sm:$0xff] %vm931, %v1266
      %1299 = vst.msk [vmem:[%s651 + $0x98] sm:$0xff] %vm931, %v1267
      %1300 = vst.msk [vmem:[%s651 + $0xa0] sm:$0xff] %vm931, %v1268
      %1301 = vst.msk [vmem:[%s651 + $0xa8] sm:$0xff] %vm931, %v1269
      %1302 = vst.msk [vmem:[%s651 + $0xb0] sm:$0xff] %vm931, %v1270
      %1303 = vst.msk [vmem:[%s651 + $0xb8] sm:$0xff] %vm931, %v1271
      %1304 = vst.msk [vmem:[%s651 + $0xc0] sm:$0xff] %vm931, %v1272
      %1305 = vst.msk [vmem:[%s651 + $0xc8] sm:$0xff] %vm931, %v1273
      %1306 = vst.msk [vmem:[%s651 + $0xd0] sm:$0xff] %vm931, %v1274
      %1307 = vst.msk [vmem:[%s651 + $0xd8] sm:$0xff] %vm931, %v1275
      %1308 = vst.msk [vmem:[%s651 + $0xe0] sm:$0xff] %vm931, %v1276
      %1309 = vst.msk [vmem:[%s651 + $0xe8] sm:$0xff] %vm931, %v1277
      %1310 = vst.msk [vmem:[%s651 + $0xf0] sm:$0xff] %vm931, %v1278
      %1311 = vst.msk [vmem:[%s651 + $0xf8] sm:$0xff] %vm931, %v1279
      %v1312 = vld [vmem:[%s2] sm:$0x3]
      %v1314 = vsel %vm766, %v1312, 0
      %1316 = vmatprep.subr.bf16.mxu0 0
      %1317 = vmatpush1.bf16.msra.mxu0 %v1314
      %1318 = vmatprep.subr.bf16.mxu0 0
      %1319 = vmatpush1.bf16.msra.mxu0 0
      %1320 = vmatprep.subr.bf16.mxu0 0
      %1321 = vmatpush1.bf16.msra.mxu0 0
      %1322 = vmatprep.subr.bf16.mxu0 0
      %1323 = vmatpush1.bf16.msra.mxu0 0
      %1324 = vmatprep.subr.bf16.mxu0 0
      %1325 = vmatpush1.bf16.msra.mxu0 0
      %1326 = vmatprep.subr.bf16.mxu0 0
      %1327 = vmatpush1.bf16.msra.mxu0 0
      %1328 = vmatprep.subr.bf16.mxu0 0
      %1329 = vmatpush1.bf16.msra.mxu0 0
      %1330 = vmatprep.subr.bf16.mxu0 0
      %1331 = vmatpush1.bf16.msra.mxu0 0
      %1332 = vmatprep.subr.bf16.mxu0 0
      %1333 = vmatpush1.bf16.msra.mxu0 0
      %1334 = vmatprep.subr.bf16.mxu0 0
      %1335 = vmatpush1.bf16.msra.mxu0 0
      %1336 = vmatprep.subr.bf16.mxu0 0
      %1337 = vmatpush1.bf16.msra.mxu0 0
      %1338 = vmatprep.subr.bf16.mxu0 0
      %1339 = vmatpush1.bf16.msra.mxu0 0
      %1340 = vmatprep.subr.bf16.mxu0 0
      %1341 = vmatpush1.bf16.msra.mxu0 0
      %1342 = vmatprep.subr.bf16.mxu0 0
      %1343 = vmatpush1.bf16.msra.mxu0 0
      %1344 = vmatprep.subr.bf16.mxu0 0
      %1345 = vmatpush1.bf16.msra.mxu0 0
      %1346 = vmatprep.subr.bf16.mxu0 0
      %1347 = vmatpush1.bf16.msra.mxu0 0
      %1348 = vmatprep.mubr.bf16.mxu0 0
      %1349 = vmatmul.mubr.bf16.gmra.mrb[0].mxu0 %v719
      %v1350 = vpop.f32.mrb[0].mxu0
      %v1351 = vadd.f32 0.0, %v1350
      %v1352 = vpop.f32.mrb[0].mxu0
      %v1353 = vpop.f32.mrb[0].mxu0
      %v1354 = vadd.f32 0.0, %v1353
      %v1355 = vpop.f32.mrb[0].mxu0
      %1356 = vmatprep.mubr.bf16.mxu0 0
      %1357 = vmatmul.mubr.bf16.gmra.mrb[0].mxu0 %v722
      %v1358 = vpop.f32.mrb[0].mxu0
      %v1359 = vadd.f32 0.0, %v1358
      %v1360 = vpop.f32.mrb[0].mxu0
      %v1361 = vpop.f32.mrb[0].mxu0
      %v1362 = vadd.f32 0.0, %v1361
      %v1363 = vpop.f32.mrb[0].mxu0
      %1364 = vmatprep.mubr.bf16.mxu0 0
      %1365 = vmatmul.mubr.bf16.gmra.mrb[0].mxu0 %v725
      %v1366 = vpop.f32.mrb[0].mxu0
      %v1367 = vadd.f32 0.0, %v1366
      %v1368 = vpop.f32.mrb[0].mxu0
      %v1369 = vpop.f32.mrb[0].mxu0
      %v1370 = vadd.f32 0.0, %v1369
      %v1371 = vpop.f32.mrb[0].mxu0
      %1372 = vmatprep.mubr.bf16.mxu0 0
      %1373 = vmatmul.mubr.bf16.gmra.mrb[0].mxu0 %v728
      %v1374 = vpop.f32.mrb[0].mxu0
      %v1375 = vadd.f32 0.0, %v1374
      %v1376 = vpop.f32.mrb[0].mxu0
      %v1377 = vpop.f32.mrb[0].mxu0
      %v1378 = vadd.f32 0.0, %v1377
      %v1379 = vpop.f32.mrb[0].mxu0
      %1380 = vmatprep.mubr.bf16.mxu0 0
      %1381 = vmatmul.mubr.bf16.gmra.mrb[0].mxu0 %v731
      %v1382 = vpop.f32.mrb[0].mxu0
      %v1383 = vadd.f32 0.0, %v1382
      %v1384 = vpop.f32.mrb[0].mxu0
      %v1385 = vpop.f32.mrb[0].mxu0
      %v1386 = vadd.f32 0.0, %v1385
      %v1387 = vpop.f32.mrb[0].mxu0
      %1388 = vmatprep.mubr.bf16.mxu0 0
      %1389 = vmatmul.mubr.bf16.gmra.mrb[0].mxu0 %v734
      %v1390 = vpop.f32.mrb[0].mxu0
      %v1391 = vadd.f32 0.0, %v1390
      %v1392 = vpop.f32.mrb[0].mxu0
      %v1393 = vpop.f32.mrb[0].mxu0
      %v1394 = vadd.f32 0.0, %v1393
      %v1395 = vpop.f32.mrb[0].mxu0
      %1396 = vmatprep.mubr.bf16.mxu0 0
      %1397 = vmatmul.mubr.bf16.gmra.mrb[0].mxu0 %v737
      %v1398 = vpop.f32.mrb[0].mxu0
      %v1399 = vadd.f32 0.0, %v1398
      %v1400 = vpop.f32.mrb[0].mxu0
      %v1401 = vpop.f32.mrb[0].mxu0
      %v1402 = vadd.f32 0.0, %v1401
      %v1403 = vpop.f32.mrb[0].mxu0
      %1404 = vmatprep.mubr.bf16.mxu0 0
      %1405 = vmatmul.mubr.bf16.gmra.mrb[0].mxu0 %v740
      %v1406 = vpop.f32.mrb[0].mxu0
      %v1407 = vadd.f32 0.0, %v1406
      %v1408 = vpop.f32.mrb[0].mxu0
      %v1409 = vpop.f32.mrb[0].mxu0
      %v1410 = vadd.f32 0.0, %v1409
      %v1411 = vpop.f32.mrb[0].mxu0
      %1412 = vmatprep.mubr.bf16.mxu0 0
      %1413 = vmatmul.mubr.bf16.gmra.mrb[0].mxu0 %v743
      %v1414 = vpop.f32.mrb[0].mxu0
      %v1415 = vadd.f32 0.0, %v1414
      %v1416 = vpop.f32.mrb[0].mxu0
      %v1417 = vpop.f32.mrb[0].mxu0
      %v1418 = vadd.f32 0.0, %v1417
      %v1419 = vpop.f32.mrb[0].mxu0
      %1420 = vmatprep.mubr.bf16.mxu0 0
      %1421 = vmatmul.mubr.bf16.gmra.mrb[0].mxu0 %v746
      %v1422 = vpop.f32.mrb[0].mxu0
      %v1423 = vadd.f32 0.0, %v1422
      %v1424 = vpop.f32.mrb[0].mxu0
      %v1425 = vpop.f32.mrb[0].mxu0
      %v1426 = vadd.f32 0.0, %v1425
      %v1427 = vpop.f32.mrb[0].mxu0
      %1428 = vmatprep.mubr.bf16.mxu0 0
      %1429 = vmatmul.mubr.bf16.gmra.mrb[0].mxu0 %v749
      %v1430 = vpop.f32.mrb[0].mxu0
      %v1431 = vadd.f32 0.0, %v1430
      %v1432 = vpop.f32.mrb[0].mxu0
      %v1433 = vpop.f32.mrb[0].mxu0
      %v1434 = vadd.f32 0.0, %v1433
      %v1435 = vpop.f32.mrb[0].mxu0
      %1436 = vmatprep.mubr.bf16.mxu0 0
      %1437 = vmatmul.mubr.bf16.gmra.mrb[0].mxu0 %v752
      %v1438 = vpop.f32.mrb[0].mxu0
      %v1439 = vadd.f32 0.0, %v1438
      %v1440 = vpop.f32.mrb[0].mxu0
      %v1441 = vpop.f32.mrb[0].mxu0
      %v1442 = vadd.f32 0.0, %v1441
      %v1443 = vpop.f32.mrb[0].mxu0
      %1444 = vmatprep.mubr.bf16.mxu0 0
      %1445 = vmatmul.mubr.bf16.gmra.mrb[0].mxu0 %v755
      %v1446 = vpop.f32.mrb[0].mxu0
      %v1447 = vadd.f32 0.0, %v1446
      %v1448 = vpop.f32.mrb[0].mxu0
      %v1449 = vpop.f32.mrb[0].mxu0
      %v1450 = vadd.f32 0.0, %v1449
      %v1451 = vpop.f32.mrb[0].mxu0
      %1452 = vmatprep.mubr.bf16.mxu0 0
      %1453 = vmatmul.mubr.bf16.gmra.mrb[0].mxu0 %v758
      %v1454 = vpop.f32.mrb[0].mxu0
      %v1455 = vadd.f32 0.0, %v1454
      %v1456 = vpop.f32.mrb[0].mxu0
      %v1457 = vpop.f32.mrb[0].mxu0
      %v1458 = vadd.f32 0.0, %v1457
      %v1459 = vpop.f32.mrb[0].mxu0
      %1460 = vmatprep.mubr.bf16.mxu0 0
      %1461 = vmatmul.mubr.bf16.gmra.mrb[0].mxu0 %v761
      %v1462 = vpop.f32.mrb[0].mxu0
      %v1463 = vadd.f32 0.0, %v1462
      %v1464 = vpop.f32.mrb[0].mxu0
      %v1465 = vpop.f32.mrb[0].mxu0
      %v1466 = vadd.f32 0.0, %v1465
      %v1467 = vpop.f32.mrb[0].mxu0
      %1468 = vmatprep.mubr.bf16.mxu0 0
      %1469 = vmatmul.mubr.bf16.gmra.mrb[0].mxu0 %v764
      %v1470 = vpop.f32.mrb[0].mxu0
      %v1471 = vadd.f32 0.0, %v1470
      %v1472 = vpop.f32.mrb[0].mxu0
      %v1473 = vpop.f32.mrb[0].mxu0
      %v1474 = vadd.f32 0.0, %v1473
      %v1475 = vpop.f32.mrb[0].mxu0
      %1476 = vdwg.mxu0
      %v1477 = vsel %vm717, %v1351, 0.0
      %v1478 = vsel %vm717, %v1354, 0.0
      %v1479 = vadd.f32 %v1477, %v1478
      %v1480 = vsel %vm717, %v1359, 0.0
      %v1481 = vadd.f32 %v1479, %v1480
      %v1482 = vsel %vm717, %v1362, 0.0
      %v1483 = vadd.f32 %v1481, %v1482
      %v1484 = vsel %vm717, %v1367, 0.0
      %v1485 = vadd.f32 %v1483, %v1484
      %v1486 = vsel %vm717, %v1370, 0.0
      %v1487 = vadd.f32 %v1485, %v1486
      %v1488 = vsel %vm717, %v1375, 0.0
      %v1489 = vadd.f32 %v1487, %v1488
      %v1490 = vsel %vm717, %v1378, 0.0
      %v1491 = vadd.f32 %v1489, %v1490
      %v1492 = vsel %vm717, %v1383, 0.0
      %v1493 = vadd.f32 %v1491, %v1492
      %v1494 = vsel %vm717, %v1386, 0.0
      %v1495 = vadd.f32 %v1493, %v1494
      %v1496 = vsel %vm717, %v1391, 0.0
      %v1497 = vadd.f32 %v1495, %v1496
      %v1498 = vsel %vm717, %v1394, 0.0
      %v1499 = vadd.f32 %v1497, %v1498
      %v1500 = vsel %vm717, %v1399, 0.0
      %v1501 = vadd.f32 %v1499, %v1500
      %v1502 = vsel %vm717, %v1402, 0.0
      %v1503 = vadd.f32 %v1501, %v1502
      %v1504 = vsel %vm717, %v1407, 0.0
      %v1505 = vadd.f32 %v1503, %v1504
      %v1506 = vsel %vm717, %v1410, 0.0
      %v1507 = vadd.f32 %v1505, %v1506
      %v1508 = vsel %vm717, %v1415, 0.0
      %v1509 = vadd.f32 %v1507, %v1508
      %v1510 = vsel %vm717, %v1418, 0.0
      %v1511 = vadd.f32 %v1509, %v1510
      %v1512 = vsel %vm717, %v1423, 0.0
      %v1513 = vadd.f32 %v1511, %v1512
      %v1514 = vsel %vm717, %v1426, 0.0
      %v1515 = vadd.f32 %v1513, %v1514
      %v1516 = vsel %vm717, %v1431, 0.0
      %v1517 = vadd.f32 %v1515, %v1516
      %v1518 = vsel %vm717, %v1434, 0.0
      %v1519 = vadd.f32 %v1517, %v1518
      %v1520 = vsel %vm717, %v1439, 0.0
      %v1521 = vadd.f32 %v1519, %v1520
      %v1522 = vsel %vm717, %v1442, 0.0
      %v1523 = vadd.f32 %v1521, %v1522
      %v1524 = vsel %vm717, %v1447, 0.0
      %v1525 = vadd.f32 %v1523, %v1524
      %v1526 = vsel %vm717, %v1450, 0.0
      %v1527 = vadd.f32 %v1525, %v1526
      %v1528 = vsel %vm717, %v1455, 0.0
      %v1529 = vadd.f32 %v1527, %v1528
      %v1530 = vsel %vm717, %v1458, 0.0
      %v1531 = vadd.f32 %v1529, %v1530
      %v1532 = vsel %vm717, %v1463, 0.0
      %v1533 = vadd.f32 %v1531, %v1532
      %v1534 = vsel %vm717, %v1466, 0.0
      %v1535 = vadd.f32 %v1533, %v1534
      %v1536 = vsel %vm717, %v1471, 0.0
      %v1537 = vadd.f32 %v1535, %v1536
      %v1538 = vsel %vm717, %v1474, 0.0
      %v1539 = vadd.f32 %v1537, %v1538
      %v1540 = vrot.slane %v1539, 4
      %v1541 = vadd.f32 %v1539, %v1540
      %v1542 = vrot.slane %v1541, 2
      %v1543 = vadd.f32 %v1541, %v1542
      %v1544 = vrot.slane %v1543, 1
      %v1545 = vadd.f32 %v1543, %v1544
      %v1546 = vmul.f32 %v1545, 0.00390625
      %v1547 = vsub.f32 %v1351, %v1546
      %v1548 = vsub.f32 %v1354, %v1546
      %v1549 = vsub.f32 %v1359, %v1546
      %v1550 = vsub.f32 %v1362, %v1546
      %v1551 = vsub.f32 %v1367, %v1546
      %v1552 = vsub.f32 %v1370, %v1546
      %v1553 = vsub.f32 %v1375, %v1546
      %v1554 = vsub.f32 %v1378, %v1546
      %v1555 = vsub.f32 %v1383, %v1546
      %v1556 = vsub.f32 %v1386, %v1546
      %v1557 = vsub.f32 %v1391, %v1546
      %v1558 = vsub.f32 %v1394, %v1546
      %v1559 = vsub.f32 %v1399, %v1546
      %v1560 = vsub.f32 %v1402, %v1546
      %v1561 = vsub.f32 %v1407, %v1546
      %v1562 = vsub.f32 %v1410, %v1546
      %v1563 = vsub.f32 %v1415, %v1546
      %v1564 = vsub.f32 %v1418, %v1546
      %v1565 = vsub.f32 %v1423, %v1546
      %v1566 = vsub.f32 %v1426, %v1546
      %v1567 = vsub.f32 %v1431, %v1546
      %v1568 = vsub.f32 %v1434, %v1546
      %v1569 = vsub.f32 %v1439, %v1546
      %v1570 = vsub.f32 %v1442, %v1546
      %v1571 = vsub.f32 %v1447, %v1546
      %v1572 = vsub.f32 %v1450, %v1546
      %v1573 = vsub.f32 %v1455, %v1546
      %v1574 = vsub.f32 %v1458, %v1546
      %v1575 = vsub.f32 %v1463, %v1546
      %v1576 = vsub.f32 %v1466, %v1546
      %v1577 = vsub.f32 %v1471, %v1546
      %v1578 = vsub.f32 %v1474, %v1546
      %v1579 = vmul.f32 %v1547, %v1547
      %v1580 = vmul.f32 %v1548, %v1548
      %v1581 = vmul.f32 %v1549, %v1549
      %v1582 = vmul.f32 %v1550, %v1550
      %v1583 = vmul.f32 %v1551, %v1551
      %v1584 = vmul.f32 %v1552, %v1552
      %v1585 = vmul.f32 %v1553, %v1553
      %v1586 = vmul.f32 %v1554, %v1554
      %v1587 = vmul.f32 %v1555, %v1555
      %v1588 = vmul.f32 %v1556, %v1556
      %v1589 = vmul.f32 %v1557, %v1557
      %v1590 = vmul.f32 %v1558, %v1558
      %v1591 = vmul.f32 %v1559, %v1559
      %v1592 = vmul.f32 %v1560, %v1560
      %v1593 = vmul.f32 %v1561, %v1561
      %v1594 = vmul.f32 %v1562, %v1562
      %v1595 = vmul.f32 %v1563, %v1563
      %v1596 = vmul.f32 %v1564, %v1564
      %v1597 = vmul.f32 %v1565, %v1565
      %v1598 = vmul.f32 %v1566, %v1566
      %v1599 = vmul.f32 %v1567, %v1567
      %v1600 = vmul.f32 %v1568, %v1568
      %v1601 = vmul.f32 %v1569, %v1569
      %v1602 = vmul.f32 %v1570, %v1570
      %v1603 = vmul.f32 %v1571, %v1571
      %v1604 = vmul.f32 %v1572, %v1572
      %v1605 = vmul.f32 %v1573, %v1573
      %v1606 = vmul.f32 %v1574, %v1574
      %v1607 = vmul.f32 %v1575, %v1575
      %v1608 = vmul.f32 %v1576, %v1576
      %v1609 = vmul.f32 %v1577, %v1577
      %v1610 = vmul.f32 %v1578, %v1578
      %v1611 = vsel %vm717, %v1579, 0.0
      %v1612 = vsel %vm717, %v1580, 0.0
      %v1613 = vadd.f32 %v1611, %v1612
      %v1614 = vsel %vm717, %v1581, 0.0
      %v1615 = vadd.f32 %v1613, %v1614
      %v1616 = vsel %vm717, %v1582, 0.0
      %v1617 = vadd.f32 %v1615, %v1616
      %v1618 = vsel %vm717, %v1583, 0.0
      %v1619 = vadd.f32 %v1617, %v1618
      %v1620 = vsel %vm717, %v1584, 0.0
      %v1621 = vadd.f32 %v1619, %v1620
      %v1622 = vsel %vm717, %v1585, 0.0
      %v1623 = vadd.f32 %v1621, %v1622
      %v1624 = vsel %vm717, %v1586, 0.0
      %v1625 = vadd.f32 %v1623, %v1624
      %v1626 = vsel %vm717, %v1587, 0.0
      %v1627 = vadd.f32 %v1625, %v1626
      %v1628 = vsel %vm717, %v1588, 0.0
      %v1629 = vadd.f32 %v1627, %v1628
      %v1630 = vsel %vm717, %v1589, 0.0
      %v1631 = vadd.f32 %v1629, %v1630
      %v1632 = vsel %vm717, %v1590, 0.0
      %v1633 = vadd.f32 %v1631, %v1632
      %v1634 = vsel %vm717, %v1591, 0.0
      %v1635 = vadd.f32 %v1633, %v1634
      %v1636 = vsel %vm717, %v1592, 0.0
      %v1637 = vadd.f32 %v1635, %v1636
      %v1638 = vsel %vm717, %v1593, 0.0
      %v1639 = vadd.f32 %v1637, %v1638
      %v1640 = vsel %vm717, %v1594, 0.0
      %v1641 = vadd.f32 %v1639, %v1640
      %v1642 = vsel %vm717, %v1595, 0.0
      %v1643 = vadd.f32 %v1641, %v1642
      %v1644 = vsel %vm717, %v1596, 0.0
      %v1645 = vadd.f32 %v1643, %v1644
      %v1646 = vsel %vm717, %v1597, 0.0
      %v1647 = vadd.f32 %v1645, %v1646
      %v1648 = vsel %vm717, %v1598, 0.0
      %v1649 = vadd.f32 %v1647, %v1648
      %v1650 = vsel %vm717, %v1599, 0.0
      %v1651 = vadd.f32 %v1649, %v1650
      %v1652 = vsel %vm717, %v1600, 0.0
      %v1653 = vadd.f32 %v1651, %v1652
      %v1654 = vsel %vm717, %v1601, 0.0
      %v1655 = vadd.f32 %v1653, %v1654
      %v1656 = vsel %vm717, %v1602, 0.0
      %v1657 = vadd.f32 %v1655, %v1656
      %v1658 = vsel %vm717, %v1603, 0.0
      %v1659 = vadd.f32 %v1657, %v1658
      %v1660 = vsel %vm717, %v1604, 0.0
      %v1661 = vadd.f32 %v1659, %v1660
      %v1662 = vsel %vm717, %v1605, 0.0
      %v1663 = vadd.f32 %v1661, %v1662
      %v1664 = vsel %vm717, %v1606, 0.0
      %v1665 = vadd.f32 %v1663, %v1664
      %v1666 = vsel %vm717, %v1607, 0.0
      %v1667 = vadd.f32 %v1665, %v1666
      %v1668 = vsel %vm717, %v1608, 0.0
      %v1669 = vadd.f32 %v1667, %v1668
      %v1670 = vsel %vm717, %v1609, 0.0
      %v1671 = vadd.f32 %v1669, %v1670
      %v1672 = vsel %vm717, %v1610, 0.0
      %v1673 = vadd.f32 %v1671, %v1672
      %v1674 = vrot.slane %v1673, 4
      %v1675 = vadd.f32 %v1673, %v1674
      %v1676 = vrot.slane %v1675, 2
      %v1677 = vadd.f32 %v1675, %v1676
      %v1678 = vrot.slane %v1677, 1
      %v1679 = vadd.f32 %v1677, %v1678
      %v1680 = vmul.f32 %v1679, 0.00390625
      %v1681 = vadd.f32 %v1680, 1e-05
      %v1682 = vrsqrt.pop %v1681
      %v1683 = vmul.f32 %v1547, %v1682
      %v1684 = vmul.f32 %v1548, %v1682
      %v1685 = vmul.f32 %v1549, %v1682
      %v1686 = vmul.f32 %v1550, %v1682
      %v1687 = vmul.f32 %v1551, %v1682
      %v1688 = vmul.f32 %v1552, %v1682
      %v1689 = vmul.f32 %v1553, %v1682
      %v1690 = vmul.f32 %v1554, %v1682
      %v1691 = vmul.f32 %v1555, %v1682
      %v1692 = vmul.f32 %v1556, %v1682
      %v1693 = vmul.f32 %v1557, %v1682
      %v1694 = vmul.f32 %v1558, %v1682
      %v1695 = vmul.f32 %v1559, %v1682
      %v1696 = vmul.f32 %v1560, %v1682
      %v1697 = vmul.f32 %v1561, %v1682
      %v1698 = vmul.f32 %v1562, %v1682
      %v1699 = vmul.f32 %v1563, %v1682
      %v1700 = vmul.f32 %v1564, %v1682
      %v1701 = vmul.f32 %v1565, %v1682
      %v1702 = vmul.f32 %v1566, %v1682
      %v1703 = vmul.f32 %v1567, %v1682
      %v1704 = vmul.f32 %v1568, %v1682
      %v1705 = vmul.f32 %v1569, %v1682
      %v1706 = vmul.f32 %v1570, %v1682
      %v1707 = vmul.f32 %v1571, %v1682
      %v1708 = vmul.f32 %v1572, %v1682
      %v1709 = vmul.f32 %v1573, %v1682
      %v1710 = vmul.f32 %v1574, %v1682
      %v1711 = vmul.f32 %v1575, %v1682
      %v1712 = vmul.f32 %v1576, %v1682
      %v1713 = vmul.f32 %v1577, %v1682
      %v1714 = vmul.f32 %v1578, %v1682
      %v1715 = vld [vmem:[%s10] sm:$0x1]
      %v1717 = vlaneseq
      %v1718 = vshrl.u32 %v1717, 7
      %v1719 = vsub.s32 0, %v1718
      %v1720 = vrot.slane %v1715, %v1719
      %v1722 = vmul.f32 %v1683, %v1720
      %v1723 = vmul.f32 %v1684, %v1720
      %v1724 = vmul.f32 %v1685, %v1720
      %v1725 = vmul.f32 %v1686, %v1720
      %v1726 = vmul.f32 %v1687, %v1720
      %v1727 = vmul.f32 %v1688, %v1720
      %v1728 = vmul.f32 %v1689, %v1720
      %v1729 = vmul.f32 %v1690, %v1720
      %v1730 = vmul.f32 %v1691, %v1720
      %v1731 = vmul.f32 %v1692, %v1720
      %v1732 = vmul.f32 %v1693, %v1720
      %v1733 = vmul.f32 %v1694, %v1720
      %v1734 = vmul.f32 %v1695, %v1720
      %v1735 = vmul.f32 %v1696, %v1720
      %v1736 = vmul.f32 %v1697, %v1720
      %v1737 = vmul.f32 %v1698, %v1720
      %v1738 = vmul.f32 %v1699, %v1720
      %v1739 = vmul.f32 %v1700, %v1720
      %v1740 = vmul.f32 %v1701, %v1720
      %v1741 = vmul.f32 %v1702, %v1720
      %v1742 = vmul.f32 %v1703, %v1720
      %v1743 = vmul.f32 %v1704, %v1720
      %v1744 = vmul.f32 %v1705, %v1720
      %v1745 = vmul.f32 %v1706, %v1720
      %v1746 = vmul.f32 %v1707, %v1720
      %v1747 = vmul.f32 %v1708, %v1720
      %v1748 = vmul.f32 %v1709, %v1720
      %v1749 = vmul.f32 %v1710, %v1720
      %v1750 = vmul.f32 %v1711, %v1720
      %v1751 = vmul.f32 %v1712, %v1720
      %v1752 = vmul.f32 %v1713, %v1720
      %v1753 = vmul.f32 %v1714, %v1720
      %v1754 = vld [vmem:[%s14] sm:$0x1]
      %v1756 = vlaneseq
      %v1757 = vshrl.u32 %v1756, 7
      %v1758 = vsub.s32 0, %v1757
      %v1759 = vrot.slane %v1754, %v1758
      %v1761 = vadd.f32 %v1722, %v1759
      %v1762 = vadd.f32 %v1723, %v1759
      %v1763 = vadd.f32 %v1724, %v1759
      %v1764 = vadd.f32 %v1725, %v1759
      %v1765 = vadd.f32 %v1726, %v1759
      %v1766 = vadd.f32 %v1727, %v1759
      %v1767 = vadd.f32 %v1728, %v1759
      %v1768 = vadd.f32 %v1729, %v1759
      %v1769 = vadd.f32 %v1730, %v1759
      %v1770 = vadd.f32 %v1731, %v1759
      %v1771 = vadd.f32 %v1732, %v1759
      %v1772 = vadd.f32 %v1733, %v1759
      %v1773 = vadd.f32 %v1734, %v1759
      %v1774 = vadd.f32 %v1735, %v1759
      %v1775 = vadd.f32 %v1736, %v1759
      %v1776 = vadd.f32 %v1737, %v1759
      %v1777 = vadd.f32 %v1738, %v1759
      %v1778 = vadd.f32 %v1739, %v1759
      %v1779 = vadd.f32 %v1740, %v1759
      %v1780 = vadd.f32 %v1741, %v1759
      %v1781 = vadd.f32 %v1742, %v1759
      %v1782 = vadd.f32 %v1743, %v1759
      %v1783 = vadd.f32 %v1744, %v1759
      %v1784 = vadd.f32 %v1745, %v1759
      %v1785 = vadd.f32 %v1746, %v1759
      %v1786 = vadd.f32 %v1747, %v1759
      %v1787 = vadd.f32 %v1748, %v1759
      %v1788 = vadd.f32 %v1749, %v1759
      %v1789 = vadd.f32 %v1750, %v1759
      %v1790 = vadd.f32 %v1751, %v1759
      %v1791 = vadd.f32 %v1752, %v1759
      %v1792 = vadd.f32 %v1753, %v1759
      %v1793 = vmax.f32 %v1761, 0.0
      %v1794 = vmax.f32 %v1762, 0.0
      %v1795 = vmax.f32 %v1763, 0.0
      %v1796 = vmax.f32 %v1764, 0.0
      %v1797 = vmax.f32 %v1765, 0.0
      %v1798 = vmax.f32 %v1766, 0.0
      %v1799 = vmax.f32 %v1767, 0.0
      %v1800 = vmax.f32 %v1768, 0.0
      %v1801 = vmax.f32 %v1769, 0.0
      %v1802 = vmax.f32 %v1770, 0.0
      %v1803 = vmax.f32 %v1771, 0.0
      %v1804 = vmax.f32 %v1772, 0.0
      %v1805 = vmax.f32 %v1773, 0.0
      %v1806 = vmax.f32 %v1774, 0.0
      %v1807 = vmax.f32 %v1775, 0.0
      %v1808 = vmax.f32 %v1776, 0.0
      %v1809 = vmax.f32 %v1777, 0.0
      %v1810 = vmax.f32 %v1778, 0.0
      %v1811 = vmax.f32 %v1779, 0.0
      %v1812 = vmax.f32 %v1780, 0.0
      %v1813 = vmax.f32 %v1781, 0.0
      %v1814 = vmax.f32 %v1782, 0.0
      %v1815 = vmax.f32 %v1783, 0.0
      %v1816 = vmax.f32 %v1784, 0.0
      %v1817 = vmax.f32 %v1785, 0.0
      %v1818 = vmax.f32 %v1786, 0.0
      %v1819 = vmax.f32 %v1787, 0.0
      %v1820 = vmax.f32 %v1788, 0.0
      %v1821 = vmax.f32 %v1789, 0.0
      %v1822 = vmax.f32 %v1790, 0.0
      %v1823 = vmax.f32 %v1791, 0.0
      %v1824 = vmax.f32 %v1792, 0.0
      %v1825 = vpack.c.bf16 %v1794, %v1793
      %v1826 = vpack.c.bf16 %v1796, %v1795
      %v1827 = vpack.c.bf16 %v1798, %v1797
      %v1828 = vpack.c.bf16 %v1800, %v1799
      %v1829 = vpack.c.bf16 %v1802, %v1801
      %v1830 = vpack.c.bf16 %v1804, %v1803
      %v1831 = vpack.c.bf16 %v1806, %v1805
      %v1832 = vpack.c.bf16 %v1808, %v1807
      %v1833 = vpack.c.bf16 %v1810, %v1809
      %v1834 = vpack.c.bf16 %v1812, %v1811
      %v1835 = vpack.c.bf16 %v1814, %v1813
      %v1836 = vpack.c.bf16 %v1816, %v1815
      %v1837 = vpack.c.bf16 %v1818, %v1817
      %v1838 = vpack.c.bf16 %v1820, %v1819
      %v1839 = vpack.c.bf16 %v1822, %v1821
      %v1840 = vpack.c.bf16 %v1824, %v1823
      %v1857 = vunpack.c.l.b16 %v1825
      %v1858 = vunpack.c.h.b16 %v1825
      %v1859 = vunpack.c.l.b16 %v1826
      %v1860 = vunpack.c.h.b16 %v1826
      %v1861 = vunpack.c.l.b16 %v1827
      %v1862 = vunpack.c.h.b16 %v1827
      %v1863 = vunpack.c.l.b16 %v1828
      %v1864 = vunpack.c.h.b16 %v1828
      %v1865 = vunpack.c.l.b16 %v1829
      %v1866 = vunpack.c.h.b16 %v1829
      %v1867 = vunpack.c.l.b16 %v1830
      %v1868 = vunpack.c.h.b16 %v1830
      %v1869 = vunpack.c.l.b16 %v1831
      %v1870 = vunpack.c.h.b16 %v1831
      %v1871 = vunpack.c.l.b16 %v1832
      %v1872 = vunpack.c.h.b16 %v1832
      %v1873 = vunpack.c.l.b16 %v1833
      %v1874 = vunpack.c.h.b16 %v1833
      %v1875 = vunpack.c.l.b16 %v1834
      %v1876 = vunpack.c.h.b16 %v1834
      %v1877 = vunpack.c.l.b16 %v1835
      %v1878 = vunpack.c.h.b16 %v1835
      %v1879 = vunpack.c.l.b16 %v1836
      %v1880 = vunpack.c.h.b16 %v1836
      %v1881 = vunpack.c.l.b16 %v1837
      %v1882 = vunpack.c.h.b16 %v1837
      %v1883 = vunpack.c.l.b16 %v1838
      %v1884 = vunpack.c.h.b16 %v1838
      %v1885 = vunpack.c.l.b16 %v1839
      %v1886 = vunpack.c.h.b16 %v1839
      %v1887 = vunpack.c.l.b16 %v1840
      %v1888 = vunpack.c.h.b16 %v1840
      %v1889 = vpack.c.b16 %v1857, %v1857
      %v1890 = vpack.c.b16 %v1858, %v1858
      %v1891 = vpack.c.b16 %v1859, %v1859
      %v1892 = vpack.c.b16 %v1860, %v1860
      %v1893 = vpack.c.b16 %v1861, %v1861
      %v1894 = vpack.c.b16 %v1862, %v1862
      %v1895 = vpack.c.b16 %v1863, %v1863
      %v1896 = vpack.c.b16 %v1864, %v1864
      %v1897 = vpack.c.b16 %v1865, %v1865
      %v1898 = vpack.c.b16 %v1866, %v1866
      %v1899 = vpack.c.b16 %v1867, %v1867
      %v1900 = vpack.c.b16 %v1868, %v1868
      %v1901 = vpack.c.b16 %v1869, %v1869
      %v1902 = vpack.c.b16 %v1870, %v1870
      %v1903 = vpack.c.b16 %v1871, %v1871
      %v1904 = vpack.c.b16 %v1872, %v1872
      %v1905 = vpack.c.b16 %v1873, %v1873
      %v1906 = vpack.c.b16 %v1874, %v1874
      %v1907 = vpack.c.b16 %v1875, %v1875
      %v1908 = vpack.c.b16 %v1876, %v1876
      %v1909 = vpack.c.b16 %v1877, %v1877
      %v1910 = vpack.c.b16 %v1878, %v1878
      %v1911 = vpack.c.b16 %v1879, %v1879
      %v1912 = vpack.c.b16 %v1880, %v1880
      %v1913 = vpack.c.b16 %v1881, %v1881
      %v1914 = vpack.c.b16 %v1882, %v1882
      %v1915 = vpack.c.b16 %v1883, %v1883
      %v1916 = vpack.c.b16 %v1884, %v1884
      %v1917 = vpack.c.b16 %v1885, %v1885
      %v1918 = vpack.c.b16 %v1886, %v1886
      %v1919 = vpack.c.b16 %v1887, %v1887
      %v1920 = vpack.c.b16 %v1888, %v1888
      %vm1953 = vcmask 27648
      %1954 = vst.msk [vmem:[%s656] sm:$0xf] %vm1953, %v1889
      %1955 = vst.msk [vmem:[%s656 + $0x4] sm:$0xf] %vm1953, %v1890
      %1956 = vst.msk [vmem:[%s656 + $0x8] sm:$0xf] %vm1953, %v1891
      %1957 = vst.msk [vmem:[%s656 + $0xc] sm:$0xf] %vm1953, %v1892
      %1958 = vst.msk [vmem:[%s656 + $0x10] sm:$0xf] %vm1953, %v1893
      %1959 = vst.msk [vmem:[%s656 + $0x14] sm:$0xf] %vm1953, %v1894
      %1960 = vst.msk [vmem:[%s656 + $0x18] sm:$0xf] %vm1953, %v1895
      %1961 = vst.msk [vmem:[%s656 + $0x1c] sm:$0xf] %vm1953, %v1896
      %1962 = vst.msk [vmem:[%s656 + $0x20] sm:$0xf] %vm1953, %v1897
      %1963 = vst.msk [vmem:[%s656 + $0x24] sm:$0xf] %vm1953, %v1898
      %1964 = vst.msk [vmem:[%s656 + $0x28] sm:$0xf] %vm1953, %v1899
      %1965 = vst.msk [vmem:[%s656 + $0x2c] sm:$0xf] %vm1953, %v1900
      %1966 = vst.msk [vmem:[%s656 + $0x30] sm:$0xf] %vm1953, %v1901
      %1967 = vst.msk [vmem:[%s656 + $0x34] sm:$0xf] %vm1953, %v1902
      %1968 = vst.msk [vmem:[%s656 + $0x38] sm:$0xf] %vm1953, %v1903
      %1969 = vst.msk [vmem:[%s656 + $0x3c] sm:$0xf] %vm1953, %v1904
      %1970 = vst.msk [vmem:[%s656 + $0x40] sm:$0xf] %vm1953, %v1905
      %1971 = vst.msk [vmem:[%s656 + $0x44] sm:$0xf] %vm1953, %v1906
      %1972 = vst.msk [vmem:[%s656 + $0x48] sm:$0xf] %vm1953, %v1907
      %1973 = vst.msk [vmem:[%s656 + $0x4c] sm:$0xf] %vm1953, %v1908
      %1974 = vst.msk [vmem:[%s656 + $0x50] sm:$0xf] %vm1953, %v1909
      %1975 = vst.msk [vmem:[%s656 + $0x54] sm:$0xf] %vm1953, %v1910
      %1976 = vst.msk [vmem:[%s656 + $0x58] sm:$0xf] %vm1953, %v1911
      %1977 = vst.msk [vmem:[%s656 + $0x5c] sm:$0xf] %vm1953, %v1912
      %1978 = vst.msk [vmem:[%s656 + $0x60] sm:$0xf] %vm1953, %v1913
      %1979 = vst.msk [vmem:[%s656 + $0x64] sm:$0xf] %vm1953, %v1914
      %1980 = vst.msk [vmem:[%s656 + $0x68] sm:$0xf] %vm1953, %v1915
      %1981 = vst.msk [vmem:[%s656 + $0x6c] sm:$0xf] %vm1953, %v1916
      %1982 = vst.msk [vmem:[%s656 + $0x70] sm:$0xf] %vm1953, %v1917
      %1983 = vst.msk [vmem:[%s656 + $0x74] sm:$0xf] %vm1953, %v1918
      %1984 = vst.msk [vmem:[%s656 + $0x78] sm:$0xf] %vm1953, %v1919
      %1985 = vst.msk [vmem:[%s656 + $0x7c] sm:$0xf] %vm1953, %v1920
      %v1986 = vld [vmem:[%s3] sm:$0x3]
      %v1988 = vsel %vm766, %v1986, 0
      %1990 = vmatprep.subr.bf16.mxu0 0
      %1991 = vmatpush1.bf16.msra.mxu0 %v1988
      %1992 = vmatprep.subr.bf16.mxu0 0
      %1993 = vmatpush1.bf16.msra.mxu0 0
      %1994 = vmatprep.subr.bf16.mxu0 0
      %1995 = vmatpush1.bf16.msra.mxu0 0
      %1996 = vmatprep.subr.bf16.mxu0 0
      %1997 = vmatpush1.bf16.msra.mxu0 0
      %1998 = vmatprep.subr.bf16.mxu0 0
      %1999 = vmatpush1.bf16.msra.mxu0 0
      %2000 = vmatprep.subr.bf16.mxu0 0
      %2001 = vmatpush1.bf16.msra.mxu0 0
      %2002 = vmatprep.subr.bf16.mxu0 0
      %2003 = vmatpush1.bf16.msra.mxu0 0
      %2004 = vmatprep.subr.bf16.mxu0 0
      %2005 = vmatpush1.bf16.msra.mxu0 0
      %2006 = vmatprep.subr.bf16.mxu0 0
      %2007 = vmatpush1.bf16.msra.mxu0 0
      %2008 = vmatprep.subr.bf16.mxu0 0
      %2009 = vmatpush1.bf16.msra.mxu0 0
      %2010 = vmatprep.subr.bf16.mxu0 0
      %2011 = vmatpush1.bf16.msra.mxu0 0
      %2012 = vmatprep.subr.bf16.mxu0 0
      %2013 = vmatpush1.bf16.msra.mxu0 0
      %2014 = vmatprep.subr.bf16.mxu0 0
      %2015 = vmatpush1.bf16.msra.mxu0 0
      %2016 = vmatprep.subr.bf16.mxu0 0
      %2017 = vmatpush1.bf16.msra.mxu0 0
      %2018 = vmatprep.subr.bf16.mxu0 0
      %2019 = vmatpush1.bf16.msra.mxu0 0
      %2020 = vmatprep.subr.bf16.mxu0 0
      %2021 = vmatpush1.bf16.msra.mxu0 0
      %2022 = vmatprep.mubr.bf16.mxu0 0
      %2023 = vmatmul.mubr.bf16.gmra.mrb[0].mxu0 %v719
      %v2024 = vpop.f32.mrb[0].mxu0
      %v2025 = vadd.f32 0.0, %v2024
      %v2026 = vpop.f32.mrb[0].mxu0
      %v2027 = vpop.f32.mrb[0].mxu0
      %v2028 = vadd.f32 0.0, %v2027
      %v2029 = vpop.f32.mrb[0].mxu0
      %2030 = vmatprep.mubr.bf16.mxu0 0
      %2031 = vmatmul.mubr.bf16.gmra.mrb[0].mxu0 %v722
      %v2032 = vpop.f32.mrb[0].mxu0
      %v2033 = vadd.f32 0.0, %v2032
      %v2034 = vpop.f32.mrb[0].mxu0
      %v2035 = vpop.f32.mrb[0].mxu0
      %v2036 = vadd.f32 0.0, %v2035
      %v2037 = vpop.f32.mrb[0].mxu0
      %2038 = vmatprep.mubr.bf16.mxu0 0
      %2039 = vmatmul.mubr.bf16.gmra.mrb[0].mxu0 %v725
      %v2040 = vpop.f32.mrb[0].mxu0
      %v2041 = vadd.f32 0.0, %v2040
      %v2042 = vpop.f32.mrb[0].mxu0
      %v2043 = vpop.f32.mrb[0].mxu0
      %v2044 = vadd.f32 0.0, %v2043
      %v2045 = vpop.f32.mrb[0].mxu0
      %2046 = vmatprep.mubr.bf16.mxu0 0
      %2047 = vmatmul.mubr.bf16.gmra.mrb[0].mxu0 %v728
      %v2048 = vpop.f32.mrb[0].mxu0
      %v2049 = vadd.f32 0.0, %v2048
      %v2050 = vpop.f32.mrb[0].mxu0
      %v2051 = vpop.f32.mrb[0].mxu0
      %v2052 = vadd.f32 0.0, %v2051
      %v2053 = vpop.f32.mrb[0].mxu0
      %2054 = vmatprep.mubr.bf16.mxu0 0
      %2055 = vmatmul.mubr.bf16.gmra.mrb[0].mxu0 %v731
      %v2056 = vpop.f32.mrb[0].mxu0
      %v2057 = vadd.f32 0.0, %v2056
      %v2058 = vpop.f32.mrb[0].mxu0
      %v2059 = vpop.f32.mrb[0].mxu0
      %v2060 = vadd.f32 0.0, %v2059
      %v2061 = vpop.f32.mrb[0].mxu0
      %2062 = vmatprep.mubr.bf16.mxu0 0
      %2063 = vmatmul.mubr.bf16.gmra.mrb[0].mxu0 %v734
      %v2064 = vpop.f32.mrb[0].mxu0
      %v2065 = vadd.f32 0.0, %v2064
      %v2066 = vpop.f32.mrb[0].mxu0
      %v2067 = vpop.f32.mrb[0].mxu0
      %v2068 = vadd.f32 0.0, %v2067
      %v2069 = vpop.f32.mrb[0].mxu0
      %2070 = vmatprep.mubr.bf16.mxu0 0
      %2071 = vmatmul.mubr.bf16.gmra.mrb[0].mxu0 %v737
      %v2072 = vpop.f32.mrb[0].mxu0
      %v2073 = vadd.f32 0.0, %v2072
      %v2074 = vpop.f32.mrb[0].mxu0
      %v2075 = vpop.f32.mrb[0].mxu0
      %v2076 = vadd.f32 0.0, %v2075
      %v2077 = vpop.f32.mrb[0].mxu0
      %2078 = vmatprep.mubr.bf16.mxu0 0
      %2079 = vmatmul.mubr.bf16.gmra.mrb[0].mxu0 %v740
      %v2080 = vpop.f32.mrb[0].mxu0
      %v2081 = vadd.f32 0.0, %v2080
      %v2082 = vpop.f32.mrb[0].mxu0
      %v2083 = vpop.f32.mrb[0].mxu0
      %v2084 = vadd.f32 0.0, %v2083
      %v2085 = vpop.f32.mrb[0].mxu0
      %2086 = vmatprep.mubr.bf16.mxu0 0
      %2087 = vmatmul.mubr.bf16.gmra.mrb[0].mxu0 %v743
      %v2088 = vpop.f32.mrb[0].mxu0
      %v2089 = vadd.f32 0.0, %v2088
      %v2090 = vpop.f32.mrb[0].mxu0
      %v2091 = vpop.f32.mrb[0].mxu0
      %v2092 = vadd.f32 0.0, %v2091
      %v2093 = vpop.f32.mrb[0].mxu0
      %2094 = vmatprep.mubr.bf16.mxu0 0
      %2095 = vmatmul.mubr.bf16.gmra.mrb[0].mxu0 %v746
      %v2096 = vpop.f32.mrb[0].mxu0
      %v2097 = vadd.f32 0.0, %v2096
      %v2098 = vpop.f32.mrb[0].mxu0
      %v2099 = vpop.f32.mrb[0].mxu0
      %v2100 = vadd.f32 0.0, %v2099
      %v2101 = vpop.f32.mrb[0].mxu0
      %2102 = vmatprep.mubr.bf16.mxu0 0
      %2103 = vmatmul.mubr.bf16.gmra.mrb[0].mxu0 %v749
      %v2104 = vpop.f32.mrb[0].mxu0
      %v2105 = vadd.f32 0.0, %v2104
      %v2106 = vpop.f32.mrb[0].mxu0
      %v2107 = vpop.f32.mrb[0].mxu0
      %v2108 = vadd.f32 0.0, %v2107
      %v2109 = vpop.f32.mrb[0].mxu0
      %2110 = vmatprep.mubr.bf16.mxu0 0
      %2111 = vmatmul.mubr.bf16.gmra.mrb[0].mxu0 %v752
      %v2112 = vpop.f32.mrb[0].mxu0
      %v2113 = vadd.f32 0.0, %v2112
      %v2114 = vpop.f32.mrb[0].mxu0
      %v2115 = vpop.f32.mrb[0].mxu0
      %v2116 = vadd.f32 0.0, %v2115
      %v2117 = vpop.f32.mrb[0].mxu0
      %2118 = vmatprep.mubr.bf16.mxu0 0
      %2119 = vmatmul.mubr.bf16.gmra.mrb[0].mxu0 %v755
      %v2120 = vpop.f32.mrb[0].mxu0
      %v2121 = vadd.f32 0.0, %v2120
      %v2122 = vpop.f32.mrb[0].mxu0
      %v2123 = vpop.f32.mrb[0].mxu0
      %v2124 = vadd.f32 0.0, %v2123
      %v2125 = vpop.f32.mrb[0].mxu0
      %2126 = vmatprep.mubr.bf16.mxu0 0
      %2127 = vmatmul.mubr.bf16.gmra.mrb[0].mxu0 %v758
      %v2128 = vpop.f32.mrb[0].mxu0
      %v2129 = vadd.f32 0.0, %v2128
      %v2130 = vpop.f32.mrb[0].mxu0
      %v2131 = vpop.f32.mrb[0].mxu0
      %v2132 = vadd.f32 0.0, %v2131
      %v2133 = vpop.f32.mrb[0].mxu0
      %2134 = vmatprep.mubr.bf16.mxu0 0
      %2135 = vmatmul.mubr.bf16.gmra.mrb[0].mxu0 %v761
      %v2136 = vpop.f32.mrb[0].mxu0
      %v2137 = vadd.f32 0.0, %v2136
      %v2138 = vpop.f32.mrb[0].mxu0
      %v2139 = vpop.f32.mrb[0].mxu0
      %v2140 = vadd.f32 0.0, %v2139
      %v2141 = vpop.f32.mrb[0].mxu0
      %2142 = vmatprep.mubr.bf16.mxu0 0
      %2143 = vmatmul.mubr.bf16.gmra.mrb[0].mxu0 %v764
      %v2144 = vpop.f32.mrb[0].mxu0
      %v2145 = vadd.f32 0.0, %v2144
      %v2146 = vpop.f32.mrb[0].mxu0
      %v2147 = vpop.f32.mrb[0].mxu0
      %v2148 = vadd.f32 0.0, %v2147
      %v2149 = vpop.f32.mrb[0].mxu0
      %2150 = vdwg.mxu0
      %v2151 = vsel %vm717, %v2025, 0.0
      %v2152 = vsel %vm717, %v2028, 0.0
      %v2153 = vadd.f32 %v2151, %v2152
      %v2154 = vsel %vm717, %v2033, 0.0
      %v2155 = vadd.f32 %v2153, %v2154
      %v2156 = vsel %vm717, %v2036, 0.0
      %v2157 = vadd.f32 %v2155, %v2156
      %v2158 = vsel %vm717, %v2041, 0.0
      %v2159 = vadd.f32 %v2157, %v2158
      %v2160 = vsel %vm717, %v2044, 0.0
      %v2161 = vadd.f32 %v2159, %v2160
      %v2162 = vsel %vm717, %v2049, 0.0
      %v2163 = vadd.f32 %v2161, %v2162
      %v2164 = vsel %vm717, %v2052, 0.0
      %v2165 = vadd.f32 %v2163, %v2164
      %v2166 = vsel %vm717, %v2057, 0.0
      %v2167 = vadd.f32 %v2165, %v2166
      %v2168 = vsel %vm717, %v2060, 0.0
      %v2169 = vadd.f32 %v2167, %v2168
      %v2170 = vsel %vm717, %v2065, 0.0
      %v2171 = vadd.f32 %v2169, %v2170
      %v2172 = vsel %vm717, %v2068, 0.0
      %v2173 = vadd.f32 %v2171, %v2172
      %v2174 = vsel %vm717, %v2073, 0.0
      %v2175 = vadd.f32 %v2173, %v2174
      %v2176 = vsel %vm717, %v2076, 0.0
      %v2177 = vadd.f32 %v2175, %v2176
      %v2178 = vsel %vm717, %v2081, 0.0
      %v2179 = vadd.f32 %v2177, %v2178
      %v2180 = vsel %vm717, %v2084, 0.0
      %v2181 = vadd.f32 %v2179, %v2180
      %v2182 = vsel %vm717, %v2089, 0.0
      %v2183 = vadd.f32 %v2181, %v2182
      %v2184 = vsel %vm717, %v2092, 0.0
      %v2185 = vadd.f32 %v2183, %v2184
      %v2186 = vsel %vm717, %v2097, 0.0
      %v2187 = vadd.f32 %v2185, %v2186
      %v2188 = vsel %vm717, %v2100, 0.0
      %v2189 = vadd.f32 %v2187, %v2188
      %v2190 = vsel %vm717, %v2105, 0.0
      %v2191 = vadd.f32 %v2189, %v2190
      %v2192 = vsel %vm717, %v2108, 0.0
      %v2193 = vadd.f32 %v2191, %v2192
      %v2194 = vsel %vm717, %v2113, 0.0
      %v2195 = vadd.f32 %v2193, %v2194
      %v2196 = vsel %vm717, %v2116, 0.0
      %v2197 = vadd.f32 %v2195, %v2196
      %v2198 = vsel %vm717, %v2121, 0.0
      %v2199 = vadd.f32 %v2197, %v2198
      %v2200 = vsel %vm717, %v2124, 0.0
      %v2201 = vadd.f32 %v2199, %v2200
      %v2202 = vsel %vm717, %v2129, 0.0
      %v2203 = vadd.f32 %v2201, %v2202
      %v2204 = vsel %vm717, %v2132, 0.0
      %v2205 = vadd.f32 %v2203, %v2204
      %v2206 = vsel %vm717, %v2137, 0.0
      %v2207 = vadd.f32 %v2205, %v2206
      %v2208 = vsel %vm717, %v2140, 0.0
      %v2209 = vadd.f32 %v2207, %v2208
      %v2210 = vsel %vm717, %v2145, 0.0
      %v2211 = vadd.f32 %v2209, %v2210
      %v2212 = vsel %vm717, %v2148, 0.0
      %v2213 = vadd.f32 %v2211, %v2212
      %v2214 = vrot.slane %v2213, 4
      %v2215 = vadd.f32 %v2213, %v2214
      %v2216 = vrot.slane %v2215, 2
      %v2217 = vadd.f32 %v2215, %v2216
      %v2218 = vrot.slane %v2217, 1
      %v2219 = vadd.f32 %v2217, %v2218
      %v2220 = vmul.f32 %v2219, 0.00390625
      %v2221 = vsub.f32 %v2025, %v2220
      %v2222 = vsub.f32 %v2028, %v2220
      %v2223 = vsub.f32 %v2033, %v2220
      %v2224 = vsub.f32 %v2036, %v2220
      %v2225 = vsub.f32 %v2041, %v2220
      %v2226 = vsub.f32 %v2044, %v2220
      %v2227 = vsub.f32 %v2049, %v2220
      %v2228 = vsub.f32 %v2052, %v2220
      %v2229 = vsub.f32 %v2057, %v2220
      %v2230 = vsub.f32 %v2060, %v2220
      %v2231 = vsub.f32 %v2065, %v2220
      %v2232 = vsub.f32 %v2068, %v2220
      %v2233 = vsub.f32 %v2073, %v2220
      %v2234 = vsub.f32 %v2076, %v2220
      %v2235 = vsub.f32 %v2081, %v2220
      %v2236 = vsub.f32 %v2084, %v2220
      %v2237 = vsub.f32 %v2089, %v2220
      %v2238 = vsub.f32 %v2092, %v2220
      %v2239 = vsub.f32 %v2097, %v2220
      %v2240 = vsub.f32 %v2100, %v2220
      %v2241 = vsub.f32 %v2105, %v2220
      %v2242 = vsub.f32 %v2108, %v2220
      %v2243 = vsub.f32 %v2113, %v2220
      %v2244 = vsub.f32 %v2116, %v2220
      %v2245 = vsub.f32 %v2121, %v2220
      %v2246 = vsub.f32 %v2124, %v2220
      %v2247 = vsub.f32 %v2129, %v2220
      %v2248 = vsub.f32 %v2132, %v2220
      %v2249 = vsub.f32 %v2137, %v2220
      %v2250 = vsub.f32 %v2140, %v2220
      %v2251 = vsub.f32 %v2145, %v2220
      %v2252 = vsub.f32 %v2148, %v2220
      %v2253 = vmul.f32 %v2221, %v2221
      %v2254 = vmul.f32 %v2222, %v2222
      %v2255 = vmul.f32 %v2223, %v2223
      %v2256 = vmul.f32 %v2224, %v2224
      %v2257 = vmul.f32 %v2225, %v2225
      %v2258 = vmul.f32 %v2226, %v2226
      %v2259 = vmul.f32 %v2227, %v2227
      %v2260 = vmul.f32 %v2228, %v2228
      %v2261 = vmul.f32 %v2229, %v2229
      %v2262 = vmul.f32 %v2230, %v2230
      %v2263 = vmul.f32 %v2231, %v2231
      %v2264 = vmul.f32 %v2232, %v2232
      %v2265 = vmul.f32 %v2233, %v2233
      %v2266 = vmul.f32 %v2234, %v2234
      %v2267 = vmul.f32 %v2235, %v2235
      %v2268 = vmul.f32 %v2236, %v2236
      %v2269 = vmul.f32 %v2237, %v2237
      %v2270 = vmul.f32 %v2238, %v2238
      %v2271 = vmul.f32 %v2239, %v2239
      %v2272 = vmul.f32 %v2240, %v2240
      %v2273 = vmul.f32 %v2241, %v2241
      %v2274 = vmul.f32 %v2242, %v2242
      %v2275 = vmul.f32 %v2243, %v2243
      %v2276 = vmul.f32 %v2244, %v2244
      %v2277 = vmul.f32 %v2245, %v2245
      %v2278 = vmul.f32 %v2246, %v2246
      %v2279 = vmul.f32 %v2247, %v2247
      %v2280 = vmul.f32 %v2248, %v2248
      %v2281 = vmul.f32 %v2249, %v2249
      %v2282 = vmul.f32 %v2250, %v2250
      %v2283 = vmul.f32 %v2251, %v2251
      %v2284 = vmul.f32 %v2252, %v2252
      %v2285 = vsel %vm717, %v2253, 0.0
      %v2286 = vsel %vm717, %v2254, 0.0
      %v2287 = vadd.f32 %v2285, %v2286
      %v2288 = vsel %vm717, %v2255, 0.0
      %v2289 = vadd.f32 %v2287, %v2288
      %v2290 = vsel %vm717, %v2256, 0.0
      %v2291 = vadd.f32 %v2289, %v2290
      %v2292 = vsel %vm717, %v2257, 0.0
      %v2293 = vadd.f32 %v2291, %v2292
      %v2294 = vsel %vm717, %v2258, 0.0
      %v2295 = vadd.f32 %v2293, %v2294
      %v2296 = vsel %vm717, %v2259, 0.0
      %v2297 = vadd.f32 %v2295, %v2296
      %v2298 = vsel %vm717, %v2260, 0.0
      %v2299 = vadd.f32 %v2297, %v2298
      %v2300 = vsel %vm717, %v2261, 0.0
      %v2301 = vadd.f32 %v2299, %v2300
      %v2302 = vsel %vm717, %v2262, 0.0
      %v2303 = vadd.f32 %v2301, %v2302
      %v2304 = vsel %vm717, %v2263, 0.0
      %v2305 = vadd.f32 %v2303, %v2304
      %v2306 = vsel %vm717, %v2264, 0.0
      %v2307 = vadd.f32 %v2305, %v2306
      %v2308 = vsel %vm717, %v2265, 0.0
      %v2309 = vadd.f32 %v2307, %v2308
      %v2310 = vsel %vm717, %v2266, 0.0
      %v2311 = vadd.f32 %v2309, %v2310
      %v2312 = vsel %vm717, %v2267, 0.0
      %v2313 = vadd.f32 %v2311, %v2312
      %v2314 = vsel %vm717, %v2268, 0.0
      %v2315 = vadd.f32 %v2313, %v2314
      %v2316 = vsel %vm717, %v2269, 0.0
      %v2317 = vadd.f32 %v2315, %v2316
      %v2318 = vsel %vm717, %v2270, 0.0
      %v2319 = vadd.f32 %v2317, %v2318
      %v2320 = vsel %vm717, %v2271, 0.0
      %v2321 = vadd.f32 %v2319, %v2320
      %v2322 = vsel %vm717, %v2272, 0.0
      %v2323 = vadd.f32 %v2321, %v2322
      %v2324 = vsel %vm717, %v2273, 0.0
      %v2325 = vadd.f32 %v2323, %v2324
      %v2326 = vsel %vm717, %v2274, 0.0
      %v2327 = vadd.f32 %v2325, %v2326
      %v2328 = vsel %vm717, %v2275, 0.0
      %v2329 = vadd.f32 %v2327, %v2328
      %v2330 = vsel %vm717, %v2276, 0.0
      %v2331 = vadd.f32 %v2329, %v2330
      %v2332 = vsel %vm717, %v2277, 0.0
      %v2333 = vadd.f32 %v2331, %v2332
      %v2334 = vsel %vm717, %v2278, 0.0
      %v2335 = vadd.f32 %v2333, %v2334
      %v2336 = vsel %vm717, %v2279, 0.0
      %v2337 = vadd.f32 %v2335, %v2336
      %v2338 = vsel %vm717, %v2280, 0.0
      %v2339 = vadd.f32 %v2337, %v2338
      %v2340 = vsel %vm717, %v2281, 0.0
      %v2341 = vadd.f32 %v2339, %v2340
      %v2342 = vsel %vm717, %v2282, 0.0
      %v2343 = vadd.f32 %v2341, %v2342
      %v2344 = vsel %vm717, %v2283, 0.0
      %v2345 = vadd.f32 %v2343, %v2344
      %v2346 = vsel %vm717, %v2284, 0.0
      %v2347 = vadd.f32 %v2345, %v2346
      %v2348 = vrot.slane %v2347, 4
      %v2349 = vadd.f32 %v2347, %v2348
      %v2350 = vrot.slane %v2349, 2
      %v2351 = vadd.f32 %v2349, %v2350
      %v2352 = vrot.slane %v2351, 1
      %v2353 = vadd.f32 %v2351, %v2352
      %v2354 = vmul.f32 %v2353, 0.00390625
      %v2355 = vadd.f32 %v2354, 1e-05
      %v2356 = vrsqrt.pop %v2355
      %v2357 = vmul.f32 %v2221, %v2356
      %v2358 = vmul.f32 %v2222, %v2356
      %v2359 = vmul.f32 %v2223, %v2356
      %v2360 = vmul.f32 %v2224, %v2356
      %v2361 = vmul.f32 %v2225, %v2356
      %v2362 = vmul.f32 %v2226, %v2356
      %v2363 = vmul.f32 %v2227, %v2356
      %v2364 = vmul.f32 %v2228, %v2356
      %v2365 = vmul.f32 %v2229, %v2356
      %v2366 = vmul.f32 %v2230, %v2356
      %v2367 = vmul.f32 %v2231, %v2356
      %v2368 = vmul.f32 %v2232, %v2356
      %v2369 = vmul.f32 %v2233, %v2356
      %v2370 = vmul.f32 %v2234, %v2356
      %v2371 = vmul.f32 %v2235, %v2356
      %v2372 = vmul.f32 %v2236, %v2356
      %v2373 = vmul.f32 %v2237, %v2356
      %v2374 = vmul.f32 %v2238, %v2356
      %v2375 = vmul.f32 %v2239, %v2356
      %v2376 = vmul.f32 %v2240, %v2356
      %v2377 = vmul.f32 %v2241, %v2356
      %v2378 = vmul.f32 %v2242, %v2356
      %v2379 = vmul.f32 %v2243, %v2356
      %v2380 = vmul.f32 %v2244, %v2356
      %v2381 = vmul.f32 %v2245, %v2356
      %v2382 = vmul.f32 %v2246, %v2356
      %v2383 = vmul.f32 %v2247, %v2356
      %v2384 = vmul.f32 %v2248, %v2356
      %v2385 = vmul.f32 %v2249, %v2356
      %v2386 = vmul.f32 %v2250, %v2356
      %v2387 = vmul.f32 %v2251, %v2356
      %v2388 = vmul.f32 %v2252, %v2356
      %v2389 = vld [vmem:[%s11] sm:$0x1]
      %v2391 = vlaneseq
      %v2392 = vshrl.u32 %v2391, 7
      %v2393 = vsub.s32 0, %v2392
      %v2394 = vrot.slane %v2389, %v2393
      %v2396 = vmul.f32 %v2357, %v2394
      %v2397 = vmul.f32 %v2358, %v2394
      %v2398 = vmul.f32 %v2359, %v2394
      %v2399 = vmul.f32 %v2360, %v2394
      %v2400 = vmul.f32 %v2361, %v2394
      %v2401 = vmul.f32 %v2362, %v2394
      %v2402 = vmul.f32 %v2363, %v2394
      %v2403 = vmul.f32 %v2364, %v2394
      %v2404 = vmul.f32 %v2365, %v2394
      %v2405 = vmul.f32 %v2366, %v2394
      %v2406 = vmul.f32 %v2367, %v2394
      %v2407 = vmul.f32 %v2368, %v2394
      %v2408 = vmul.f32 %v2369, %v2394
      %v2409 = vmul.f32 %v2370, %v2394
      %v2410 = vmul.f32 %v2371, %v2394
      %v2411 = vmul.f32 %v2372, %v2394
      %v2412 = vmul.f32 %v2373, %v2394
      %v2413 = vmul.f32 %v2374, %v2394
      %v2414 = vmul.f32 %v2375, %v2394
      %v2415 = vmul.f32 %v2376, %v2394
      %v2416 = vmul.f32 %v2377, %v2394
      %v2417 = vmul.f32 %v2378, %v2394
      %v2418 = vmul.f32 %v2379, %v2394
      %v2419 = vmul.f32 %v2380, %v2394
      %v2420 = vmul.f32 %v2381, %v2394
      %v2421 = vmul.f32 %v2382, %v2394
      %v2422 = vmul.f32 %v2383, %v2394
      %v2423 = vmul.f32 %v2384, %v2394
      %v2424 = vmul.f32 %v2385, %v2394
      %v2425 = vmul.f32 %v2386, %v2394
      %v2426 = vmul.f32 %v2387, %v2394
      %v2427 = vmul.f32 %v2388, %v2394
      %v2428 = vld [vmem:[%s15] sm:$0x1]
      %v2430 = vlaneseq
      %v2431 = vshrl.u32 %v2430, 7
      %v2432 = vsub.s32 0, %v2431
      %v2433 = vrot.slane %v2428, %v2432
      %v2435 = vadd.f32 %v2396, %v2433
      %v2436 = vadd.f32 %v2397, %v2433
      %v2437 = vadd.f32 %v2398, %v2433
      %v2438 = vadd.f32 %v2399, %v2433
      %v2439 = vadd.f32 %v2400, %v2433
      %v2440 = vadd.f32 %v2401, %v2433
      %v2441 = vadd.f32 %v2402, %v2433
      %v2442 = vadd.f32 %v2403, %v2433
      %v2443 = vadd.f32 %v2404, %v2433
      %v2444 = vadd.f32 %v2405, %v2433
      %v2445 = vadd.f32 %v2406, %v2433
      %v2446 = vadd.f32 %v2407, %v2433
      %v2447 = vadd.f32 %v2408, %v2433
      %v2448 = vadd.f32 %v2409, %v2433
      %v2449 = vadd.f32 %v2410, %v2433
      %v2450 = vadd.f32 %v2411, %v2433
      %v2451 = vadd.f32 %v2412, %v2433
      %v2452 = vadd.f32 %v2413, %v2433
      %v2453 = vadd.f32 %v2414, %v2433
      %v2454 = vadd.f32 %v2415, %v2433
      %v2455 = vadd.f32 %v2416, %v2433
      %v2456 = vadd.f32 %v2417, %v2433
      %v2457 = vadd.f32 %v2418, %v2433
      %v2458 = vadd.f32 %v2419, %v2433
      %v2459 = vadd.f32 %v2420, %v2433
      %v2460 = vadd.f32 %v2421, %v2433
      %v2461 = vadd.f32 %v2422, %v2433
      %v2462 = vadd.f32 %v2423, %v2433
      %v2463 = vadd.f32 %v2424, %v2433
      %v2464 = vadd.f32 %v2425, %v2433
      %v2465 = vadd.f32 %v2426, %v2433
      %v2466 = vadd.f32 %v2427, %v2433
      %v2467 = vmax.f32 %v2435, 0.0
      %v2468 = vmax.f32 %v2436, 0.0
      %v2469 = vmax.f32 %v2437, 0.0
      %v2470 = vmax.f32 %v2438, 0.0
      %v2471 = vmax.f32 %v2439, 0.0
      %v2472 = vmax.f32 %v2440, 0.0
      %v2473 = vmax.f32 %v2441, 0.0
      %v2474 = vmax.f32 %v2442, 0.0
      %v2475 = vmax.f32 %v2443, 0.0
      %v2476 = vmax.f32 %v2444, 0.0
      %v2477 = vmax.f32 %v2445, 0.0
      %v2478 = vmax.f32 %v2446, 0.0
      %v2479 = vmax.f32 %v2447, 0.0
      %v2480 = vmax.f32 %v2448, 0.0
      %v2481 = vmax.f32 %v2449, 0.0
      %v2482 = vmax.f32 %v2450, 0.0
      %v2483 = vmax.f32 %v2451, 0.0
      %v2484 = vmax.f32 %v2452, 0.0
      %v2485 = vmax.f32 %v2453, 0.0
      %v2486 = vmax.f32 %v2454, 0.0
      %v2487 = vmax.f32 %v2455, 0.0
      %v2488 = vmax.f32 %v2456, 0.0
      %v2489 = vmax.f32 %v2457, 0.0
      %v2490 = vmax.f32 %v2458, 0.0
      %v2491 = vmax.f32 %v2459, 0.0
      %v2492 = vmax.f32 %v2460, 0.0
      %v2493 = vmax.f32 %v2461, 0.0
      %v2494 = vmax.f32 %v2462, 0.0
      %v2495 = vmax.f32 %v2463, 0.0
      %v2496 = vmax.f32 %v2464, 0.0
      %v2497 = vmax.f32 %v2465, 0.0
      %v2498 = vmax.f32 %v2466, 0.0
      %v2499 = vpack.c.bf16 %v2468, %v2467
      %v2500 = vpack.c.bf16 %v2470, %v2469
      %v2501 = vpack.c.bf16 %v2472, %v2471
      %v2502 = vpack.c.bf16 %v2474, %v2473
      %v2503 = vpack.c.bf16 %v2476, %v2475
      %v2504 = vpack.c.bf16 %v2478, %v2477
      %v2505 = vpack.c.bf16 %v2480, %v2479
      %v2506 = vpack.c.bf16 %v2482, %v2481
      %v2507 = vpack.c.bf16 %v2484, %v2483
      %v2508 = vpack.c.bf16 %v2486, %v2485
      %v2509 = vpack.c.bf16 %v2488, %v2487
      %v2510 = vpack.c.bf16 %v2490, %v2489
      %v2511 = vpack.c.bf16 %v2492, %v2491
      %v2512 = vpack.c.bf16 %v2494, %v2493
      %v2513 = vpack.c.bf16 %v2496, %v2495
      %v2514 = vpack.c.bf16 %v2498, %v2497
      %v2531 = vunpack.c.l.b16 %v2499
      %v2532 = vunpack.c.h.b16 %v2499
      %v2533 = vunpack.c.l.b16 %v2500
      %v2534 = vunpack.c.h.b16 %v2500
      %v2535 = vunpack.c.l.b16 %v2501
      %v2536 = vunpack.c.h.b16 %v2501
      %v2537 = vunpack.c.l.b16 %v2502
      %v2538 = vunpack.c.h.b16 %v2502
      %v2539 = vunpack.c.l.b16 %v2503
      %v2540 = vunpack.c.h.b16 %v2503
      %v2541 = vunpack.c.l.b16 %v2504
      %v2542 = vunpack.c.h.b16 %v2504
      %v2543 = vunpack.c.l.b16 %v2505
      %v2544 = vunpack.c.h.b16 %v2505
      %v2545 = vunpack.c.l.b16 %v2506
      %v2546 = vunpack.c.h.b16 %v2506
      %v2547 = vunpack.c.l.b16 %v2507
      %v2548 = vunpack.c.h.b16 %v2507
      %v2549 = vunpack.c.l.b16 %v2508
      %v2550 = vunpack.c.h.b16 %v2508
      %v2551 = vunpack.c.l.b16 %v2509
      %v2552 = vunpack.c.h.b16 %v2509
      %v2553 = vunpack.c.l.b16 %v2510
      %v2554 = vunpack.c.h.b16 %v2510
      %v2555 = vunpack.c.l.b16 %v2511
      %v2556 = vunpack.c.h.b16 %v2511
      %v2557 = vunpack.c.l.b16 %v2512
      %v2558 = vunpack.c.h.b16 %v2512
      %v2559 = vunpack.c.l.b16 %v2513
      %v2560 = vunpack.c.h.b16 %v2513
      %v2561 = vunpack.c.l.b16 %v2514
      %v2562 = vunpack.c.h.b16 %v2514
      %v2563 = vpack.c.b16 %v2531, %v2531
      %v2564 = vpack.c.b16 %v2532, %v2532
      %v2565 = vpack.c.b16 %v2533, %v2533
      %v2566 = vpack.c.b16 %v2534, %v2534
      %v2567 = vpack.c.b16 %v2535, %v2535
      %v2568 = vpack.c.b16 %v2536, %v2536
      %v2569 = vpack.c.b16 %v2537, %v2537
      %v2570 = vpack.c.b16 %v2538, %v2538
      %v2571 = vpack.c.b16 %v2539, %v2539
      %v2572 = vpack.c.b16 %v2540, %v2540
      %v2573 = vpack.c.b16 %v2541, %v2541
      %v2574 = vpack.c.b16 %v2542, %v2542
      %v2575 = vpack.c.b16 %v2543, %v2543
      %v2576 = vpack.c.b16 %v2544, %v2544
      %v2577 = vpack.c.b16 %v2545, %v2545
      %v2578 = vpack.c.b16 %v2546, %v2546
      %v2579 = vpack.c.b16 %v2547, %v2547
      %v2580 = vpack.c.b16 %v2548, %v2548
      %v2581 = vpack.c.b16 %v2549, %v2549
      %v2582 = vpack.c.b16 %v2550, %v2550
      %v2583 = vpack.c.b16 %v2551, %v2551
      %v2584 = vpack.c.b16 %v2552, %v2552
      %v2585 = vpack.c.b16 %v2553, %v2553
      %v2586 = vpack.c.b16 %v2554, %v2554
      %v2587 = vpack.c.b16 %v2555, %v2555
      %v2588 = vpack.c.b16 %v2556, %v2556
      %v2589 = vpack.c.b16 %v2557, %v2557
      %v2590 = vpack.c.b16 %v2558, %v2558
      %v2591 = vpack.c.b16 %v2559, %v2559
      %v2592 = vpack.c.b16 %v2560, %v2560
      %v2593 = vpack.c.b16 %v2561, %v2561
      %v2594 = vpack.c.b16 %v2562, %v2562
      %2627 = vst.msk [vmem:[%s661] sm:$0xf] %vm1953, %v2563
      %2628 = vst.msk [vmem:[%s661 + $0x4] sm:$0xf] %vm1953, %v2564
      %2629 = vst.msk [vmem:[%s661 + $0x8] sm:$0xf] %vm1953, %v2565
      %2630 = vst.msk [vmem:[%s661 + $0xc] sm:$0xf] %vm1953, %v2566
      %2631 = vst.msk [vmem:[%s661 + $0x10] sm:$0xf] %vm1953, %v2567
      %2632 = vst.msk [vmem:[%s661 + $0x14] sm:$0xf] %vm1953, %v2568
      %2633 = vst.msk [vmem:[%s661 + $0x18] sm:$0xf] %vm1953, %v2569
      %2634 = vst.msk [vmem:[%s661 + $0x1c] sm:$0xf] %vm1953, %v2570
      %2635 = vst.msk [vmem:[%s661 + $0x20] sm:$0xf] %vm1953, %v2571
      %2636 = vst.msk [vmem:[%s661 + $0x24] sm:$0xf] %vm1953, %v2572
      %2637 = vst.msk [vmem:[%s661 + $0x28] sm:$0xf] %vm1953, %v2573
      %2638 = vst.msk [vmem:[%s661 + $0x2c] sm:$0xf] %vm1953, %v2574
      %2639 = vst.msk [vmem:[%s661 + $0x30] sm:$0xf] %vm1953, %v2575
      %2640 = vst.msk [vmem:[%s661 + $0x34] sm:$0xf] %vm1953, %v2576
      %2641 = vst.msk [vmem:[%s661 + $0x38] sm:$0xf] %vm1953, %v2577
      %2642 = vst.msk [vmem:[%s661 + $0x3c] sm:$0xf] %vm1953, %v2578
      %2643 = vst.msk [vmem:[%s661 + $0x40] sm:$0xf] %vm1953, %v2579
      %2644 = vst.msk [vmem:[%s661 + $0x44] sm:$0xf] %vm1953, %v2580
      %2645 = vst.msk [vmem:[%s661 + $0x48] sm:$0xf] %vm1953, %v2581
      %2646 = vst.msk [vmem:[%s661 + $0x4c] sm:$0xf] %vm1953, %v2582
      %2647 = vst.msk [vmem:[%s661 + $0x50] sm:$0xf] %vm1953, %v2583
      %2648 = vst.msk [vmem:[%s661 + $0x54] sm:$0xf] %vm1953, %v2584
      %2649 = vst.msk [vmem:[%s661 + $0x58] sm:$0xf] %vm1953, %v2585
      %2650 = vst.msk [vmem:[%s661 + $0x5c] sm:$0xf] %vm1953, %v2586
      %2651 = vst.msk [vmem:[%s661 + $0x60] sm:$0xf] %vm1953, %v2587
      %2652 = vst.msk [vmem:[%s661 + $0x64] sm:$0xf] %vm1953, %v2588
      %2653 = vst.msk [vmem:[%s661 + $0x68] sm:$0xf] %vm1953, %v2589
      %2654 = vst.msk [vmem:[%s661 + $0x6c] sm:$0xf] %vm1953, %v2590
      %2655 = vst.msk [vmem:[%s661 + $0x70] sm:$0xf] %vm1953, %v2591
      %2656 = vst.msk [vmem:[%s661 + $0x74] sm:$0xf] %vm1953, %v2592
      %2657 = vst.msk [vmem:[%s661 + $0x78] sm:$0xf] %vm1953, %v2593
      %2658 = vst.msk [vmem:[%s661 + $0x7c] sm:$0xf] %vm1953, %v2594
      %v2659 = vld [vmem:[%s4] sm:$0x3]
      %v2661 = vsel %vm766, %v2659, 0
      %2663 = vmatprep.subr.bf16.mxu0 0
      %2664 = vmatpush1.bf16.msra.mxu0 %v2661
      %2665 = vmatprep.subr.bf16.mxu0 0
      %2666 = vmatpush1.bf16.msra.mxu0 0
      %2667 = vmatprep.subr.bf16.mxu0 0
      %2668 = vmatpush1.bf16.msra.mxu0 0
      %2669 = vmatprep.subr.bf16.mxu0 0
      %2670 = vmatpush1.bf16.msra.mxu0 0
      %2671 = vmatprep.subr.bf16.mxu0 0
      %2672 = vmatpush1.bf16.msra.mxu0 0
      %2673 = vmatprep.subr.bf16.mxu0 0
      %2674 = vmatpush1.bf16.msra.mxu0 0
      %2675 = vmatprep.subr.bf16.mxu0 0
      %2676 = vmatpush1.bf16.msra.mxu0 0
      %2677 = vmatprep.subr.bf16.mxu0 0
      %2678 = vmatpush1.bf16.msra.mxu0 0
      %2679 = vmatprep.subr.bf16.mxu0 0
      %2680 = vmatpush1.bf16.msra.mxu0 0
      %2681 = vmatprep.subr.bf16.mxu0 0
      %2682 = vmatpush1.bf16.msra.mxu0 0
      %2683 = vmatprep.subr.bf16.mxu0 0
      %2684 = vmatpush1.bf16.msra.mxu0 0
      %2685 = vmatprep.subr.bf16.mxu0 0
      %2686 = vmatpush1.bf16.msra.mxu0 0
      %2687 = vmatprep.subr.bf16.mxu0 0
      %2688 = vmatpush1.bf16.msra.mxu0 0
      %2689 = vmatprep.subr.bf16.mxu0 0
      %2690 = vmatpush1.bf16.msra.mxu0 0
      %2691 = vmatprep.subr.bf16.mxu0 0
      %2692 = vmatpush1.bf16.msra.mxu0 0
      %2693 = vmatprep.subr.bf16.mxu0 0
      %2694 = vmatpush1.bf16.msra.mxu0 0
      %2695 = vmatprep.mubr.bf16.mxu0 0
      %2696 = vmatmul.mubr.bf16.gmra.mrb[0].mxu0 %v719
      %v2697 = vpop.f32.mrb[0].mxu0
      %v2698 = vadd.f32 0.0, %v2697
      %v2699 = vpop.f32.mrb[0].mxu0
      %v2700 = vpop.f32.mrb[0].mxu0
      %v2701 = vadd.f32 0.0, %v2700
      %v2702 = vpop.f32.mrb[0].mxu0
      %2703 = vmatprep.mubr.bf16.mxu0 0
      %2704 = vmatmul.mubr.bf16.gmra.mrb[0].mxu0 %v722
      %v2705 = vpop.f32.mrb[0].mxu0
      %v2706 = vadd.f32 0.0, %v2705
      %v2707 = vpop.f32.mrb[0].mxu0
      %v2708 = vpop.f32.mrb[0].mxu0
      %v2709 = vadd.f32 0.0, %v2708
      %v2710 = vpop.f32.mrb[0].mxu0
      %2711 = vmatprep.mubr.bf16.mxu0 0
      %2712 = vmatmul.mubr.bf16.gmra.mrb[0].mxu0 %v725
      %v2713 = vpop.f32.mrb[0].mxu0
      %v2714 = vadd.f32 0.0, %v2713
      %v2715 = vpop.f32.mrb[0].mxu0
      %v2716 = vpop.f32.mrb[0].mxu0
      %v2717 = vadd.f32 0.0, %v2716
      %v2718 = vpop.f32.mrb[0].mxu0
      %2719 = vmatprep.mubr.bf16.mxu0 0
      %2720 = vmatmul.mubr.bf16.gmra.mrb[0].mxu0 %v728
      %v2721 = vpop.f32.mrb[0].mxu0
      %v2722 = vadd.f32 0.0, %v2721
      %v2723 = vpop.f32.mrb[0].mxu0
      %v2724 = vpop.f32.mrb[0].mxu0
      %v2725 = vadd.f32 0.0, %v2724
      %v2726 = vpop.f32.mrb[0].mxu0
      %2727 = vmatprep.mubr.bf16.mxu0 0
      %2728 = vmatmul.mubr.bf16.gmra.mrb[0].mxu0 %v731
      %v2729 = vpop.f32.mrb[0].mxu0
      %v2730 = vadd.f32 0.0, %v2729
      %v2731 = vpop.f32.mrb[0].mxu0
      %v2732 = vpop.f32.mrb[0].mxu0
      %v2733 = vadd.f32 0.0, %v2732
      %v2734 = vpop.f32.mrb[0].mxu0
      %2735 = vmatprep.mubr.bf16.mxu0 0
      %2736 = vmatmul.mubr.bf16.gmra.mrb[0].mxu0 %v734
      %v2737 = vpop.f32.mrb[0].mxu0
      %v2738 = vadd.f32 0.0, %v2737
      %v2739 = vpop.f32.mrb[0].mxu0
      %v2740 = vpop.f32.mrb[0].mxu0
      %v2741 = vadd.f32 0.0, %v2740
      %v2742 = vpop.f32.mrb[0].mxu0
      %2743 = vmatprep.mubr.bf16.mxu0 0
      %2744 = vmatmul.mubr.bf16.gmra.mrb[0].mxu0 %v737
      %v2745 = vpop.f32.mrb[0].mxu0
      %v2746 = vadd.f32 0.0, %v2745
      %v2747 = vpop.f32.mrb[0].mxu0
      %v2748 = vpop.f32.mrb[0].mxu0
      %v2749 = vadd.f32 0.0, %v2748
      %v2750 = vpop.f32.mrb[0].mxu0
      %2751 = vmatprep.mubr.bf16.mxu0 0
      %2752 = vmatmul.mubr.bf16.gmra.mrb[0].mxu0 %v740
      %v2753 = vpop.f32.mrb[0].mxu0
      %v2754 = vadd.f32 0.0, %v2753
      %v2755 = vpop.f32.mrb[0].mxu0
      %v2756 = vpop.f32.mrb[0].mxu0
      %v2757 = vadd.f32 0.0, %v2756
      %v2758 = vpop.f32.mrb[0].mxu0
      %2759 = vmatprep.mubr.bf16.mxu0 0
      %2760 = vmatmul.mubr.bf16.gmra.mrb[0].mxu0 %v743
      %v2761 = vpop.f32.mrb[0].mxu0
      %v2762 = vadd.f32 0.0, %v2761
      %v2763 = vpop.f32.mrb[0].mxu0
      %v2764 = vpop.f32.mrb[0].mxu0
      %v2765 = vadd.f32 0.0, %v2764
      %v2766 = vpop.f32.mrb[0].mxu0
      %2767 = vmatprep.mubr.bf16.mxu0 0
      %2768 = vmatmul.mubr.bf16.gmra.mrb[0].mxu0 %v746
      %v2769 = vpop.f32.mrb[0].mxu0
      %v2770 = vadd.f32 0.0, %v2769
      %v2771 = vpop.f32.mrb[0].mxu0
      %v2772 = vpop.f32.mrb[0].mxu0
      %v2773 = vadd.f32 0.0, %v2772
      %v2774 = vpop.f32.mrb[0].mxu0
      %2775 = vmatprep.mubr.bf16.mxu0 0
      %2776 = vmatmul.mubr.bf16.gmra.mrb[0].mxu0 %v749
      %v2777 = vpop.f32.mrb[0].mxu0
      %v2778 = vadd.f32 0.0, %v2777
      %v2779 = vpop.f32.mrb[0].mxu0
      %v2780 = vpop.f32.mrb[0].mxu0
      %v2781 = vadd.f32 0.0, %v2780
      %v2782 = vpop.f32.mrb[0].mxu0
      %2783 = vmatprep.mubr.bf16.mxu0 0
      %2784 = vmatmul.mubr.bf16.gmra.mrb[0].mxu0 %v752
      %v2785 = vpop.f32.mrb[0].mxu0
      %v2786 = vadd.f32 0.0, %v2785
      %v2787 = vpop.f32.mrb[0].mxu0
      %v2788 = vpop.f32.mrb[0].mxu0
      %v2789 = vadd.f32 0.0, %v2788
      %v2790 = vpop.f32.mrb[0].mxu0
      %2791 = vmatprep.mubr.bf16.mxu0 0
      %2792 = vmatmul.mubr.bf16.gmra.mrb[0].mxu0 %v755
      %v2793 = vpop.f32.mrb[0].mxu0
      %v2794 = vadd.f32 0.0, %v2793
      %v2795 = vpop.f32.mrb[0].mxu0
      %v2796 = vpop.f32.mrb[0].mxu0
      %v2797 = vadd.f32 0.0, %v2796
      %v2798 = vpop.f32.mrb[0].mxu0
      %2799 = vmatprep.mubr.bf16.mxu0 0
      %2800 = vmatmul.mubr.bf16.gmra.mrb[0].mxu0 %v758
      %v2801 = vpop.f32.mrb[0].mxu0
      %v2802 = vadd.f32 0.0, %v2801
      %v2803 = vpop.f32.mrb[0].mxu0
      %v2804 = vpop.f32.mrb[0].mxu0
      %v2805 = vadd.f32 0.0, %v2804
      %v2806 = vpop.f32.mrb[0].mxu0
      %2807 = vmatprep.mubr.bf16.mxu0 0
      %2808 = vmatmul.mubr.bf16.gmra.mrb[0].mxu0 %v761
      %v2809 = vpop.f32.mrb[0].mxu0
      %v2810 = vadd.f32 0.0, %v2809
      %v2811 = vpop.f32.mrb[0].mxu0
      %v2812 = vpop.f32.mrb[0].mxu0
      %v2813 = vadd.f32 0.0, %v2812
      %v2814 = vpop.f32.mrb[0].mxu0
      %2815 = vmatprep.mubr.bf16.mxu0 0
      %2816 = vmatmul.mubr.bf16.gmra.mrb[0].mxu0 %v764
      %v2817 = vpop.f32.mrb[0].mxu0
      %v2818 = vadd.f32 0.0, %v2817
      %v2819 = vpop.f32.mrb[0].mxu0
      %v2820 = vpop.f32.mrb[0].mxu0
      %v2821 = vadd.f32 0.0, %v2820
      %v2822 = vpop.f32.mrb[0].mxu0
      %2823 = vdwg.mxu0
      %v2824 = vsel %vm717, %v2698, 0.0
      %v2825 = vsel %vm717, %v2701, 0.0
      %v2826 = vadd.f32 %v2824, %v2825
      %v2827 = vsel %vm717, %v2706, 0.0
      %v2828 = vadd.f32 %v2826, %v2827
      %v2829 = vsel %vm717, %v2709, 0.0
      %v2830 = vadd.f32 %v2828, %v2829
      %v2831 = vsel %vm717, %v2714, 0.0
      %v2832 = vadd.f32 %v2830, %v2831
      %v2833 = vsel %vm717, %v2717, 0.0
      %v2834 = vadd.f32 %v2832, %v2833
      %v2835 = vsel %vm717, %v2722, 0.0
      %v2836 = vadd.f32 %v2834, %v2835
      %v2837 = vsel %vm717, %v2725, 0.0
      %v2838 = vadd.f32 %v2836, %v2837
      %v2839 = vsel %vm717, %v2730, 0.0
      %v2840 = vadd.f32 %v2838, %v2839
      %v2841 = vsel %vm717, %v2733, 0.0
      %v2842 = vadd.f32 %v2840, %v2841
      %v2843 = vsel %vm717, %v2738, 0.0
      %v2844 = vadd.f32 %v2842, %v2843
      %v2845 = vsel %vm717, %v2741, 0.0
      %v2846 = vadd.f32 %v2844, %v2845
      %v2847 = vsel %vm717, %v2746, 0.0
      %v2848 = vadd.f32 %v2846, %v2847
      %v2849 = vsel %vm717, %v2749, 0.0
      %v2850 = vadd.f32 %v2848, %v2849
      %v2851 = vsel %vm717, %v2754, 0.0
      %v2852 = vadd.f32 %v2850, %v2851
      %v2853 = vsel %vm717, %v2757, 0.0
      %v2854 = vadd.f32 %v2852, %v2853
      %v2855 = vsel %vm717, %v2762, 0.0
      %v2856 = vadd.f32 %v2854, %v2855
      %v2857 = vsel %vm717, %v2765, 0.0
      %v2858 = vadd.f32 %v2856, %v2857
      %v2859 = vsel %vm717, %v2770, 0.0
      %v2860 = vadd.f32 %v2858, %v2859
      %v2861 = vsel %vm717, %v2773, 0.0
      %v2862 = vadd.f32 %v2860, %v2861
      %v2863 = vsel %vm717, %v2778, 0.0
      %v2864 = vadd.f32 %v2862, %v2863
      %v2865 = vsel %vm717, %v2781, 0.0
      %v2866 = vadd.f32 %v2864, %v2865
      %v2867 = vsel %vm717, %v2786, 0.0
      %v2868 = vadd.f32 %v2866, %v2867
      %v2869 = vsel %vm717, %v2789, 0.0
      %v2870 = vadd.f32 %v2868, %v2869
      %v2871 = vsel %vm717, %v2794, 0.0
      %v2872 = vadd.f32 %v2870, %v2871
      %v2873 = vsel %vm717, %v2797, 0.0
      %v2874 = vadd.f32 %v2872, %v2873
      %v2875 = vsel %vm717, %v2802, 0.0
      %v2876 = vadd.f32 %v2874, %v2875
      %v2877 = vsel %vm717, %v2805, 0.0
      %v2878 = vadd.f32 %v2876, %v2877
      %v2879 = vsel %vm717, %v2810, 0.0
      %v2880 = vadd.f32 %v2878, %v2879
      %v2881 = vsel %vm717, %v2813, 0.0
      %v2882 = vadd.f32 %v2880, %v2881
      %v2883 = vsel %vm717, %v2818, 0.0
      %v2884 = vadd.f32 %v2882, %v2883
      %v2885 = vsel %vm717, %v2821, 0.0
      %v2886 = vadd.f32 %v2884, %v2885
      %v2887 = vrot.slane %v2886, 4
      %v2888 = vadd.f32 %v2886, %v2887
      %v2889 = vrot.slane %v2888, 2
      %v2890 = vadd.f32 %v2888, %v2889
      %v2891 = vrot.slane %v2890, 1
      %v2892 = vadd.f32 %v2890, %v2891
      %v2893 = vmul.f32 %v2892, 0.00390625
      %v2894 = vsub.f32 %v2698, %v2893
      %v2895 = vsub.f32 %v2701, %v2893
      %v2896 = vsub.f32 %v2706, %v2893
      %v2897 = vsub.f32 %v2709, %v2893
      %v2898 = vsub.f32 %v2714, %v2893
      %v2899 = vsub.f32 %v2717, %v2893
      %v2900 = vsub.f32 %v2722, %v2893
      %v2901 = vsub.f32 %v2725, %v2893
      %v2902 = vsub.f32 %v2730, %v2893
      %v2903 = vsub.f32 %v2733, %v2893
      %v2904 = vsub.f32 %v2738, %v2893
      %v2905 = vsub.f32 %v2741, %v2893
      %v2906 = vsub.f32 %v2746, %v2893
      %v2907 = vsub.f32 %v2749, %v2893
      %v2908 = vsub.f32 %v2754, %v2893
      %v2909 = vsub.f32 %v2757, %v2893
      %v2910 = vsub.f32 %v2762, %v2893
      %v2911 = vsub.f32 %v2765, %v2893
      %v2912 = vsub.f32 %v2770, %v2893
      %v2913 = vsub.f32 %v2773, %v2893
      %v2914 = vsub.f32 %v2778, %v2893
      %v2915 = vsub.f32 %v2781, %v2893
      %v2916 = vsub.f32 %v2786, %v2893
      %v2917 = vsub.f32 %v2789, %v2893
      %v2918 = vsub.f32 %v2794, %v2893
      %v2919 = vsub.f32 %v2797, %v2893
      %v2920 = vsub.f32 %v2802, %v2893
      %v2921 = vsub.f32 %v2805, %v2893
      %v2922 = vsub.f32 %v2810, %v2893
      %v2923 = vsub.f32 %v2813, %v2893
      %v2924 = vsub.f32 %v2818, %v2893
      %v2925 = vsub.f32 %v2821, %v2893
      %v2926 = vmul.f32 %v2894, %v2894
      %v2927 = vmul.f32 %v2895, %v2895
      %v2928 = vmul.f32 %v2896, %v2896
      %v2929 = vmul.f32 %v2897, %v2897
      %v2930 = vmul.f32 %v2898, %v2898
      %v2931 = vmul.f32 %v2899, %v2899
      %v2932 = vmul.f32 %v2900, %v2900
      %v2933 = vmul.f32 %v2901, %v2901
      %v2934 = vmul.f32 %v2902, %v2902
      %v2935 = vmul.f32 %v2903, %v2903
      %v2936 = vmul.f32 %v2904, %v2904
      %v2937 = vmul.f32 %v2905, %v2905
      %v2938 = vmul.f32 %v2906, %v2906
      %v2939 = vmul.f32 %v2907, %v2907
      %v2940 = vmul.f32 %v2908, %v2908
      %v2941 = vmul.f32 %v2909, %v2909
      %v2942 = vmul.f32 %v2910, %v2910
      %v2943 = vmul.f32 %v2911, %v2911
      %v2944 = vmul.f32 %v2912, %v2912
      %v2945 = vmul.f32 %v2913, %v2913
      %v2946 = vmul.f32 %v2914, %v2914
      %v2947 = vmul.f32 %v2915, %v2915
      %v2948 = vmul.f32 %v2916, %v2916
      %v2949 = vmul.f32 %v2917, %v2917
      %v2950 = vmul.f32 %v2918, %v2918
      %v2951 = vmul.f32 %v2919, %v2919
      %v2952 = vmul.f32 %v2920, %v2920
      %v2953 = vmul.f32 %v2921, %v2921
      %v2954 = vmul.f32 %v2922, %v2922
      %v2955 = vmul.f32 %v2923, %v2923
      %v2956 = vmul.f32 %v2924, %v2924
      %v2957 = vmul.f32 %v2925, %v2925
      %v2958 = vsel %vm717, %v2926, 0.0
      %v2959 = vsel %vm717, %v2927, 0.0
      %v2960 = vadd.f32 %v2958, %v2959
      %v2961 = vsel %vm717, %v2928, 0.0
      %v2962 = vadd.f32 %v2960, %v2961
      %v2963 = vsel %vm717, %v2929, 0.0
      %v2964 = vadd.f32 %v2962, %v2963
      %v2965 = vsel %vm717, %v2930, 0.0
      %v2966 = vadd.f32 %v2964, %v2965
      %v2967 = vsel %vm717, %v2931, 0.0
      %v2968 = vadd.f32 %v2966, %v2967
      %v2969 = vsel %vm717, %v2932, 0.0
      %v2970 = vadd.f32 %v2968, %v2969
      %v2971 = vsel %vm717, %v2933, 0.0
      %v2972 = vadd.f32 %v2970, %v2971
      %v2973 = vsel %vm717, %v2934, 0.0
      %v2974 = vadd.f32 %v2972, %v2973
      %v2975 = vsel %vm717, %v2935, 0.0
      %v2976 = vadd.f32 %v2974, %v2975
      %v2977 = vsel %vm717, %v2936, 0.0
      %v2978 = vadd.f32 %v2976, %v2977
      %v2979 = vsel %vm717, %v2937, 0.0
      %v2980 = vadd.f32 %v2978, %v2979
      %v2981 = vsel %vm717, %v2938, 0.0
      %v2982 = vadd.f32 %v2980, %v2981
      %v2983 = vsel %vm717, %v2939, 0.0
      %v2984 = vadd.f32 %v2982, %v2983
      %v2985 = vsel %vm717, %v2940, 0.0
      %v2986 = vadd.f32 %v2984, %v2985
      %v2987 = vsel %vm717, %v2941, 0.0
      %v2988 = vadd.f32 %v2986, %v2987
      %v2989 = vsel %vm717, %v2942, 0.0
      %v2990 = vadd.f32 %v2988, %v2989
      %v2991 = vsel %vm717, %v2943, 0.0
      %v2992 = vadd.f32 %v2990, %v2991
      %v2993 = vsel %vm717, %v2944, 0.0
      %v2994 = vadd.f32 %v2992, %v2993
      %v2995 = vsel %vm717, %v2945, 0.0
      %v2996 = vadd.f32 %v2994, %v2995
      %v2997 = vsel %vm717, %v2946, 0.0
      %v2998 = vadd.f32 %v2996, %v2997
      %v2999 = vsel %vm717, %v2947, 0.0
      %v3000 = vadd.f32 %v2998, %v2999
      %v3001 = vsel %vm717, %v2948, 0.0
      %v3002 = vadd.f32 %v3000, %v3001
      %v3003 = vsel %vm717, %v2949, 0.0
      %v3004 = vadd.f32 %v3002, %v3003
      %v3005 = vsel %vm717, %v2950, 0.0
      %v3006 = vadd.f32 %v3004, %v3005
      %v3007 = vsel %vm717, %v2951, 0.0
      %v3008 = vadd.f32 %v3006, %v3007
      %v3009 = vsel %vm717, %v2952, 0.0
      %v3010 = vadd.f32 %v3008, %v3009
      %v3011 = vsel %vm717, %v2953, 0.0
      %v3012 = vadd.f32 %v3010, %v3011
      %v3013 = vsel %vm717, %v2954, 0.0
      %v3014 = vadd.f32 %v3012, %v3013
      %v3015 = vsel %vm717, %v2955, 0.0
      %v3016 = vadd.f32 %v3014, %v3015
      %v3017 = vsel %vm717, %v2956, 0.0
      %v3018 = vadd.f32 %v3016, %v3017
      %v3019 = vsel %vm717, %v2957, 0.0
      %v3020 = vadd.f32 %v3018, %v3019
      %v3021 = vrot.slane %v3020, 4
      %v3022 = vadd.f32 %v3020, %v3021
      %v3023 = vrot.slane %v3022, 2
      %v3024 = vadd.f32 %v3022, %v3023
      %v3025 = vrot.slane %v3024, 1
      %v3026 = vadd.f32 %v3024, %v3025
      %v3027 = vmul.f32 %v3026, 0.00390625
      %v3028 = vadd.f32 %v3027, 1e-05
      %v3029 = vrsqrt.pop %v3028
      %v3030 = vmul.f32 %v2894, %v3029
      %v3031 = vmul.f32 %v2895, %v3029
      %v3032 = vmul.f32 %v2896, %v3029
      %v3033 = vmul.f32 %v2897, %v3029
      %v3034 = vmul.f32 %v2898, %v3029
      %v3035 = vmul.f32 %v2899, %v3029
      %v3036 = vmul.f32 %v2900, %v3029
      %v3037 = vmul.f32 %v2901, %v3029
      %v3038 = vmul.f32 %v2902, %v3029
      %v3039 = vmul.f32 %v2903, %v3029
      %v3040 = vmul.f32 %v2904, %v3029
      %v3041 = vmul.f32 %v2905, %v3029
      %v3042 = vmul.f32 %v2906, %v3029
      %v3043 = vmul.f32 %v2907, %v3029
      %v3044 = vmul.f32 %v2908, %v3029
      %v3045 = vmul.f32 %v2909, %v3029
      %v3046 = vmul.f32 %v2910, %v3029
      %v3047 = vmul.f32 %v2911, %v3029
      %v3048 = vmul.f32 %v2912, %v3029
      %v3049 = vmul.f32 %v2913, %v3029
      %v3050 = vmul.f32 %v2914, %v3029
      %v3051 = vmul.f32 %v2915, %v3029
      %v3052 = vmul.f32 %v2916, %v3029
      %v3053 = vmul.f32 %v2917, %v3029
      %v3054 = vmul.f32 %v2918, %v3029
      %v3055 = vmul.f32 %v2919, %v3029
      %v3056 = vmul.f32 %v2920, %v3029
      %v3057 = vmul.f32 %v2921, %v3029
      %v3058 = vmul.f32 %v2922, %v3029
      %v3059 = vmul.f32 %v2923, %v3029
      %v3060 = vmul.f32 %v2924, %v3029
      %v3061 = vmul.f32 %v2925, %v3029
      %v3062 = vld [vmem:[%s12] sm:$0x1]
      %v3064 = vlaneseq
      %v3065 = vshrl.u32 %v3064, 7
      %v3066 = vsub.s32 0, %v3065
      %v3067 = vrot.slane %v3062, %v3066
      %v3069 = vmul.f32 %v3030, %v3067
      %v3070 = vmul.f32 %v3031, %v3067
      %v3071 = vmul.f32 %v3032, %v3067
      %v3072 = vmul.f32 %v3033, %v3067
      %v3073 = vmul.f32 %v3034, %v3067
      %v3074 = vmul.f32 %v3035, %v3067
      %v3075 = vmul.f32 %v3036, %v3067
      %v3076 = vmul.f32 %v3037, %v3067
      %v3077 = vmul.f32 %v3038, %v3067
      %v3078 = vmul.f32 %v3039, %v3067
      %v3079 = vmul.f32 %v3040, %v3067
      %v3080 = vmul.f32 %v3041, %v3067
      %v3081 = vmul.f32 %v3042, %v3067
      %v3082 = vmul.f32 %v3043, %v3067
      %v3083 = vmul.f32 %v3044, %v3067
      %v3084 = vmul.f32 %v3045, %v3067
      %v3085 = vmul.f32 %v3046, %v3067
      %v3086 = vmul.f32 %v3047, %v3067
      %v3087 = vmul.f32 %v3048, %v3067
      %v3088 = vmul.f32 %v3049, %v3067
      %v3089 = vmul.f32 %v3050, %v3067
      %v3090 = vmul.f32 %v3051, %v3067
      %v3091 = vmul.f32 %v3052, %v3067
      %v3092 = vmul.f32 %v3053, %v3067
      %v3093 = vmul.f32 %v3054, %v3067
      %v3094 = vmul.f32 %v3055, %v3067
      %v3095 = vmul.f32 %v3056, %v3067
      %v3096 = vmul.f32 %v3057, %v3067
      %v3097 = vmul.f32 %v3058, %v3067
      %v3098 = vmul.f32 %v3059, %v3067
      %v3099 = vmul.f32 %v3060, %v3067
      %v3100 = vmul.f32 %v3061, %v3067
      %v3101 = vld [vmem:[%s16] sm:$0x1]
      %v3103 = vlaneseq
      %v3104 = vshrl.u32 %v3103, 7
      %v3105 = vsub.s32 0, %v3104
      %v3106 = vrot.slane %v3101, %v3105
      %v3108 = vadd.f32 %v3069, %v3106
      %v3109 = vadd.f32 %v3070, %v3106
      %v3110 = vadd.f32 %v3071, %v3106
      %v3111 = vadd.f32 %v3072, %v3106
      %v3112 = vadd.f32 %v3073, %v3106
      %v3113 = vadd.f32 %v3074, %v3106
      %v3114 = vadd.f32 %v3075, %v3106
      %v3115 = vadd.f32 %v3076, %v3106
      %v3116 = vadd.f32 %v3077, %v3106
      %v3117 = vadd.f32 %v3078, %v3106
      %v3118 = vadd.f32 %v3079, %v3106
      %v3119 = vadd.f32 %v3080, %v3106
      %v3120 = vadd.f32 %v3081, %v3106
      %v3121 = vadd.f32 %v3082, %v3106
      %v3122 = vadd.f32 %v3083, %v3106
      %v3123 = vadd.f32 %v3084, %v3106
      %v3124 = vadd.f32 %v3085, %v3106
      %v3125 = vadd.f32 %v3086, %v3106
      %v3126 = vadd.f32 %v3087, %v3106
      %v3127 = vadd.f32 %v3088, %v3106
      %v3128 = vadd.f32 %v3089, %v3106
      %v3129 = vadd.f32 %v3090, %v3106
      %v3130 = vadd.f32 %v3091, %v3106
      %v3131 = vadd.f32 %v3092, %v3106
      %v3132 = vadd.f32 %v3093, %v3106
      %v3133 = vadd.f32 %v3094, %v3106
      %v3134 = vadd.f32 %v3095, %v3106
      %v3135 = vadd.f32 %v3096, %v3106
      %v3136 = vadd.f32 %v3097, %v3106
      %v3137 = vadd.f32 %v3098, %v3106
      %v3138 = vadd.f32 %v3099, %v3106
      %v3139 = vadd.f32 %v3100, %v3106
      %v3140 = vmax.f32 %v3108, 0.0
      %v3141 = vmax.f32 %v3109, 0.0
      %v3142 = vmax.f32 %v3110, 0.0
      %v3143 = vmax.f32 %v3111, 0.0
      %v3144 = vmax.f32 %v3112, 0.0
      %v3145 = vmax.f32 %v3113, 0.0
      %v3146 = vmax.f32 %v3114, 0.0
      %v3147 = vmax.f32 %v3115, 0.0
      %v3148 = vmax.f32 %v3116, 0.0
      %v3149 = vmax.f32 %v3117, 0.0
      %v3150 = vmax.f32 %v3118, 0.0
      %v3151 = vmax.f32 %v3119, 0.0
      %v3152 = vmax.f32 %v3120, 0.0
      %v3153 = vmax.f32 %v3121, 0.0
      %v3154 = vmax.f32 %v3122, 0.0
      %v3155 = vmax.f32 %v3123, 0.0
      %v3156 = vmax.f32 %v3124, 0.0
      %v3157 = vmax.f32 %v3125, 0.0
      %v3158 = vmax.f32 %v3126, 0.0
      %v3159 = vmax.f32 %v3127, 0.0
      %v3160 = vmax.f32 %v3128, 0.0
      %v3161 = vmax.f32 %v3129, 0.0
      %v3162 = vmax.f32 %v3130, 0.0
      %v3163 = vmax.f32 %v3131, 0.0
      %v3164 = vmax.f32 %v3132, 0.0
      %v3165 = vmax.f32 %v3133, 0.0
      %v3166 = vmax.f32 %v3134, 0.0
      %v3167 = vmax.f32 %v3135, 0.0
      %v3168 = vmax.f32 %v3136, 0.0
      %v3169 = vmax.f32 %v3137, 0.0
      %v3170 = vmax.f32 %v3138, 0.0
      %v3171 = vmax.f32 %v3139, 0.0
      %v3172 = vpack.c.bf16 %v3141, %v3140
      %v3173 = vpack.c.bf16 %v3143, %v3142
      %v3174 = vpack.c.bf16 %v3145, %v3144
      %v3175 = vpack.c.bf16 %v3147, %v3146
      %v3176 = vpack.c.bf16 %v3149, %v3148
      %v3177 = vpack.c.bf16 %v3151, %v3150
      %v3178 = vpack.c.bf16 %v3153, %v3152
      %v3179 = vpack.c.bf16 %v3155, %v3154
      %v3180 = vpack.c.bf16 %v3157, %v3156
      %v3181 = vpack.c.bf16 %v3159, %v3158
      %v3182 = vpack.c.bf16 %v3161, %v3160
      %v3183 = vpack.c.bf16 %v3163, %v3162
      %v3184 = vpack.c.bf16 %v3165, %v3164
      %v3185 = vpack.c.bf16 %v3167, %v3166
      %v3186 = vpack.c.bf16 %v3169, %v3168
      %v3187 = vpack.c.bf16 %v3171, %v3170
      %v3204 = vunpack.c.l.b16 %v3172
      %v3205 = vunpack.c.h.b16 %v3172
      %v3206 = vunpack.c.l.b16 %v3173
      %v3207 = vunpack.c.h.b16 %v3173
      %v3208 = vunpack.c.l.b16 %v3174
      %v3209 = vunpack.c.h.b16 %v3174
      %v3210 = vunpack.c.l.b16 %v3175
      %v3211 = vunpack.c.h.b16 %v3175
      %v3212 = vunpack.c.l.b16 %v3176
      %v3213 = vunpack.c.h.b16 %v3176
      %v3214 = vunpack.c.l.b16 %v3177
      %v3215 = vunpack.c.h.b16 %v3177
      %v3216 = vunpack.c.l.b16 %v3178
      %v3217 = vunpack.c.h.b16 %v3178
      %v3218 = vunpack.c.l.b16 %v3179
      %v3219 = vunpack.c.h.b16 %v3179
      %v3220 = vunpack.c.l.b16 %v3180
      %v3221 = vunpack.c.h.b16 %v3180
      %v3222 = vunpack.c.l.b16 %v3181
      %v3223 = vunpack.c.h.b16 %v3181
      %v3224 = vunpack.c.l.b16 %v3182
      %v3225 = vunpack.c.h.b16 %v3182
      %v3226 = vunpack.c.l.b16 %v3183
      %v3227 = vunpack.c.h.b16 %v3183
      %v3228 = vunpack.c.l.b16 %v3184
      %v3229 = vunpack.c.h.b16 %v3184
      %v3230 = vunpack.c.l.b16 %v3185
      %v3231 = vunpack.c.h.b16 %v3185
      %v3232 = vunpack.c.l.b16 %v3186
      %v3233 = vunpack.c.h.b16 %v3186
      %v3234 = vunpack.c.l.b16 %v3187
      %v3235 = vunpack.c.h.b16 %v3187
      %v3236 = vpack.c.b16 %v3204, %v3204
      %v3237 = vpack.c.b16 %v3205, %v3205
      %v3238 = vpack.c.b16 %v3206, %v3206
      %v3239 = vpack.c.b16 %v3207, %v3207
      %v3240 = vpack.c.b16 %v3208, %v3208
      %v3241 = vpack.c.b16 %v3209, %v3209
      %v3242 = vpack.c.b16 %v3210, %v3210
      %v3243 = vpack.c.b16 %v3211, %v3211
      %v3244 = vpack.c.b16 %v3212, %v3212
      %v3245 = vpack.c.b16 %v3213, %v3213
      %v3246 = vpack.c.b16 %v3214, %v3214
      %v3247 = vpack.c.b16 %v3215, %v3215
      %v3248 = vpack.c.b16 %v3216, %v3216
      %v3249 = vpack.c.b16 %v3217, %v3217
      %v3250 = vpack.c.b16 %v3218, %v3218
      %v3251 = vpack.c.b16 %v3219, %v3219
      %v3252 = vpack.c.b16 %v3220, %v3220
      %v3253 = vpack.c.b16 %v3221, %v3221
      %v3254 = vpack.c.b16 %v3222, %v3222
      %v3255 = vpack.c.b16 %v3223, %v3223
      %v3256 = vpack.c.b16 %v3224, %v3224
      %v3257 = vpack.c.b16 %v3225, %v3225
      %v3258 = vpack.c.b16 %v3226, %v3226
      %v3259 = vpack.c.b16 %v3227, %v3227
      %v3260 = vpack.c.b16 %v3228, %v3228
      %v3261 = vpack.c.b16 %v3229, %v3229
      %v3262 = vpack.c.b16 %v3230, %v3230
      %v3263 = vpack.c.b16 %v3231, %v3231
      %v3264 = vpack.c.b16 %v3232, %v3232
      %v3265 = vpack.c.b16 %v3233, %v3233
      %v3266 = vpack.c.b16 %v3234, %v3234
      %v3267 = vpack.c.b16 %v3235, %v3235
      %3300 = vst.msk [vmem:[%s666] sm:$0xf] %vm1953, %v3236
      %3301 = vst.msk [vmem:[%s666 + $0x4] sm:$0xf] %vm1953, %v3237
      %3302 = vst.msk [vmem:[%s666 + $0x8] sm:$0xf] %vm1953, %v3238
      %3303 = vst.msk [vmem:[%s666 + $0xc] sm:$0xf] %vm1953, %v3239
      %3304 = vst.msk [vmem:[%s666 + $0x10] sm:$0xf] %vm1953, %v3240
      %3305 = vst.msk [vmem:[%s666 + $0x14] sm:$0xf] %vm1953, %v3241
      %3306 = vst.msk [vmem:[%s666 + $0x18] sm:$0xf] %vm1953, %v3242
      %3307 = vst.msk [vmem:[%s666 + $0x1c] sm:$0xf] %vm1953, %v3243
      %3308 = vst.msk [vmem:[%s666 + $0x20] sm:$0xf] %vm1953, %v3244
      %3309 = vst.msk [vmem:[%s666 + $0x24] sm:$0xf] %vm1953, %v3245
      %3310 = vst.msk [vmem:[%s666 + $0x28] sm:$0xf] %vm1953, %v3246
      %3311 = vst.msk [vmem:[%s666 + $0x2c] sm:$0xf] %vm1953, %v3247
      %3312 = vst.msk [vmem:[%s666 + $0x30] sm:$0xf] %vm1953, %v3248
      %3313 = vst.msk [vmem:[%s666 + $0x34] sm:$0xf] %vm1953, %v3249
      %3314 = vst.msk [vmem:[%s666 + $0x38] sm:$0xf] %vm1953, %v3250
      %3315 = vst.msk [vmem:[%s666 + $0x3c] sm:$0xf] %vm1953, %v3251
      %3316 = vst.msk [vmem:[%s666 + $0x40] sm:$0xf] %vm1953, %v3252
      %3317 = vst.msk [vmem:[%s666 + $0x44] sm:$0xf] %vm1953, %v3253
      %3318 = vst.msk [vmem:[%s666 + $0x48] sm:$0xf] %vm1953, %v3254
      %3319 = vst.msk [vmem:[%s666 + $0x4c] sm:$0xf] %vm1953, %v3255
      %3320 = vst.msk [vmem:[%s666 + $0x50] sm:$0xf] %vm1953, %v3256
      %3321 = vst.msk [vmem:[%s666 + $0x54] sm:$0xf] %vm1953, %v3257
      %3322 = vst.msk [vmem:[%s666 + $0x58] sm:$0xf] %vm1953, %v3258
      %3323 = vst.msk [vmem:[%s666 + $0x5c] sm:$0xf] %vm1953, %v3259
      %3324 = vst.msk [vmem:[%s666 + $0x60] sm:$0xf] %vm1953, %v3260
      %3325 = vst.msk [vmem:[%s666 + $0x64] sm:$0xf] %vm1953, %v3261
      %3326 = vst.msk [vmem:[%s666 + $0x68] sm:$0xf] %vm1953, %v3262
      %3327 = vst.msk [vmem:[%s666 + $0x6c] sm:$0xf] %vm1953, %v3263
      %3328 = vst.msk [vmem:[%s666 + $0x70] sm:$0xf] %vm1953, %v3264
      %3329 = vst.msk [vmem:[%s666 + $0x74] sm:$0xf] %vm1953, %v3265
      %3330 = vst.msk [vmem:[%s666 + $0x78] sm:$0xf] %vm1953, %v3266
      %3331 = vst.msk [vmem:[%s666 + $0x7c] sm:$0xf] %vm1953, %v3267
      %p3332 = scmp.lt.s32.totalorder %s32, 1
      %s3333 = scalar_select %p3332, %s32, 1
      %s3334 = smul.addr %s3333, 32
      %s3335 = smul.addr %s3334, 8
      %s3336 = scalar_lea.vmem %s17, %s3335
      %p3337 = scmp.lt.s32.totalorder %s32, 1
      %s3338 = scalar_select %p3337, %s32, 1
      %s3339 = smul.addr %s3338, 32
      %s3340 = smul.addr %s3339, 4
      %s3341 = scalar_lea.vmem %s18, %s3340
      %p3342 = scmp.lt.s32.totalorder %s32, 1
      %s3343 = scalar_select %p3342, %s32, 1
      %s3344 = smul.addr %s3343, 32
      %s3345 = smul.addr %s3344, 4
      %s3346 = scalar_lea.vmem %s19, %s3345
      %p3347 = scmp.lt.s32.totalorder %s32, 1
      %s3348 = scalar_select %p3347, %s32, 1
      %s3349 = smul.addr %s3348, 32
      %s3350 = smul.addr %s3349, 4
      %s3351 = scalar_lea.vmem %s20, %s3350
      // Predicated region
      $region89: #{tpu_custom_call.1} parent=87 // pred_check
        %p3352 = pneg %p412
      $region90: #{tpu_custom_call.1} parent=87 // pred_check_branch
        %3354 = sbr.rel (%p3352) target = $region92
      $region91: #{tpu_custom_call.1} parent=87 // pred_region
        _
      $region92: #{tpu_custom_call.1} parent=87 // pred_fallthru
        _
      // Predicated region
      $region93: #{tpu_custom_call.1} parent=87 // pred_check
        %p3355 = pneg %p438
      $region94: #{tpu_custom_call.1} parent=87 // pred_check_branch
        %3357 = sbr.rel (%p3355) target = $region96
      $region95: #{tpu_custom_call.1} parent=87 // pred_region
        _
      $region96: #{tpu_custom_call.1} parent=87 // pred_fallthru
        _
      // Predicated region
      $region97: #{tpu_custom_call.1} parent=87 // pred_check
        %p3358 = pneg %p464
      $region98: #{tpu_custom_call.1} parent=87 // pred_check_branch
        %3360 = sbr.rel (%p3358) target = $region100
      $region99: #{tpu_custom_call.1} parent=87 // pred_region
        _
      $region100: #{tpu_custom_call.1} parent=87 // pred_fallthru
        _
      // Predicated region
      $region101: #{tpu_custom_call.1} parent=87 // pred_check
        %p3361 = pneg %p490
      $region102: #{tpu_custom_call.1} parent=87 // pred_check_branch
        %3363 = sbr.rel (%p3361) target = $region104
      $region103: #{tpu_custom_call.1} parent=87 // pred_region
        _
      $region104: #{tpu_custom_call.1} parent=87 // pred_fallthru
        _
    $region88: #{tpu_custom_call.1} parent=5 // pred_fallthru
      _
    %p3364 = scmp.le.s32.totalorder 2, %s27
    // Predicated region
    $region105: #{tpu_custom_call.1} parent=5 // pred_check
      %p3365 = pneg %p3364
    $region106: #{tpu_custom_call.1} parent=5 // pred_check_branch
      %3367 = sbr.rel (%p3365) target = $region108
    $region107: #{tpu_custom_call.1} parent=5 // pred_region
      %s3368 = ssub.s32 %s27, 2
      // Predicated region
      $region109: #{tpu_custom_call.1} parent=107 // pred_check
        %p3369 = pneg %p418
      $region110: #{tpu_custom_call.1} parent=107 // pred_check_branch
        %3371 = sbr.rel (%p3369) target = $region112
      $region111: #{tpu_custom_call.1} parent=107 // pred_region
        %p3372 = scmp.lt.s32.totalorder %s33, 1
        %s3373 = scalar_select %p3372, %s33, 1
        %s3374 = smul.addr %s3373, 32
        %s3375 = smul.addr %s3374, 8
        %s3376 = scalar_lea.vmem %s17, %s3375
      $region112: #{tpu_custom_call.1} parent=107 // pred_fallthru
        _
      // Predicated region
      $region113: #{tpu_custom_call.1} parent=107 // pred_check
        %p3377 = pneg %p444
      $region114: #{tpu_custom_call.1} parent=107 // pred_check_branch
        %3379 = sbr.rel (%p3377) target = $region116
      $region115: #{tpu_custom_call.1} parent=107 // pred_region
        %p3380 = scmp.lt.s32.totalorder %s33, 1
        %s3381 = scalar_select %p3380, %s33, 1
        %s3382 = smul.addr %s3381, 32
        %s3383 = smul.addr %s3382, 4
        %s3384 = scalar_lea.vmem %s18, %s3383
      $region116: #{tpu_custom_call.1} parent=107 // pred_fallthru
        _
      // Predicated region
      $region117: #{tpu_custom_call.1} parent=107 // pred_check
        %p3385 = pneg %p470
      $region118: #{tpu_custom_call.1} parent=107 // pred_check_branch
        %3387 = sbr.rel (%p3385) target = $region120
      $region119: #{tpu_custom_call.1} parent=107 // pred_region
        %p3388 = scmp.lt.s32.totalorder %s33, 1
        %s3389 = scalar_select %p3388, %s33, 1
        %s3390 = smul.addr %s3389, 32
        %s3391 = smul.addr %s3390, 4
        %s3392 = scalar_lea.vmem %s19, %s3391
      $region120: #{tpu_custom_call.1} parent=107 // pred_fallthru
        _
      // Predicated region
      $region121: #{tpu_custom_call.1} parent=107 // pred_check
        %p3393 = pneg %p496
      $region122: #{tpu_custom_call.1} parent=107 // pred_check_branch
        %3395 = sbr.rel (%p3393) target = $region124
      $region123: #{tpu_custom_call.1} parent=107 // pred_region
        %p3396 = scmp.lt.s32.totalorder %s33, 1
        %s3397 = scalar_select %p3396, %s33, 1
        %s3398 = smul.addr %s3397, 32
        %s3399 = smul.addr %s3398, 4
        %s3400 = scalar_lea.vmem %s20, %s3399
      $region124: #{tpu_custom_call.1} parent=107 // pred_fallthru
        _
    $region108: #{tpu_custom_call.1} parent=5 // pred_fallthru
      _
  $region6: #{tpu_custom_call.1} parent=0 // loop_footer
    %s31 = sadd.s32 1, %s27
  $region7: #{tpu_custom_call.1} parent=0 // loop_footer_branch
    %26 = sbr.rel target = $region3
  $region8: #{tpu_custom_call.1} parent=0 // loop_exit
    _

</llo_original>
